<compile_context>
chip_gen: v7x
topology: tpu7x:2x2x1
jax: 0.10.0
libtpu: 0.0.40
codegen_flags: <defaults>
</compile_context>

<pallas_src>
import functools

import jax
import jax.numpy as jnp
from jax import lax
from jax.experimental import pallas as pl
from jax.experimental.pallas import tpu as pltpu

F = 128          # feature width after the first AttConv (heads * out = 2 * 64)


# ----------------------- fused feature-pipeline kernel -----------------------

def _superglue_feature_kernel(p_ref, d_ref,
                              fc1_w_ref, fc1_b_ref,
                              fc2_w_ref, fc2_b_ref,
                              mpW_ref, mpb_ref,
                              fc3_w_ref, fc3_b_ref,
                              costs_ref, *, len1, len2):
    # ---------------- pos encoder (+ descriptor add) -------------------------
    # fc1 has a K=2 contraction: do it on the VPU as two FMAs (skip the MXU).
    p = p_ref[...]                                     # (N, 2) f32
    w1 = fc1_w_ref[...]                                # (2, 32) f32
    h = (p[:, 0:1] * w1[0:1, :] + p[:, 1:2] * w1[1:2, :]) + fc1_b_ref[...]
    h = jnp.maximum(h, 0.0)                            # (N, 32)
    x = jnp.dot(h.astype(jnp.bfloat16), fc2_w_ref[...],
                preferred_element_type=jnp.float32) + fc2_b_ref[...]
    x = jnp.maximum(x, 0.0) + d_ref[...]               # (N, 128) f32

    # off-diagonal (no self-edge) masks for the intra layers, built in-kernel
    def offdiag_mask(m):
        r = lax.broadcasted_iota(jnp.int32, (m, m), 0)
        c = lax.broadcasted_iota(jnp.int32, (m, m), 1)
        return (r != c).astype(jnp.float32)

    mask1 = offdiag_mask(len1)
    mask2 = offdiag_mask(len2)

    def qkv(x_all, layer):
        # fused Q|K|V projection: one (N,128)x(128,384) bf16 matmul per layer
        out = jnp.dot(x_all.astype(jnp.bfloat16), mpW_ref[layer],
                      preferred_element_type=jnp.float32)
        out = out + mpb_ref[layer:layer + 1, :]        # (N, 384)
        return out[:, 0:F], out[:, F:2 * F], out[:, 2 * F:3 * F]

    def att_block(q, k, v, mask):
        # softmax over the FEATURE axis per (target, source) pair (PyG:
        # softmax(q_i * k_j, dim=1)), messages alpha * v_j summed over sources.
        # Stabilizer: max_f|q_t| * max_f|k_s| >= max_f(q_t*k_s)  =>  exp <= 1.
        qa = jnp.max(jnp.abs(q), axis=1, keepdims=True)        # (Tq, 1)
        ka = jnp.max(jnp.abs(k), axis=1, keepdims=True)        # (Ts, 1)
        bound = qa[:, None, :] * ka[None, :, :]                # (Tq, Ts, 1)
        e = jnp.exp(q[:, None, :] * k[None, :, :] - bound)     # (Tq, Ts, F)
        z = jnp.sum(e, axis=-1)                                # (Tq, Ts)
        w = pl.reciprocal(z + 1e-30, approx=True)              # EUP slot
        if mask is not None:
            w = w * mask
        return jnp.sum((e * v[None, :, :]) * w[:, :, None], axis=1)   # (Tq, F)

    def intra_out(x_all, layer):
        # intra edges: complete digraph within each set (no self edges)
        q, k, v = qkv(x_all, layer)
        o1 = att_block(q[:len1], k[:len1], v[:len1], mask1)
        o2 = att_block(q[len1:], k[len1:], v[len1:], mask2)
        return jnp.concatenate([o1, o2], axis=0)

    def cross_update(x_all, layer):
        # cross edges: set1 (source) -> set2 (target) only; set-1 nodes get a
        # zero aggregation, so the residual passes their rows through as-is.
        q, k, v = qkv(x_all, layer)
        oc = att_block(q[len1:], k[:len1], v[:len1], None)
        return jnp.concatenate([x_all[:len1], x_all[len1:] + oc], axis=0)

    x1 = intra_out(x, 0)                 # x1 = mp1(x)           (no residual)
    x2 = cross_update(x1, 1)             # x2 = x1 + mp2(x1)
    x3 = x2 + intra_out(x2, 2)           # x3 = x2 + mp3(x2)
    x4 = cross_update(x3, 3)             # x4 = x3 + mp4(x3)

    # ---------------- projection head + cost matrix --------------------------
    x5 = jnp.dot(x4.astype(jnp.bfloat16), fc3_w_ref[...],
                 preferred_element_type=jnp.float32) + fc3_b_ref[...]
    x5 = jnp.maximum(x5, 0.0)
    inv_norm = lax.rsqrt(jnp.sum(x5 * x5, axis=1, keepdims=True) + 1e-12)
    x5 = x5 * inv_norm

    v1 = x5[:len1]                                     # (len1, F)
    v2 = x5[len1:]                                     # (len2, F)
    # (len1, len2) Gram block via broadcast-multiply + lane reduce: no zero-row
    # pad, no concatenate, no rhs transpose; f32 kept on purpose (feeds
    # exp(-M/0.001) downstream).  Output is tiny (8x8 = one masked store).
    costs_ref[...] = jnp.sum(v1[:, None, :] * v2[None, :, :], axis=-1)


def feature_pipeline(p, d_pad, params, len1, len2):
    args = (p, d_pad,
            params["fc1_w"], params["fc1_b"],
            params["fc2_w"], params["fc2_b"],
            params["mpW"], params["mpb"],
            params["fc3_w"], params["fc3_b"])
    n = len1 + len2
    kern = functools.partial(_superglue_feature_kernel, len1=len1, len2=len2)

    # advisory cost estimate so XLA schedules the surrounding glue sensibly
    flops = 2 * n * 128 * (32 + 4 * 384 + 128) \
        + 10 * 128 * (2 * len1 * len1 + 2 * len2 * len2 + 2 * len1 * len2)
    trans = 128 * (2 * len1 * len1 + 2 * len2 * len2 + 2 * len1 * len2)
    nbytes = sum(int(a.size) * a.dtype.itemsize for a in args) + len1 * len2 * 4
    ce = pl.CostEstimate(flops=int(flops), transcendentals=int(trans),
                         bytes_accessed=int(nbytes))

    return pl.pallas_call(
        kern,
        out_shape=jax.ShapeDtypeStruct((len1, len2), jnp.float32),
        grid=(1,),
        in_specs=[pl.BlockSpec(a.shape, lambda i, nd=a.ndim: (0,) * nd)
                  for a in args],
        out_specs=pl.BlockSpec((len1, len2), lambda i: (0, 0)),
        compiler_params=pltpu.CompilerParams(
            dimension_semantics=("arbitrary",),
            vmem_limit_bytes=32 * 1024 * 1024),
        cost_estimate=ce,
    )(*args)


# --------------------- stabilized Sinkhorn (Pallas) ---------------------------
# Same semantics as POT's ot.bregman.sinkhorn_stabilized port used previously
# (absorption into duals when |u| or |v| > tau, error check every print_period
# iterations, NaN -> revert-and-stop).  Each pallas_call runs `print_period`
# fused iterations entirely in VMEM/vregs; a thin outer lax.while_loop keeps
# the data-dependent early exit (at most ceil(1000/20)=50 launches, 1 typical).

def _sinkhorn_chunk_kernel(m_ref, u_ref, v_ref, al_ref, be_ref, err_ref, done_ref,
                           u_out, v_out, al_out, be_out, err_out, done_out, g_out,
                           *, len1, len2, reg, tau, stop_thr, print_period):
    dim_a = len1 + 1
    dim_b = len2 + 1
    inv_reg = 1.0 / reg
    M = m_ref[...]                                            # (dim_a, dim_b)

    # marginals built in-kernel: a = [1,..,1,len2], b = [1,..,1,len1]
    row_a = lax.broadcasted_iota(jnp.int32, (dim_a, 1), 0)
    a_marg = jnp.where(row_a == len1, jnp.float32(len2), jnp.float32(1.0))
    col_b = lax.broadcasted_iota(jnp.int32, (1, dim_b), 1)
    b_marg = jnp.where(col_b == len2, jnp.float32(len1), jnp.float32(1.0))

    def get_K(alpha, beta):
        return jnp.exp(-(M - alpha - beta) * inv_reg)

    def one_iter(carry, compute_err):
        u, v, alpha, beta, K, err, done = carry
        keep = done > 0.0                                     # (1,1) bool
        uprev, vprev = u, v

        Ktu = jnp.sum(K * u, axis=0, keepdims=True)           # (1, dim_b)
        v_new = b_marg / Ktu
        Kv = jnp.sum(K * v_new, axis=1, keepdims=True)        # (dim_a, 1)
        u_new = a_marg / Kv

        umax = jnp.max(jnp.abs(u_new), axis=0, keepdims=True)  # (1,1)
        vmax = jnp.max(jnp.abs(v_new), axis=1, keepdims=True)  # (1,1)
        absorb = jnp.logical_or(umax > tau, vmax > tau)
        alpha_n = jnp.where(absorb, alpha + reg * jnp.log(u_new), alpha)
        beta_n = jnp.where(absorb, beta + reg * jnp.log(v_new), beta)
        u_n = jnp.where(absorb, jnp.full_like(u_new, 1.0 / dim_a), u_new)
        v_n = jnp.where(absorb, jnp.full_like(v_new, 1.0 / dim_b), v_new)
        K_n = jnp.where(absorb, get_K(alpha_n, beta_n), K)

        if compute_err:
            transp = jnp.exp(-(M - alpha_n - beta_n) * inv_reg
                             + jnp.log(u_n) + jnp.log(v_n))
            diff = jnp.sum(transp, axis=0, keepdims=True) - b_marg
            err_n = jnp.sqrt(jnp.sum(diff * diff, axis=1, keepdims=True))
        else:
            err_n = err

        nan_u = jnp.max(jnp.where(u_n != u_n, 1.0, 0.0), axis=0, keepdims=True)
        nan_v = jnp.max(jnp.where(v_n != v_n, 1.0, 0.0), axis=1, keepdims=True)
        has_nan = (nan_u + nan_v) > 0.0                        # (1,1) bool
        u_fin = jnp.where(has_nan, uprev, u_n)
        v_fin = jnp.where(has_nan, vprev, v_n)
        stop = jnp.logical_or(err_n <= stop_thr, has_nan)
        done_n = jnp.where(stop, jnp.ones_like(done), done)

        # once done, freeze the state (exact early-exit semantics in-chunk)
        u_fin = jnp.where(keep, u, u_fin)
        v_fin = jnp.where(keep, v, v_fin)
        alpha_n = jnp.where(keep, alpha, alpha_n)
        beta_n = jnp.where(keep, beta, beta_n)
        K_n = jnp.where(keep, K, K_n)
        err_n = jnp.where(keep, err, err_n)
        return (u_fin, v_fin, alpha_n, beta_n, K_n, err_n, done_n)

    u0 = u_ref[...]
    v0 = v_ref[...]
    al0 = al_ref[...]
    be0 = be_ref[...]
    carry = (u0, v0, al0, be0, get_K(al0, be0), err_ref[...], done_ref[...])

    # first iteration of the chunk is the (ii % print_period == 0) one
    carry = one_iter(carry, True)
    carry = lax.fori_loop(0, print_period - 1,
                          lambda i, c: one_iter(c, False), carry)

    u, v, alpha, beta, K, err, done = carry
    u_out[...] = u
    v_out[...] = v
    al_out[...] = alpha
    be_out[...] = beta
    err_out[...] = err
    done_out[...] = done
    g_out[...] = jnp.exp(-(M - alpha - beta) * inv_reg
                         + jnp.log(u) + jnp.log(v))


def sinkhorn_stabilized(M, len1, len2, reg=0.001, num_iter_max=1000, tau=1e3,
                        stop_thr=1e-9, print_period=20):
    dim_a, dim_b = len1 + 1, len2 + 1
    n_chunks = -(-num_iter_max // print_period)

    kern = functools.partial(_sinkhorn_chunk_kernel, len1=len1, len2=len2,
                             reg=reg, tau=tau, stop_thr=stop_thr,
                             print_period=print_period)
    in_shapes = [(dim_a, dim_b), (dim_a, 1), (1, dim_b), (dim_a, 1), (1, dim_b),
                 (1, 1), (1, 1)]
    out_shapes = [(dim_a, 1), (1, dim_b), (dim_a, 1), (1, dim_b), (1, 1), (1, 1),
                  (dim_a, dim_b)]

    def spec(shape):
        nd = len(shape)
        return pl.BlockSpec(shape, lambda i, nd=nd: (0,) * nd)

    chunk = pl.pallas_call(
        kern,
        out_shape=tuple(jax.ShapeDtypeStruct(s, jnp.float32) for s in out_shapes),
        grid=(1,),
        in_specs=[spec(s) for s in in_shapes],
        out_specs=tuple(spec(s) for s in out_shapes),
        compiler_params=pltpu.CompilerParams(
            dimension_semantics=("arbitrary",)),
    )

    u0 = jnp.full((dim_a, 1), 1.0 / dim_a, jnp.float32)
    v0 = jnp.full((1, dim_b), 1.0 / dim_b, jnp.float32)
    al0 = jnp.zeros((dim_a, 1), jnp.float32)
    be0 = jnp.zeros((1, dim_b), jnp.float32)
    err0 = jnp.ones((1, 1), jnp.float32)
    done0 = jnp.zeros((1, 1), jnp.float32)
    g0 = jnp.zeros((dim_a, dim_b), jnp.float32)

    def cond_fn(st):
        c, _, _, _, _, _, done, _ = st
        return jnp.logical_and(c < n_chunks, done[0, 0] == 0.0)

    def body_fn(st):
        c, u, v, al, be, err, done, _ = st
        u, v, al, be, err, done, g = chunk(M, u, v, al, be, err, done)
        return (c + 1, u, v, al, be, err, done, g)

    st = lax.while_loop(cond_fn, body_fn,
                        (jnp.int32(0), u0, v0, al0, be0, err0, done0, g0))
    return st[-1]


# ------------------------------ full forward ----------------------------------

def superglue_forward(params, p1, d1, p2, d2, matches):
    len1 = p1.shape[1]
    len2 = p2.shape[1]

    p = jnp.concatenate([p1[0], p2[0]], axis=0)                # (N, 2)
    d = jnp.concatenate([d1[0], d2[0]], axis=0)                # (N, 64)
    d_pad = jnp.pad(d, ((0, 0), (0, F - d.shape[1])))          # (N, 128)

    costs = feature_pipeline(p, d_pad, params, len1, len2)     # (len1, len2)

    # dustbin augmentation (tiny plain-JAX glue) + Pallas Sinkhorn
    db = params["dustbin"]
    costs_x = jnp.concatenate(
        [costs, jnp.ones((1, len2), jnp.float32) * db], axis=0)
    costs_wd = jnp.concatenate(
        [costs_x, jnp.ones((len1 + 1, 1), jnp.float32) * db], axis=1)
    M = 1.0 - costs_wd

    sol = sinkhorn_stabilized(M, len1, len2, reg=0.001)

    sel = sol[matches[:, 0], matches[:, 1]]
    loss = jnp.mean(-jnp.log(sel + 0.001))
    acc = jnp.mean(
        (jnp.argmax(sol[matches[:, 0], :], axis=1) == matches[:, 1])
        .astype(jnp.float32))
    return loss, acc


# ----------------------------- parameter init ---------------------------------

def init_params(key):
    def glorot(k, shape):
        fan_in, fan_out = shape
        lim = (6.0 / (fan_in + fan_out)) ** 0.5
        return jax.random.uniform(k, shape, jnp.float32, -lim, lim)

    def linear(k, fin, fout):
        kw, kb = jax.random.split(k)
        lim = 1.0 / (fin ** 0.5)
        w = glorot(kw, (fin, fout))                  # (in, out): pre-transposed
        b = jax.random.uniform(kb, (1, fout), jnp.float32, -lim, lim)
        return w, b

    def attconv_qkv(k, fin):
        # pack Wq | Wk | Wv along the output axis -> one wide matmul per layer
        k1, k2, k3 = jax.random.split(k, 3)
        ws = [glorot(kk, (fin, F)) for kk in (k1, k2, k3)]
        if fin < F:                                  # mp1: pad 64 -> 128 rows
            ws = [jnp.pad(w, ((0, F - fin), (0, 0))) for w in ws]
        return jnp.concatenate(ws, axis=1)           # (128, 384)

    keys = jax.random.split(key, 7)
    fc1_w, fc1_b = linear(keys[0], 2, 32)
    fc2_w, fc2_b = linear(keys[1], 32, 64)
    fc3_w, fc3_b = linear(keys[2], 128, 128)

    mpW = jnp.stack([attconv_qkv(keys[3], 64),
                     attconv_qkv(keys[4], 128),
                     attconv_qkv(keys[5], 128),
                     attconv_qkv(keys[6], 128)], axis=0)        # (4, 128, 384)
    mpb = jnp.zeros((4, 3 * F), jnp.float32)                    # biases = 0

    return dict(
        fc1_w=fc1_w, fc1_b=fc1_b,
        fc2_w=jnp.pad(fc2_w, ((0, 0), (0, F - 64))).astype(jnp.bfloat16),
        fc2_b=jnp.pad(fc2_b, ((0, 0), (0, F - 64))),
        fc3_w=fc3_w.astype(jnp.bfloat16), fc3_b=fc3_b,
        mpW=mpW.astype(jnp.bfloat16), mpb=mpb,
        # torch.Tensor(1) is never reset in the module (uninitialized memory);
        # pick a deterministic value.
        dustbin=jnp.float32(1.0),
    )


# ---------------------------------- main ---------------------------------------

if __name__ == "__main__":
    key = jax.random.PRNGKey(0)
    kp1, kd1, kp2, kd2, kparam = jax.random.split(key, 5)

    len1, len2 = 8, 8
    p1 = jax.random.uniform(kp1, (1, len1, 2), jnp.float32)
    d1 = jax.random.normal(kd1, (1, len1, 64), jnp.float32)
    p2 = jax.random.uniform(kp2, (1, len2, 2), jnp.float32)
    d2 = jax.random.normal(kd2, (1, len2, 64), jnp.float32)
    matches = jnp.array([[0, 0], [1, 1], [2, 2], [3, 3]], dtype=jnp.int32)

    params = init_params(kparam)
    fwd = jax.jit(superglue_forward)
    loss, acc = fwd(params, p1, d1, p2, d2, matches)
    loss = jax.block_until_ready(loss)
    acc = jax.block_until_ready(acc)
    print(f"Loss: {float(loss)} | Acc: {float(acc) * 100.0}%")
    print("KERNEL_OK")
</pallas_src>

<mosaic_0001>
module attributes {stable_mosaic.version = 11 : i64} {
  func.func @_superglue_feature_kernel(%arg0: i32, %arg1: memref<16x2xf32, #tpu.memory_space<vmem>>, %arg2: memref<16x128xf32, #tpu.memory_space<vmem>>, %arg3: memref<2x32xf32, #tpu.memory_space<vmem>>, %arg4: memref<1x32xf32, #tpu.memory_space<vmem>>, %arg5: memref<32x128xbf16, #tpu.memory_space<vmem>>, %arg6: memref<1x128xf32, #tpu.memory_space<vmem>>, %arg7: memref<4x128x384xbf16, #tpu.memory_space<vmem>>, %arg8: memref<4x384xf32, #tpu.memory_space<vmem>>, %arg9: memref<128x128xbf16, #tpu.memory_space<vmem>>, %arg10: memref<1x128xf32, #tpu.memory_space<vmem>>, %arg11: memref<8x8xf32, #tpu.memory_space<vmem>>) attributes {dimension_semantics = [#tpu.dimension_semantics<arbitrary>], iteration_bounds = array<i64: 1>, scalar_prefetch = 0 : i64, scratch_operands = 0 : i64, tpu.core_type = #tpu.core_type<tc>, window_params = [{pipeline_mode = #tpu.pipeline_mode<synchronous>, transform_indices = @transform_0, window_bounds = array<i64: 16, 2>}, {pipeline_mode = #tpu.pipeline_mode<synchronous>, transform_indices = @transform_1, window_bounds = array<i64: 16, 128>}, {pipeline_mode = #tpu.pipeline_mode<synchronous>, transform_indices = @transform_2, window_bounds = array<i64: 2, 32>}, {pipeline_mode = #tpu.pipeline_mode<synchronous>, transform_indices = @transform_3, window_bounds = array<i64: 1, 32>}, {pipeline_mode = #tpu.pipeline_mode<synchronous>, transform_indices = @transform_4, window_bounds = array<i64: 32, 128>}, {pipeline_mode = #tpu.pipeline_mode<synchronous>, transform_indices = @transform_5, window_bounds = array<i64: 1, 128>}, {pipeline_mode = #tpu.pipeline_mode<synchronous>, transform_indices = @transform_6, window_bounds = array<i64: 4, 128, 384>}, {pipeline_mode = #tpu.pipeline_mode<synchronous>, transform_indices = @transform_7, window_bounds = array<i64: 4, 384>}, {pipeline_mode = #tpu.pipeline_mode<synchronous>, transform_indices = @transform_8, window_bounds = array<i64: 128, 128>}, {pipeline_mode = #tpu.pipeline_mode<synchronous>, transform_indices = @transform_9, window_bounds = array<i64: 1, 128>}, {pipeline_mode = #tpu.pipeline_mode<synchronous>, transform_indices = @transform_10, window_bounds = array<i64: 8, 8>}]} {
    %c0 = arith.constant 0 : index
    %c0_0 = arith.constant 0 : index
    %0 = vector.load %arg1[%c0, %c0_0] : memref<16x2xf32, #tpu.memory_space<vmem>>, vector<16x2xf32>
    %c0_1 = arith.constant 0 : index
    %c0_2 = arith.constant 0 : index
    %1 = vector.load %arg3[%c0_1, %c0_2] : memref<2x32xf32, #tpu.memory_space<vmem>>, vector<2x32xf32>
    %2 = vector.extract_strided_slice %0 {offsets = [0, 0], sizes = [16, 1], strides = [1, 1]} : vector<16x2xf32> to vector<16x1xf32>
    %3 = vector.extract_strided_slice %1 {offsets = [0, 0], sizes = [1, 32], strides = [1, 1]} : vector<2x32xf32> to vector<1x32xf32>
    %4 = vector.broadcast %2 : vector<16x1xf32> to vector<16x32xf32>
    %5 = vector.broadcast %3 : vector<1x32xf32> to vector<16x32xf32>
    %6 = arith.mulf %4, %5 : vector<16x32xf32>
    %7 = vector.extract_strided_slice %0 {offsets = [0, 1], sizes = [16, 1], strides = [1, 1]} : vector<16x2xf32> to vector<16x1xf32>
    %8 = vector.extract_strided_slice %1 {offsets = [1, 0], sizes = [1, 32], strides = [1, 1]} : vector<2x32xf32> to vector<1x32xf32>
    %9 = vector.broadcast %7 : vector<16x1xf32> to vector<16x32xf32>
    %10 = vector.broadcast %8 : vector<1x32xf32> to vector<16x32xf32>
    %11 = arith.mulf %9, %10 : vector<16x32xf32>
    %12 = arith.addf %6, %11 : vector<16x32xf32>
    %c0_3 = arith.constant 0 : index
    %c0_4 = arith.constant 0 : index
    %13 = vector.load %arg4[%c0_3, %c0_4] : memref<1x32xf32, #tpu.memory_space<vmem>>, vector<1x32xf32>
    %14 = vector.broadcast %13 : vector<1x32xf32> to vector<16x32xf32>
    %15 = arith.addf %12, %14 : vector<16x32xf32>
    %cst = arith.constant 0.000000e+00 : f32
    %16 = vector.broadcast %cst : f32 to vector<16x32xf32>
    %17 = arith.maximumf %15, %16 : vector<16x32xf32>
    %18 = arith.truncf %17 : vector<16x32xf32> to vector<16x32xbf16>
    %c0_5 = arith.constant 0 : index
    %c0_6 = arith.constant 0 : index
    %19 = vector.load %arg5[%c0_5, %c0_6] : memref<32x128xbf16, #tpu.memory_space<vmem>>, vector<32x128xbf16>
    %cst_7 = arith.constant dense<0.000000e+00> : vector<16x128xf32>
    %20 = tpu.matmul %18, %19, %cst_7 {dimension_numbers = #tpu.dot_dimension_numbers<[1], [0], [0], [1], [0, 0, 1, 1], [], []>} : vector<16x32xbf16>, vector<32x128xbf16>, vector<16x128xf32> -> vector<16x128xf32>
    %c0_8 = arith.constant 0 : index
    %c0_9 = arith.constant 0 : index
    %21 = vector.load %arg6[%c0_8, %c0_9] : memref<1x128xf32, #tpu.memory_space<vmem>>, vector<1x128xf32>
    %22 = vector.broadcast %21 : vector<1x128xf32> to vector<16x128xf32>
    %23 = arith.addf %20, %22 : vector<16x128xf32>
    %cst_10 = arith.constant 0.000000e+00 : f32
    %24 = vector.broadcast %cst_10 : f32 to vector<16x128xf32>
    %25 = arith.maximumf %23, %24 : vector<16x128xf32>
    %c0_11 = arith.constant 0 : index
    %c0_12 = arith.constant 0 : index
    %26 = vector.load %arg2[%c0_11, %c0_12] : memref<16x128xf32, #tpu.memory_space<vmem>>, vector<16x128xf32>
    %27 = arith.addf %25, %26 : vector<16x128xf32>
    %28 = tpu.iota {dimensions = array<i32: 0>} : vector<8x8xi32>
    %29 = tpu.iota {dimensions = array<i32: 1>} : vector<8x8xi32>
    %30 = arith.cmpi ne, %28, %29 : vector<8x8xi32>
    %31 = arith.extui %30 : vector<8x8xi1> to vector<8x8xi32>
    %32 = arith.sitofp %31 : vector<8x8xi32> to vector<8x8xf32>
    %33 = tpu.iota {dimensions = array<i32: 0>} : vector<8x8xi32>
    %34 = tpu.iota {dimensions = array<i32: 1>} : vector<8x8xi32>
    %35 = arith.cmpi ne, %33, %34 : vector<8x8xi32>
    %36 = arith.extui %35 : vector<8x8xi1> to vector<8x8xi32>
    %37 = arith.sitofp %36 : vector<8x8xi32> to vector<8x8xf32>
    %38 = arith.truncf %27 : vector<16x128xf32> to vector<16x128xbf16>
    %c0_13 = arith.constant 0 : index
    %c0_14 = arith.constant 0 : index
    %c0_15 = arith.constant 0 : index
    %39 = vector.load %arg7[%c0_13, %c0_14, %c0_15] : memref<4x128x384xbf16, #tpu.memory_space<vmem>>, vector<1x128x384xbf16>
    %40 = vector.shape_cast %39 : vector<1x128x384xbf16> to vector<128x384xbf16>
    %cst_16 = arith.constant dense<0.000000e+00> : vector<16x384xf32>
    %41 = tpu.matmul %38, %40, %cst_16 {dimension_numbers = #tpu.dot_dimension_numbers<[1], [0], [0], [1], [0, 0, 1, 1], [], []>} : vector<16x128xbf16>, vector<128x384xbf16>, vector<16x384xf32> -> vector<16x384xf32>
    %c0_17 = arith.constant 0 : index
    %c0_18 = arith.constant 0 : index
    %42 = vector.load %arg8[%c0_17, %c0_18] : memref<4x384xf32, #tpu.memory_space<vmem>>, vector<1x384xf32>
    %43 = vector.broadcast %42 : vector<1x384xf32> to vector<16x384xf32>
    %44 = arith.addf %41, %43 : vector<16x384xf32>
    %45 = vector.extract_strided_slice %44 {offsets = [0, 0], sizes = [16, 128], strides = [1, 1]} : vector<16x384xf32> to vector<16x128xf32>
    %46 = vector.extract_strided_slice %44 {offsets = [0, 128], sizes = [16, 128], strides = [1, 1]} : vector<16x384xf32> to vector<16x128xf32>
    %47 = vector.extract_strided_slice %44 {offsets = [0, 256], sizes = [16, 128], strides = [1, 1]} : vector<16x384xf32> to vector<16x128xf32>
    %48 = vector.extract_strided_slice %45 {offsets = [0, 0], sizes = [8, 128], strides = [1, 1]} : vector<16x128xf32> to vector<8x128xf32>
    %49 = vector.extract_strided_slice %46 {offsets = [0, 0], sizes = [8, 128], strides = [1, 1]} : vector<16x128xf32> to vector<8x128xf32>
    %50 = vector.extract_strided_slice %47 {offsets = [0, 0], sizes = [8, 128], strides = [1, 1]} : vector<16x128xf32> to vector<8x128xf32>
    %51 = math.absf %48 : vector<8x128xf32>
    %cst_19 = arith.constant dense<0xFF800000> : vector<8xf32>
    %52 = vector.multi_reduction <maximumf>, %51, %cst_19 [1] : vector<8x128xf32> to vector<8xf32>
    %53 = vector.shape_cast %52 : vector<8xf32> to vector<8x1xf32>
    %54 = math.absf %49 : vector<8x128xf32>
    %cst_20 = arith.constant dense<0xFF800000> : vector<8xf32>
    %55 = vector.multi_reduction <maximumf>, %54, %cst_20 [1] : vector<8x128xf32> to vector<8xf32>
    %56 = vector.shape_cast %55 : vector<8xf32> to vector<8x1xf32>
    %57 = vector.shape_cast %53 : vector<8x1xf32> to vector<8x1x1xf32>
    %58 = vector.shape_cast %56 : vector<8x1xf32> to vector<1x8x1xf32>
    %59 = vector.broadcast %57 : vector<8x1x1xf32> to vector<8x8x1xf32>
    %60 = vector.broadcast %58 : vector<1x8x1xf32> to vector<8x8x1xf32>
    %61 = arith.mulf %59, %60 : vector<8x8x1xf32>
    %62 = vector.shape_cast %48 : vector<8x128xf32> to vector<8x1x128xf32>
    %63 = vector.shape_cast %49 : vector<8x128xf32> to vector<1x8x128xf32>
    %64 = vector.broadcast %62 : vector<8x1x128xf32> to vector<8x8x128xf32>
    %65 = vector.broadcast %63 : vector<1x8x128xf32> to vector<8x8x128xf32>
    %66 = arith.mulf %64, %65 : vector<8x8x128xf32>
    %67 = vector.broadcast %61 : vector<8x8x1xf32> to vector<8x8x128xf32>
    %68 = arith.subf %66, %67 : vector<8x8x128xf32>
    %69 = math.exp %68 : vector<8x8x128xf32>
    %cst_21 = arith.constant dense<0.000000e+00> : vector<8x8xf32>
    %70 = vector.multi_reduction <add>, %69, %cst_21 [2] : vector<8x8x128xf32> to vector<8x8xf32>
    %cst_22 = arith.constant 1.000000e-30 : f32
    %71 = vector.broadcast %cst_22 : f32 to vector<8x8xf32>
    %72 = arith.addf %70, %71 : vector<8x8xf32>
    %73 = tpu.reciprocal %72 {approx = true} : vector<8x8xf32> -> vector<8x8xf32>
    %74 = arith.mulf %73, %32 : vector<8x8xf32>
    %75 = vector.shape_cast %50 : vector<8x128xf32> to vector<1x8x128xf32>
    %76 = vector.broadcast %75 : vector<1x8x128xf32> to vector<8x8x128xf32>
    %77 = arith.mulf %69, %76 : vector<8x8x128xf32>
    %78 = vector.shape_cast %74 : vector<8x8xf32> to vector<8x8x1xf32>
    %79 = vector.broadcast %78 : vector<8x8x1xf32> to vector<8x8x128xf32>
    %80 = arith.mulf %77, %79 : vector<8x8x128xf32>
    %cst_23 = arith.constant dense<0.000000e+00> : vector<8x128xf32>
    %81 = vector.multi_reduction <add>, %80, %cst_23 [1] : vector<8x8x128xf32> to vector<8x128xf32>
    %82 = vector.extract_strided_slice %45 {offsets = [8, 0], sizes = [8, 128], strides = [1, 1]} : vector<16x128xf32> to vector<8x128xf32>
    %83 = vector.extract_strided_slice %46 {offsets = [8, 0], sizes = [8, 128], strides = [1, 1]} : vector<16x128xf32> to vector<8x128xf32>
    %84 = vector.extract_strided_slice %47 {offsets = [8, 0], sizes = [8, 128], strides = [1, 1]} : vector<16x128xf32> to vector<8x128xf32>
    %85 = math.absf %82 : vector<8x128xf32>
    %cst_24 = arith.constant dense<0xFF800000> : vector<8xf32>
    %86 = vector.multi_reduction <maximumf>, %85, %cst_24 [1] : vector<8x128xf32> to vector<8xf32>
    %87 = vector.shape_cast %86 : vector<8xf32> to vector<8x1xf32>
    %88 = math.absf %83 : vector<8x128xf32>
    %cst_25 = arith.constant dense<0xFF800000> : vector<8xf32>
    %89 = vector.multi_reduction <maximumf>, %88, %cst_25 [1] : vector<8x128xf32> to vector<8xf32>
    %90 = vector.shape_cast %89 : vector<8xf32> to vector<8x1xf32>
    %91 = vector.shape_cast %87 : vector<8x1xf32> to vector<8x1x1xf32>
    %92 = vector.shape_cast %90 : vector<8x1xf32> to vector<1x8x1xf32>
    %93 = vector.broadcast %91 : vector<8x1x1xf32> to vector<8x8x1xf32>
    %94 = vector.broadcast %92 : vector<1x8x1xf32> to vector<8x8x1xf32>
    %95 = arith.mulf %93, %94 : vector<8x8x1xf32>
    %96 = vector.shape_cast %82 : vector<8x128xf32> to vector<8x1x128xf32>
    %97 = vector.shape_cast %83 : vector<8x128xf32> to vector<1x8x128xf32>
    %98 = vector.broadcast %96 : vector<8x1x128xf32> to vector<8x8x128xf32>
    %99 = vector.broadcast %97 : vector<1x8x128xf32> to vector<8x8x128xf32>
    %100 = arith.mulf %98, %99 : vector<8x8x128xf32>
    %101 = vector.broadcast %95 : vector<8x8x1xf32> to vector<8x8x128xf32>
    %102 = arith.subf %100, %101 : vector<8x8x128xf32>
    %103 = math.exp %102 : vector<8x8x128xf32>
    %cst_26 = arith.constant dense<0.000000e+00> : vector<8x8xf32>
    %104 = vector.multi_reduction <add>, %103, %cst_26 [2] : vector<8x8x128xf32> to vector<8x8xf32>
    %cst_27 = arith.constant 1.000000e-30 : f32
    %105 = vector.broadcast %cst_27 : f32 to vector<8x8xf32>
    %106 = arith.addf %104, %105 : vector<8x8xf32>
    %107 = tpu.reciprocal %106 {approx = true} : vector<8x8xf32> -> vector<8x8xf32>
    %108 = arith.mulf %107, %37 : vector<8x8xf32>
    %109 = vector.shape_cast %84 : vector<8x128xf32> to vector<1x8x128xf32>
    %110 = vector.broadcast %109 : vector<1x8x128xf32> to vector<8x8x128xf32>
    %111 = arith.mulf %103, %110 : vector<8x8x128xf32>
    %112 = vector.shape_cast %108 : vector<8x8xf32> to vector<8x8x1xf32>
    %113 = vector.broadcast %112 : vector<8x8x1xf32> to vector<8x8x128xf32>
    %114 = arith.mulf %111, %113 : vector<8x8x128xf32>
    %cst_28 = arith.constant dense<0.000000e+00> : vector<8x128xf32>
    %115 = vector.multi_reduction <add>, %114, %cst_28 [1] : vector<8x8x128xf32> to vector<8x128xf32>
    %116 = tpu.concatenate %81, %115 in 0 : vector<8x128xf32>, vector<8x128xf32> -> vector<16x128xf32>
    %117 = arith.truncf %116 : vector<16x128xf32> to vector<16x128xbf16>
    %c1 = arith.constant 1 : index
    %c0_29 = arith.constant 0 : index
    %c0_30 = arith.constant 0 : index
    %118 = vector.load %arg7[%c1, %c0_29, %c0_30] : memref<4x128x384xbf16, #tpu.memory_space<vmem>>, vector<1x128x384xbf16>
    %119 = vector.shape_cast %118 : vector<1x128x384xbf16> to vector<128x384xbf16>
    %cst_31 = arith.constant dense<0.000000e+00> : vector<16x384xf32>
    %120 = tpu.matmul %117, %119, %cst_31 {dimension_numbers = #tpu.dot_dimension_numbers<[1], [0], [0], [1], [0, 0, 1, 1], [], []>} : vector<16x128xbf16>, vector<128x384xbf16>, vector<16x384xf32> -> vector<16x384xf32>
    %c1_32 = arith.constant 1 : index
    %c0_33 = arith.constant 0 : index
    %121 = vector.load %arg8[%c1_32, %c0_33] : memref<4x384xf32, #tpu.memory_space<vmem>>, vector<1x384xf32>
    %122 = vector.broadcast %121 : vector<1x384xf32> to vector<16x384xf32>
    %123 = arith.addf %120, %122 : vector<16x384xf32>
    %124 = vector.extract_strided_slice %123 {offsets = [0, 0], sizes = [16, 128], strides = [1, 1]} : vector<16x384xf32> to vector<16x128xf32>
    %125 = vector.extract_strided_slice %123 {offsets = [0, 128], sizes = [16, 128], strides = [1, 1]} : vector<16x384xf32> to vector<16x128xf32>
    %126 = vector.extract_strided_slice %123 {offsets = [0, 256], sizes = [16, 128], strides = [1, 1]} : vector<16x384xf32> to vector<16x128xf32>
    %127 = vector.extract_strided_slice %124 {offsets = [8, 0], sizes = [8, 128], strides = [1, 1]} : vector<16x128xf32> to vector<8x128xf32>
    %128 = vector.extract_strided_slice %125 {offsets = [0, 0], sizes = [8, 128], strides = [1, 1]} : vector<16x128xf32> to vector<8x128xf32>
    %129 = vector.extract_strided_slice %126 {offsets = [0, 0], sizes = [8, 128], strides = [1, 1]} : vector<16x128xf32> to vector<8x128xf32>
    %130 = math.absf %127 : vector<8x128xf32>
    %cst_34 = arith.constant dense<0xFF800000> : vector<8xf32>
    %131 = vector.multi_reduction <maximumf>, %130, %cst_34 [1] : vector<8x128xf32> to vector<8xf32>
    %132 = vector.shape_cast %131 : vector<8xf32> to vector<8x1xf32>
    %133 = math.absf %128 : vector<8x128xf32>
    %cst_35 = arith.constant dense<0xFF800000> : vector<8xf32>
    %134 = vector.multi_reduction <maximumf>, %133, %cst_35 [1] : vector<8x128xf32> to vector<8xf32>
    %135 = vector.shape_cast %134 : vector<8xf32> to vector<8x1xf32>
    %136 = vector.shape_cast %132 : vector<8x1xf32> to vector<8x1x1xf32>
    %137 = vector.shape_cast %135 : vector<8x1xf32> to vector<1x8x1xf32>
    %138 = vector.broadcast %136 : vector<8x1x1xf32> to vector<8x8x1xf32>
    %139 = vector.broadcast %137 : vector<1x8x1xf32> to vector<8x8x1xf32>
    %140 = arith.mulf %138, %139 : vector<8x8x1xf32>
    %141 = vector.shape_cast %127 : vector<8x128xf32> to vector<8x1x128xf32>
    %142 = vector.shape_cast %128 : vector<8x128xf32> to vector<1x8x128xf32>
    %143 = vector.broadcast %141 : vector<8x1x128xf32> to vector<8x8x128xf32>
    %144 = vector.broadcast %142 : vector<1x8x128xf32> to vector<8x8x128xf32>
    %145 = arith.mulf %143, %144 : vector<8x8x128xf32>
    %146 = vector.broadcast %140 : vector<8x8x1xf32> to vector<8x8x128xf32>
    %147 = arith.subf %145, %146 : vector<8x8x128xf32>
    %148 = math.exp %147 : vector<8x8x128xf32>
    %cst_36 = arith.constant dense<0.000000e+00> : vector<8x8xf32>
    %149 = vector.multi_reduction <add>, %148, %cst_36 [2] : vector<8x8x128xf32> to vector<8x8xf32>
    %cst_37 = arith.constant 1.000000e-30 : f32
    %150 = vector.broadcast %cst_37 : f32 to vector<8x8xf32>
    %151 = arith.addf %149, %150 : vector<8x8xf32>
    %152 = tpu.reciprocal %151 {approx = true} : vector<8x8xf32> -> vector<8x8xf32>
    %153 = vector.shape_cast %129 : vector<8x128xf32> to vector<1x8x128xf32>
    %154 = vector.broadcast %153 : vector<1x8x128xf32> to vector<8x8x128xf32>
    %155 = arith.mulf %148, %154 : vector<8x8x128xf32>
    %156 = vector.shape_cast %152 : vector<8x8xf32> to vector<8x8x1xf32>
    %157 = vector.broadcast %156 : vector<8x8x1xf32> to vector<8x8x128xf32>
    %158 = arith.mulf %155, %157 : vector<8x8x128xf32>
    %cst_38 = arith.constant dense<0.000000e+00> : vector<8x128xf32>
    %159 = vector.multi_reduction <add>, %158, %cst_38 [1] : vector<8x8x128xf32> to vector<8x128xf32>
    %160 = vector.extract_strided_slice %116 {offsets = [0, 0], sizes = [8, 128], strides = [1, 1]} : vector<16x128xf32> to vector<8x128xf32>
    %161 = vector.extract_strided_slice %116 {offsets = [8, 0], sizes = [8, 128], strides = [1, 1]} : vector<16x128xf32> to vector<8x128xf32>
    %162 = arith.addf %161, %159 : vector<8x128xf32>
    %163 = tpu.concatenate %160, %162 in 0 : vector<8x128xf32>, vector<8x128xf32> -> vector<16x128xf32>
    %164 = arith.truncf %163 : vector<16x128xf32> to vector<16x128xbf16>
    %c2 = arith.constant 2 : index
    %c0_39 = arith.constant 0 : index
    %c0_40 = arith.constant 0 : index
    %165 = vector.load %arg7[%c2, %c0_39, %c0_40] : memref<4x128x384xbf16, #tpu.memory_space<vmem>>, vector<1x128x384xbf16>
    %166 = vector.shape_cast %165 : vector<1x128x384xbf16> to vector<128x384xbf16>
    %cst_41 = arith.constant dense<0.000000e+00> : vector<16x384xf32>
    %167 = tpu.matmul %164, %166, %cst_41 {dimension_numbers = #tpu.dot_dimension_numbers<[1], [0], [0], [1], [0, 0, 1, 1], [], []>} : vector<16x128xbf16>, vector<128x384xbf16>, vector<16x384xf32> -> vector<16x384xf32>
    %c2_42 = arith.constant 2 : index
    %c0_43 = arith.constant 0 : index
    %168 = vector.load %arg8[%c2_42, %c0_43] : memref<4x384xf32, #tpu.memory_space<vmem>>, vector<1x384xf32>
    %169 = vector.broadcast %168 : vector<1x384xf32> to vector<16x384xf32>
    %170 = arith.addf %167, %169 : vector<16x384xf32>
    %171 = vector.extract_strided_slice %170 {offsets = [0, 0], sizes = [16, 128], strides = [1, 1]} : vector<16x384xf32> to vector<16x128xf32>
    %172 = vector.extract_strided_slice %170 {offsets = [0, 128], sizes = [16, 128], strides = [1, 1]} : vector<16x384xf32> to vector<16x128xf32>
    %173 = vector.extract_strided_slice %170 {offsets = [0, 256], sizes = [16, 128], strides = [1, 1]} : vector<16x384xf32> to vector<16x128xf32>
    %174 = vector.extract_strided_slice %171 {offsets = [0, 0], sizes = [8, 128], strides = [1, 1]} : vector<16x128xf32> to vector<8x128xf32>
    %175 = vector.extract_strided_slice %172 {offsets = [0, 0], sizes = [8, 128], strides = [1, 1]} : vector<16x128xf32> to vector<8x128xf32>
    %176 = vector.extract_strided_slice %173 {offsets = [0, 0], sizes = [8, 128], strides = [1, 1]} : vector<16x128xf32> to vector<8x128xf32>
    %177 = math.absf %174 : vector<8x128xf32>
    %cst_44 = arith.constant dense<0xFF800000> : vector<8xf32>
    %178 = vector.multi_reduction <maximumf>, %177, %cst_44 [1] : vector<8x128xf32> to vector<8xf32>
    %179 = vector.shape_cast %178 : vector<8xf32> to vector<8x1xf32>
    %180 = math.absf %175 : vector<8x128xf32>
    %cst_45 = arith.constant dense<0xFF800000> : vector<8xf32>
    %181 = vector.multi_reduction <maximumf>, %180, %cst_45 [1] : vector<8x128xf32> to vector<8xf32>
    %182 = vector.shape_cast %181 : vector<8xf32> to vector<8x1xf32>
    %183 = vector.shape_cast %179 : vector<8x1xf32> to vector<8x1x1xf32>
    %184 = vector.shape_cast %182 : vector<8x1xf32> to vector<1x8x1xf32>
    %185 = vector.broadcast %183 : vector<8x1x1xf32> to vector<8x8x1xf32>
    %186 = vector.broadcast %184 : vector<1x8x1xf32> to vector<8x8x1xf32>
    %187 = arith.mulf %185, %186 : vector<8x8x1xf32>
    %188 = vector.shape_cast %174 : vector<8x128xf32> to vector<8x1x128xf32>
    %189 = vector.shape_cast %175 : vector<8x128xf32> to vector<1x8x128xf32>
    %190 = vector.broadcast %188 : vector<8x1x128xf32> to vector<8x8x128xf32>
    %191 = vector.broadcast %189 : vector<1x8x128xf32> to vector<8x8x128xf32>
    %192 = arith.mulf %190, %191 : vector<8x8x128xf32>
    %193 = vector.broadcast %187 : vector<8x8x1xf32> to vector<8x8x128xf32>
    %194 = arith.subf %192, %193 : vector<8x8x128xf32>
    %195 = math.exp %194 : vector<8x8x128xf32>
    %cst_46 = arith.constant dense<0.000000e+00> : vector<8x8xf32>
    %196 = vector.multi_reduction <add>, %195, %cst_46 [2] : vector<8x8x128xf32> to vector<8x8xf32>
    %cst_47 = arith.constant 1.000000e-30 : f32
    %197 = vector.broadcast %cst_47 : f32 to vector<8x8xf32>
    %198 = arith.addf %196, %197 : vector<8x8xf32>
    %199 = tpu.reciprocal %198 {approx = true} : vector<8x8xf32> -> vector<8x8xf32>
    %200 = arith.mulf %199, %32 : vector<8x8xf32>
    %201 = vector.shape_cast %176 : vector<8x128xf32> to vector<1x8x128xf32>
    %202 = vector.broadcast %201 : vector<1x8x128xf32> to vector<8x8x128xf32>
    %203 = arith.mulf %195, %202 : vector<8x8x128xf32>
    %204 = vector.shape_cast %200 : vector<8x8xf32> to vector<8x8x1xf32>
    %205 = vector.broadcast %204 : vector<8x8x1xf32> to vector<8x8x128xf32>
    %206 = arith.mulf %203, %205 : vector<8x8x128xf32>
    %cst_48 = arith.constant dense<0.000000e+00> : vector<8x128xf32>
    %207 = vector.multi_reduction <add>, %206, %cst_48 [1] : vector<8x8x128xf32> to vector<8x128xf32>
    %208 = vector.extract_strided_slice %171 {offsets = [8, 0], sizes = [8, 128], strides = [1, 1]} : vector<16x128xf32> to vector<8x128xf32>
    %209 = vector.extract_strided_slice %172 {offsets = [8, 0], sizes = [8, 128], strides = [1, 1]} : vector<16x128xf32> to vector<8x128xf32>
    %210 = vector.extract_strided_slice %173 {offsets = [8, 0], sizes = [8, 128], strides = [1, 1]} : vector<16x128xf32> to vector<8x128xf32>
    %211 = math.absf %208 : vector<8x128xf32>
    %cst_49 = arith.constant dense<0xFF800000> : vector<8xf32>
    %212 = vector.multi_reduction <maximumf>, %211, %cst_49 [1] : vector<8x128xf32> to vector<8xf32>
    %213 = vector.shape_cast %212 : vector<8xf32> to vector<8x1xf32>
    %214 = math.absf %209 : vector<8x128xf32>
    %cst_50 = arith.constant dense<0xFF800000> : vector<8xf32>
    %215 = vector.multi_reduction <maximumf>, %214, %cst_50 [1] : vector<8x128xf32> to vector<8xf32>
    %216 = vector.shape_cast %215 : vector<8xf32> to vector<8x1xf32>
    %217 = vector.shape_cast %213 : vector<8x1xf32> to vector<8x1x1xf32>
    %218 = vector.shape_cast %216 : vector<8x1xf32> to vector<1x8x1xf32>
    %219 = vector.broadcast %217 : vector<8x1x1xf32> to vector<8x8x1xf32>
    %220 = vector.broadcast %218 : vector<1x8x1xf32> to vector<8x8x1xf32>
    %221 = arith.mulf %219, %220 : vector<8x8x1xf32>
    %222 = vector.shape_cast %208 : vector<8x128xf32> to vector<8x1x128xf32>
    %223 = vector.shape_cast %209 : vector<8x128xf32> to vector<1x8x128xf32>
    %224 = vector.broadcast %222 : vector<8x1x128xf32> to vector<8x8x128xf32>
    %225 = vector.broadcast %223 : vector<1x8x128xf32> to vector<8x8x128xf32>
    %226 = arith.mulf %224, %225 : vector<8x8x128xf32>
    %227 = vector.broadcast %221 : vector<8x8x1xf32> to vector<8x8x128xf32>
    %228 = arith.subf %226, %227 : vector<8x8x128xf32>
    %229 = math.exp %228 : vector<8x8x128xf32>
    %cst_51 = arith.constant dense<0.000000e+00> : vector<8x8xf32>
    %230 = vector.multi_reduction <add>, %229, %cst_51 [2] : vector<8x8x128xf32> to vector<8x8xf32>
    %cst_52 = arith.constant 1.000000e-30 : f32
    %231 = vector.broadcast %cst_52 : f32 to vector<8x8xf32>
    %232 = arith.addf %230, %231 : vector<8x8xf32>
    %233 = tpu.reciprocal %232 {approx = true} : vector<8x8xf32> -> vector<8x8xf32>
    %234 = arith.mulf %233, %37 : vector<8x8xf32>
    %235 = vector.shape_cast %210 : vector<8x128xf32> to vector<1x8x128xf32>
    %236 = vector.broadcast %235 : vector<1x8x128xf32> to vector<8x8x128xf32>
    %237 = arith.mulf %229, %236 : vector<8x8x128xf32>
    %238 = vector.shape_cast %234 : vector<8x8xf32> to vector<8x8x1xf32>
    %239 = vector.broadcast %238 : vector<8x8x1xf32> to vector<8x8x128xf32>
    %240 = arith.mulf %237, %239 : vector<8x8x128xf32>
    %cst_53 = arith.constant dense<0.000000e+00> : vector<8x128xf32>
    %241 = vector.multi_reduction <add>, %240, %cst_53 [1] : vector<8x8x128xf32> to vector<8x128xf32>
    %242 = tpu.concatenate %207, %241 in 0 : vector<8x128xf32>, vector<8x128xf32> -> vector<16x128xf32>
    %243 = arith.addf %163, %242 : vector<16x128xf32>
    %244 = arith.truncf %243 : vector<16x128xf32> to vector<16x128xbf16>
    %c3 = arith.constant 3 : index
    %c0_54 = arith.constant 0 : index
    %c0_55 = arith.constant 0 : index
    %245 = vector.load %arg7[%c3, %c0_54, %c0_55] : memref<4x128x384xbf16, #tpu.memory_space<vmem>>, vector<1x128x384xbf16>
    %246 = vector.shape_cast %245 : vector<1x128x384xbf16> to vector<128x384xbf16>
    %cst_56 = arith.constant dense<0.000000e+00> : vector<16x384xf32>
    %247 = tpu.matmul %244, %246, %cst_56 {dimension_numbers = #tpu.dot_dimension_numbers<[1], [0], [0], [1], [0, 0, 1, 1], [], []>} : vector<16x128xbf16>, vector<128x384xbf16>, vector<16x384xf32> -> vector<16x384xf32>
    %c3_57 = arith.constant 3 : index
    %c0_58 = arith.constant 0 : index
    %248 = vector.load %arg8[%c3_57, %c0_58] : memref<4x384xf32, #tpu.memory_space<vmem>>, vector<1x384xf32>
    %249 = vector.broadcast %248 : vector<1x384xf32> to vector<16x384xf32>
    %250 = arith.addf %247, %249 : vector<16x384xf32>
    %251 = vector.extract_strided_slice %250 {offsets = [0, 0], sizes = [16, 128], strides = [1, 1]} : vector<16x384xf32> to vector<16x128xf32>
    %252 = vector.extract_strided_slice %250 {offsets = [0, 128], sizes = [16, 128], strides = [1, 1]} : vector<16x384xf32> to vector<16x128xf32>
    %253 = vector.extract_strided_slice %250 {offsets = [0, 256], sizes = [16, 128], strides = [1, 1]} : vector<16x384xf32> to vector<16x128xf32>
    %254 = vector.extract_strided_slice %251 {offsets = [8, 0], sizes = [8, 128], strides = [1, 1]} : vector<16x128xf32> to vector<8x128xf32>
    %255 = vector.extract_strided_slice %252 {offsets = [0, 0], sizes = [8, 128], strides = [1, 1]} : vector<16x128xf32> to vector<8x128xf32>
    %256 = vector.extract_strided_slice %253 {offsets = [0, 0], sizes = [8, 128], strides = [1, 1]} : vector<16x128xf32> to vector<8x128xf32>
    %257 = math.absf %254 : vector<8x128xf32>
    %cst_59 = arith.constant dense<0xFF800000> : vector<8xf32>
    %258 = vector.multi_reduction <maximumf>, %257, %cst_59 [1] : vector<8x128xf32> to vector<8xf32>
    %259 = vector.shape_cast %258 : vector<8xf32> to vector<8x1xf32>
    %260 = math.absf %255 : vector<8x128xf32>
    %cst_60 = arith.constant dense<0xFF800000> : vector<8xf32>
    %261 = vector.multi_reduction <maximumf>, %260, %cst_60 [1] : vector<8x128xf32> to vector<8xf32>
    %262 = vector.shape_cast %261 : vector<8xf32> to vector<8x1xf32>
    %263 = vector.shape_cast %259 : vector<8x1xf32> to vector<8x1x1xf32>
    %264 = vector.shape_cast %262 : vector<8x1xf32> to vector<1x8x1xf32>
    %265 = vector.broadcast %263 : vector<8x1x1xf32> to vector<8x8x1xf32>
    %266 = vector.broadcast %264 : vector<1x8x1xf32> to vector<8x8x1xf32>
    %267 = arith.mulf %265, %266 : vector<8x8x1xf32>
    %268 = vector.shape_cast %254 : vector<8x128xf32> to vector<8x1x128xf32>
    %269 = vector.shape_cast %255 : vector<8x128xf32> to vector<1x8x128xf32>
    %270 = vector.broadcast %268 : vector<8x1x128xf32> to vector<8x8x128xf32>
    %271 = vector.broadcast %269 : vector<1x8x128xf32> to vector<8x8x128xf32>
    %272 = arith.mulf %270, %271 : vector<8x8x128xf32>
    %273 = vector.broadcast %267 : vector<8x8x1xf32> to vector<8x8x128xf32>
    %274 = arith.subf %272, %273 : vector<8x8x128xf32>
    %275 = math.exp %274 : vector<8x8x128xf32>
    %cst_61 = arith.constant dense<0.000000e+00> : vector<8x8xf32>
    %276 = vector.multi_reduction <add>, %275, %cst_61 [2] : vector<8x8x128xf32> to vector<8x8xf32>
    %cst_62 = arith.constant 1.000000e-30 : f32
    %277 = vector.broadcast %cst_62 : f32 to vector<8x8xf32>
    %278 = arith.addf %276, %277 : vector<8x8xf32>
    %279 = tpu.reciprocal %278 {approx = true} : vector<8x8xf32> -> vector<8x8xf32>
    %280 = vector.shape_cast %256 : vector<8x128xf32> to vector<1x8x128xf32>
    %281 = vector.broadcast %280 : vector<1x8x128xf32> to vector<8x8x128xf32>
    %282 = arith.mulf %275, %281 : vector<8x8x128xf32>
    %283 = vector.shape_cast %279 : vector<8x8xf32> to vector<8x8x1xf32>
    %284 = vector.broadcast %283 : vector<8x8x1xf32> to vector<8x8x128xf32>
    %285 = arith.mulf %282, %284 : vector<8x8x128xf32>
    %cst_63 = arith.constant dense<0.000000e+00> : vector<8x128xf32>
    %286 = vector.multi_reduction <add>, %285, %cst_63 [1] : vector<8x8x128xf32> to vector<8x128xf32>
    %287 = vector.extract_strided_slice %243 {offsets = [0, 0], sizes = [8, 128], strides = [1, 1]} : vector<16x128xf32> to vector<8x128xf32>
    %288 = vector.extract_strided_slice %243 {offsets = [8, 0], sizes = [8, 128], strides = [1, 1]} : vector<16x128xf32> to vector<8x128xf32>
    %289 = arith.addf %288, %286 : vector<8x128xf32>
    %290 = tpu.concatenate %287, %289 in 0 : vector<8x128xf32>, vector<8x128xf32> -> vector<16x128xf32>
    %291 = arith.truncf %290 : vector<16x128xf32> to vector<16x128xbf16>
    %c0_64 = arith.constant 0 : index
    %c0_65 = arith.constant 0 : index
    %292 = vector.load %arg9[%c0_64, %c0_65] : memref<128x128xbf16, #tpu.memory_space<vmem>>, vector<128x128xbf16>
    %cst_66 = arith.constant dense<0.000000e+00> : vector<16x128xf32>
    %293 = tpu.matmul %291, %292, %cst_66 {dimension_numbers = #tpu.dot_dimension_numbers<[1], [0], [0], [1], [0, 0, 1, 1], [], []>} : vector<16x128xbf16>, vector<128x128xbf16>, vector<16x128xf32> -> vector<16x128xf32>
    %c0_67 = arith.constant 0 : index
    %c0_68 = arith.constant 0 : index
    %294 = vector.load %arg10[%c0_67, %c0_68] : memref<1x128xf32, #tpu.memory_space<vmem>>, vector<1x128xf32>
    %295 = vector.broadcast %294 : vector<1x128xf32> to vector<16x128xf32>
    %296 = arith.addf %293, %295 : vector<16x128xf32>
    %cst_69 = arith.constant 0.000000e+00 : f32
    %297 = vector.broadcast %cst_69 : f32 to vector<16x128xf32>
    %298 = arith.maximumf %296, %297 : vector<16x128xf32>
    %299 = arith.mulf %298, %298 : vector<16x128xf32>
    %cst_70 = arith.constant dense<0.000000e+00> : vector<16xf32>
    %300 = vector.multi_reduction <add>, %299, %cst_70 [1] : vector<16x128xf32> to vector<16xf32>
    %301 = vector.shape_cast %300 : vector<16xf32> to vector<16x1xf32>
    %cst_71 = arith.constant 9.99999996E-13 : f32
    %302 = vector.broadcast %cst_71 : f32 to vector<16x1xf32>
    %303 = arith.addf %301, %302 : vector<16x1xf32>
    %304 = math.rsqrt %303 : vector<16x1xf32>
    %305 = vector.broadcast %304 : vector<16x1xf32> to vector<16x128xf32>
    %306 = arith.mulf %298, %305 : vector<16x128xf32>
    %307 = vector.extract_strided_slice %306 {offsets = [0, 0], sizes = [8, 128], strides = [1, 1]} : vector<16x128xf32> to vector<8x128xf32>
    %308 = vector.extract_strided_slice %306 {offsets = [8, 0], sizes = [8, 128], strides = [1, 1]} : vector<16x128xf32> to vector<8x128xf32>
    %309 = vector.shape_cast %307 : vector<8x128xf32> to vector<8x1x128xf32>
    %310 = vector.shape_cast %308 : vector<8x128xf32> to vector<1x8x128xf32>
    %311 = vector.broadcast %309 : vector<8x1x128xf32> to vector<8x8x128xf32>
    %312 = vector.broadcast %310 : vector<1x8x128xf32> to vector<8x8x128xf32>
    %313 = arith.mulf %311, %312 : vector<8x8x128xf32>
    %cst_72 = arith.constant dense<0.000000e+00> : vector<8x8xf32>
    %314 = vector.multi_reduction <add>, %313, %cst_72 [2] : vector<8x8x128xf32> to vector<8x8xf32>
    %c0_73 = arith.constant 0 : index
    %c0_74 = arith.constant 0 : index
    %315 = vector.load %arg11[%c0_73, %c0_74] : memref<8x8xf32, #tpu.memory_space<vmem>>, vector<8x8xf32>
    tpu.vector_store %arg11[%c0_73, %c0_74], %314 {strides = array<i32>} : memref<8x8xf32, #tpu.memory_space<vmem>>, vector<8x8xf32>,
    return
  }
  func.func @transform_0(%arg0: i32) -> (i32, i32) {
    %c0_i32 = arith.constant 0 : i32
    %c0_i32_0 = arith.constant 0 : i32
    %c0_i32_1 = arith.constant 0 : i32
    return %c0_i32, %c0_i32_0 : i32, i32
  }
  func.func @transform_1(%arg0: i32) -> (i32, i32) {
    %c0_i32 = arith.constant 0 : i32
    %c0_i32_0 = arith.constant 0 : i32
    %c0_i32_1 = arith.constant 0 : i32
    return %c0_i32, %c0_i32_0 : i32, i32
  }
  func.func @transform_2(%arg0: i32) -> (i32, i32) {
    %c0_i32 = arith.constant 0 : i32
    %c0_i32_0 = arith.constant 0 : i32
    %c0_i32_1 = arith.constant 0 : i32
    return %c0_i32, %c0_i32_0 : i32, i32
  }
  func.func @transform_3(%arg0: i32) -> (i32, i32) {
    %c0_i32 = arith.constant 0 : i32
    %c0_i32_0 = arith.constant 0 : i32
    %c0_i32_1 = arith.constant 0 : i32
    return %c0_i32, %c0_i32_0 : i32, i32
  }
  func.func @transform_4(%arg0: i32) -> (i32, i32) {
    %c0_i32 = arith.constant 0 : i32
    %c0_i32_0 = arith.constant 0 : i32
    %c0_i32_1 = arith.constant 0 : i32
    return %c0_i32, %c0_i32_0 : i32, i32
  }
  func.func @transform_5(%arg0: i32) -> (i32, i32) {
    %c0_i32 = arith.constant 0 : i32
    %c0_i32_0 = arith.constant 0 : i32
    %c0_i32_1 = arith.constant 0 : i32
    return %c0_i32, %c0_i32_0 : i32, i32
  }
  func.func @transform_6(%arg0: i32) -> (i32, i32, i32) {
    %c0_i32 = arith.constant 0 : i32
    %c0_i32_0 = arith.constant 0 : i32
    %c0_i32_1 = arith.constant 0 : i32
    %c0_i32_2 = arith.constant 0 : i32
    return %c0_i32, %c0_i32_0, %c0_i32_1 : i32, i32, i32
  }
  func.func @transform_7(%arg0: i32) -> (i32, i32) {
    %c0_i32 = arith.constant 0 : i32
    %c0_i32_0 = arith.constant 0 : i32
    %c0_i32_1 = arith.constant 0 : i32
    return %c0_i32, %c0_i32_0 : i32, i32
  }
  func.func @transform_8(%arg0: i32) -> (i32, i32) {
    %c0_i32 = arith.constant 0 : i32
    %c0_i32_0 = arith.constant 0 : i32
    %c0_i32_1 = arith.constant 0 : i32
    return %c0_i32, %c0_i32_0 : i32, i32
  }
  func.func @transform_9(%arg0: i32) -> (i32, i32) {
    %c0_i32 = arith.constant 0 : i32
    %c0_i32_0 = arith.constant 0 : i32
    %c0_i32_1 = arith.constant 0 : i32
    return %c0_i32, %c0_i32_0 : i32, i32
  }
  func.func @transform_10(%arg0: i32) -> (i32, i32) {
    %c0_i32 = arith.constant 0 : i32
    %c0_i32_0 = arith.constant 0 : i32
    %c0_i32_1 = arith.constant 0 : i32
    return %c0_i32, %c0_i32_0 : i32, i32
  }
}

module attributes {stable_mosaic.version = 11 : i64} {
  func.func @_sinkhorn_chunk_kernel(%arg0: i32, %arg1: memref<9x9xf32, #tpu.memory_space<vmem>>, %arg2: memref<9x1xf32, #tpu.memory_space<vmem>>, %arg3: memref<1x9xf32, #tpu.memory_space<vmem>>, %arg4: memref<9x1xf32, #tpu.memory_space<vmem>>, %arg5: memref<1x9xf32, #tpu.memory_space<vmem>>, %arg6: memref<1x1xf32, #tpu.memory_space<vmem>>, %arg7: memref<1x1xf32, #tpu.memory_space<vmem>>, %arg8: memref<9x1xf32, #tpu.memory_space<vmem>>, %arg9: memref<1x9xf32, #tpu.memory_space<vmem>>, %arg10: memref<9x1xf32, #tpu.memory_space<vmem>>, %arg11: memref<1x9xf32, #tpu.memory_space<vmem>>, %arg12: memref<1x1xf32, #tpu.memory_space<vmem>>, %arg13: memref<1x1xf32, #tpu.memory_space<vmem>>, %arg14: memref<9x9xf32, #tpu.memory_space<vmem>>) attributes {dimension_semantics = [#tpu.dimension_semantics<arbitrary>], iteration_bounds = array<i64: 1>, scalar_prefetch = 0 : i64, scratch_operands = 0 : i64, tpu.core_type = #tpu.core_type<tc>, window_params = [{pipeline_mode = #tpu.pipeline_mode<synchronous>, transform_indices = @transform_0, window_bounds = array<i64: 9, 9>}, {pipeline_mode = #tpu.pipeline_mode<synchronous>, transform_indices = @transform_1, window_bounds = array<i64: 9, 1>}, {pipeline_mode = #tpu.pipeline_mode<synchronous>, transform_indices = @transform_2, window_bounds = array<i64: 1, 9>}, {pipeline_mode = #tpu.pipeline_mode<synchronous>, transform_indices = @transform_3, window_bounds = array<i64: 9, 1>}, {pipeline_mode = #tpu.pipeline_mode<synchronous>, transform_indices = @transform_4, window_bounds = array<i64: 1, 9>}, {pipeline_mode = #tpu.pipeline_mode<synchronous>, transform_indices = @transform_5, window_bounds = array<i64: 1, 1>}, {pipeline_mode = #tpu.pipeline_mode<synchronous>, transform_indices = @transform_6, window_bounds = array<i64: 1, 1>}, {pipeline_mode = #tpu.pipeline_mode<synchronous>, transform_indices = @transform_7, window_bounds = array<i64: 9, 1>}, {pipeline_mode = #tpu.pipeline_mode<synchronous>, transform_indices = @transform_8, window_bounds = array<i64: 1, 9>}, {pipeline_mode = #tpu.pipeline_mode<synchronous>, transform_indices = @transform_9, window_bounds = array<i64: 9, 1>}, {pipeline_mode = #tpu.pipeline_mode<synchronous>, transform_indices = @transform_10, window_bounds = array<i64: 1, 9>}, {pipeline_mode = #tpu.pipeline_mode<synchronous>, transform_indices = @transform_11, window_bounds = array<i64: 1, 1>}, {pipeline_mode = #tpu.pipeline_mode<synchronous>, transform_indices = @transform_12, window_bounds = array<i64: 1, 1>}, {pipeline_mode = #tpu.pipeline_mode<synchronous>, transform_indices = @transform_13, window_bounds = array<i64: 9, 9>}]} {
    %c0 = arith.constant 0 : index
    %c0_0 = arith.constant 0 : index
    %0 = vector.load %arg1[%c0, %c0_0] : memref<9x9xf32, #tpu.memory_space<vmem>>, vector<9x9xf32>
    %1 = tpu.iota {dimensions = array<i32: 0>} : vector<9x1xi32>
    %c8_i32 = arith.constant 8 : i32
    %2 = vector.broadcast %c8_i32 : i32 to vector<9x1xi32>
    %3 = arith.cmpi eq, %1, %2 : vector<9x1xi32>
    %cst = arith.constant 8.000000e+00 : f32
    %cst_1 = arith.constant 1.000000e+00 : f32
    %4 = vector.broadcast %cst : f32 to vector<9x1xf32>
    %5 = vector.broadcast %cst_1 : f32 to vector<9x1xf32>
    %6 = arith.select %3, %4, %5 : vector<9x1xi1>, vector<9x1xf32>
    %7 = tpu.iota {dimensions = array<i32: 1>} : vector<1x9xi32>
    %c8_i32_2 = arith.constant 8 : i32
    %8 = vector.broadcast %c8_i32_2 : i32 to vector<1x9xi32>
    %9 = arith.cmpi eq, %7, %8 : vector<1x9xi32>
    %cst_3 = arith.constant 8.000000e+00 : f32
    %cst_4 = arith.constant 1.000000e+00 : f32
    %10 = vector.broadcast %cst_3 : f32 to vector<1x9xf32>
    %11 = vector.broadcast %cst_4 : f32 to vector<1x9xf32>
    %12 = arith.select %9, %10, %11 : vector<1x9xi1>, vector<1x9xf32>
    %c0_5 = arith.constant 0 : index
    %c0_6 = arith.constant 0 : index
    %13 = vector.load %arg2[%c0_5, %c0_6] : memref<9x1xf32, #tpu.memory_space<vmem>>, vector<9x1xf32>
    %c0_7 = arith.constant 0 : index
    %c0_8 = arith.constant 0 : index
    %14 = vector.load %arg3[%c0_7, %c0_8] : memref<1x9xf32, #tpu.memory_space<vmem>>, vector<1x9xf32>
    %c0_9 = arith.constant 0 : index
    %c0_10 = arith.constant 0 : index
    %15 = vector.load %arg4[%c0_9, %c0_10] : memref<9x1xf32, #tpu.memory_space<vmem>>, vector<9x1xf32>
    %c0_11 = arith.constant 0 : index
    %c0_12 = arith.constant 0 : index
    %16 = vector.load %arg5[%c0_11, %c0_12] : memref<1x9xf32, #tpu.memory_space<vmem>>, vector<1x9xf32>
    %17 = vector.broadcast %15 : vector<9x1xf32> to vector<9x9xf32>
    %18 = arith.subf %0, %17 : vector<9x9xf32>
    %19 = vector.broadcast %16 : vector<1x9xf32> to vector<9x9xf32>
    %20 = arith.subf %18, %19 : vector<9x9xf32>
    %cst_13 = arith.constant 0.000000e+00 : f32
    %21 = vector.broadcast %cst_13 : f32 to vector<9x9xf32>
    %22 = arith.subf %21, %20 : vector<9x9xf32>
    %cst_14 = arith.constant 1.000000e+03 : f32
    %23 = vector.broadcast %cst_14 : f32 to vector<9x9xf32>
    %24 = arith.mulf %22, %23 : vector<9x9xf32>
    %25 = math.exp %24 : vector<9x9xf32>
    %c0_15 = arith.constant 0 : index
    %c0_16 = arith.constant 0 : index
    %26 = vector.load %arg6[%c0_15, %c0_16] : memref<1x1xf32, #tpu.memory_space<vmem>>, vector<1x1xf32>
    %c0_17 = arith.constant 0 : index
    %c0_18 = arith.constant 0 : index
    %27 = vector.load %arg7[%c0_17, %c0_18] : memref<1x1xf32, #tpu.memory_space<vmem>>, vector<1x1xf32>
    %cst_19 = arith.constant 0.000000e+00 : f32
    %28 = vector.broadcast %cst_19 : f32 to vector<1x1xf32>
    %29 = arith.cmpf ogt, %27, %28 : vector<1x1xf32>
    %30 = vector.broadcast %13 : vector<9x1xf32> to vector<9x9xf32>
    %31 = arith.mulf %25, %30 : vector<9x9xf32>
    %cst_20 = arith.constant dense<0.000000e+00> : vector<9xf32>
    %32 = vector.multi_reduction <add>, %31, %cst_20 [0] : vector<9x9xf32> to vector<9xf32>
    %33 = vector.shape_cast %32 : vector<9xf32> to vector<1x9xf32>
    %34 = arith.divf %12, %33 : vector<1x9xf32>
    %35 = vector.broadcast %34 : vector<1x9xf32> to vector<9x9xf32>
    %36 = arith.mulf %25, %35 : vector<9x9xf32>
    %cst_21 = arith.constant dense<0.000000e+00> : vector<9xf32>
    %37 = vector.multi_reduction <add>, %36, %cst_21 [1] : vector<9x9xf32> to vector<9xf32>
    %38 = vector.shape_cast %37 : vector<9xf32> to vector<9x1xf32>
    %39 = arith.divf %6, %38 : vector<9x1xf32>
    %40 = math.absf %39 : vector<9x1xf32>
    %cst_22 = arith.constant dense<0xFF800000> : vector<1xf32>
    %41 = vector.multi_reduction <maximumf>, %40, %cst_22 [0] : vector<9x1xf32> to vector<1xf32>
    %42 = vector.shape_cast %41 : vector<1xf32> to vector<1x1xf32>
    %43 = math.absf %34 : vector<1x9xf32>
    %cst_23 = arith.constant dense<0xFF800000> : vector<1xf32>
    %44 = vector.multi_reduction <maximumf>, %43, %cst_23 [1] : vector<1x9xf32> to vector<1xf32>
    %45 = vector.shape_cast %44 : vector<1xf32> to vector<1x1xf32>
    %cst_24 = arith.constant 1.000000e+03 : f32
    %46 = vector.broadcast %cst_24 : f32 to vector<1x1xf32>
    %47 = arith.cmpf ogt, %42, %46 : vector<1x1xf32>
    %cst_25 = arith.constant 1.000000e+03 : f32
    %48 = vector.broadcast %cst_25 : f32 to vector<1x1xf32>
    %49 = arith.cmpf ogt, %45, %48 : vector<1x1xf32>
    %50 = arith.ori %47, %49 : vector<1x1xi1>
    %51 = math.log %39 : vector<9x1xf32>
    %cst_26 = arith.constant 1.000000e-03 : f32
    %52 = vector.broadcast %cst_26 : f32 to vector<9x1xf32>
    %53 = arith.mulf %52, %51 : vector<9x1xf32>
    %54 = arith.addf %15, %53 : vector<9x1xf32>
    %55 = vector.shape_cast %50 : vector<1x1xi1> to vector<1x1xi1>
    %56 = vector.broadcast %55 : vector<1x1xi1> to vector<9x1xi1>
    %57 = arith.select %56, %54, %15 : vector<9x1xi1>, vector<9x1xf32>
    %58 = math.log %34 : vector<1x9xf32>
    %cst_27 = arith.constant 1.000000e-03 : f32
    %59 = vector.broadcast %cst_27 : f32 to vector<1x9xf32>
    %60 = arith.mulf %59, %58 : vector<1x9xf32>
    %61 = arith.addf %16, %60 : vector<1x9xf32>
    %62 = vector.shape_cast %50 : vector<1x1xi1> to vector<1x1xi1>
    %63 = vector.broadcast %62 : vector<1x1xi1> to vector<1x9xi1>
    %64 = arith.select %63, %61, %16 : vector<1x9xi1>, vector<1x9xf32>
    %cst_28 = arith.constant 0.111111112 : f32
    %65 = vector.broadcast %cst_28 : f32 to vector<9x1xf32>
    %66 = vector.shape_cast %50 : vector<1x1xi1> to vector<1x1xi1>
    %67 = vector.broadcast %66 : vector<1x1xi1> to vector<9x1xi1>
    %68 = arith.select %67, %65, %39 : vector<9x1xi1>, vector<9x1xf32>
    %cst_29 = arith.constant 0.111111112 : f32
    %69 = vector.broadcast %cst_29 : f32 to vector<1x9xf32>
    %70 = vector.shape_cast %50 : vector<1x1xi1> to vector<1x1xi1>
    %71 = vector.broadcast %70 : vector<1x1xi1> to vector<1x9xi1>
    %72 = arith.select %71, %69, %34 : vector<1x9xi1>, vector<1x9xf32>
    %73 = vector.broadcast %57 : vector<9x1xf32> to vector<9x9xf32>
    %74 = arith.subf %0, %73 : vector<9x9xf32>
    %75 = vector.broadcast %64 : vector<1x9xf32> to vector<9x9xf32>
    %76 = arith.subf %74, %75 : vector<9x9xf32>
    %cst_30 = arith.constant 0.000000e+00 : f32
    %77 = vector.broadcast %cst_30 : f32 to vector<9x9xf32>
    %78 = arith.subf %77, %76 : vector<9x9xf32>
    %cst_31 = arith.constant 1.000000e+03 : f32
    %79 = vector.broadcast %cst_31 : f32 to vector<9x9xf32>
    %80 = arith.mulf %78, %79 : vector<9x9xf32>
    %81 = math.exp %80 : vector<9x9xf32>
    %82 = vector.shape_cast %50 : vector<1x1xi1> to vector<1x1xi1>
    %83 = vector.broadcast %82 : vector<1x1xi1> to vector<9x9xi1>
    %84 = arith.select %83, %81, %25 : vector<9x9xi1>, vector<9x9xf32>
    %85 = vector.broadcast %57 : vector<9x1xf32> to vector<9x9xf32>
    %86 = arith.subf %0, %85 : vector<9x9xf32>
    %87 = vector.broadcast %64 : vector<1x9xf32> to vector<9x9xf32>
    %88 = arith.subf %86, %87 : vector<9x9xf32>
    %cst_32 = arith.constant 0.000000e+00 : f32
    %89 = vector.broadcast %cst_32 : f32 to vector<9x9xf32>
    %90 = arith.subf %89, %88 : vector<9x9xf32>
    %cst_33 = arith.constant 1.000000e+03 : f32
    %91 = vector.broadcast %cst_33 : f32 to vector<9x9xf32>
    %92 = arith.mulf %90, %91 : vector<9x9xf32>
    %93 = math.log %68 : vector<9x1xf32>
    %94 = vector.broadcast %93 : vector<9x1xf32> to vector<9x9xf32>
    %95 = arith.addf %92, %94 : vector<9x9xf32>
    %96 = math.log %72 : vector<1x9xf32>
    %97 = vector.broadcast %96 : vector<1x9xf32> to vector<9x9xf32>
    %98 = arith.addf %95, %97 : vector<9x9xf32>
    %99 = math.exp %98 : vector<9x9xf32>
    %cst_34 = arith.constant dense<0.000000e+00> : vector<9xf32>
    %100 = vector.multi_reduction <add>, %99, %cst_34 [0] : vector<9x9xf32> to vector<9xf32>
    %101 = vector.shape_cast %100 : vector<9xf32> to vector<1x9xf32>
    %102 = arith.subf %101, %12 : vector<1x9xf32>
    %103 = arith.mulf %102, %102 : vector<1x9xf32>
    %cst_35 = arith.constant dense<0.000000e+00> : vector<1xf32>
    %104 = vector.multi_reduction <add>, %103, %cst_35 [1] : vector<1x9xf32> to vector<1xf32>
    %105 = vector.shape_cast %104 : vector<1xf32> to vector<1x1xf32>
    %106 = math.sqrt %105 : vector<1x1xf32>
    %107 = arith.cmpf one, %68, %68 : vector<9x1xf32>
    %cst_36 = arith.constant 1.000000e+00 : f32
    %cst_37 = arith.constant 0.000000e+00 : f32
    %108 = vector.broadcast %cst_36 : f32 to vector<9x1xf32>
    %109 = vector.broadcast %cst_37 : f32 to vector<9x1xf32>
    %110 = arith.select %107, %108, %109 : vector<9x1xi1>, vector<9x1xf32>
    %cst_38 = arith.constant dense<0xFF800000> : vector<1xf32>
    %111 = vector.multi_reduction <maximumf>, %110, %cst_38 [0] : vector<9x1xf32> to vector<1xf32>
    %112 = vector.shape_cast %111 : vector<1xf32> to vector<1x1xf32>
    %113 = arith.cmpf one, %72, %72 : vector<1x9xf32>
    %cst_39 = arith.constant 1.000000e+00 : f32
    %cst_40 = arith.constant 0.000000e+00 : f32
    %114 = vector.broadcast %cst_39 : f32 to vector<1x9xf32>
    %115 = vector.broadcast %cst_40 : f32 to vector<1x9xf32>
    %116 = arith.select %113, %114, %115 : vector<1x9xi1>, vector<1x9xf32>
    %cst_41 = arith.constant dense<0xFF800000> : vector<1xf32>
    %117 = vector.multi_reduction <maximumf>, %116, %cst_41 [1] : vector<1x9xf32> to vector<1xf32>
    %118 = vector.shape_cast %117 : vector<1xf32> to vector<1x1xf32>
    %119 = arith.addf %112, %118 : vector<1x1xf32>
    %cst_42 = arith.constant 0.000000e+00 : f32
    %120 = vector.broadcast %cst_42 : f32 to vector<1x1xf32>
    %121 = arith.cmpf ogt, %119, %120 : vector<1x1xf32>
    %122 = vector.shape_cast %121 : vector<1x1xi1> to vector<1x1xi1>
    %123 = vector.broadcast %122 : vector<1x1xi1> to vector<9x1xi1>
    %124 = arith.select %123, %13, %68 : vector<9x1xi1>, vector<9x1xf32>
    %125 = vector.shape_cast %121 : vector<1x1xi1> to vector<1x1xi1>
    %126 = vector.broadcast %125 : vector<1x1xi1> to vector<1x9xi1>
    %127 = arith.select %126, %14, %72 : vector<1x9xi1>, vector<1x9xf32>
    %cst_43 = arith.constant 9.99999971E-10 : f32
    %128 = vector.broadcast %cst_43 : f32 to vector<1x1xf32>
    %129 = arith.cmpf ole, %106, %128 : vector<1x1xf32>
    %130 = arith.ori %129, %121 : vector<1x1xi1>
    %cst_44 = arith.constant 1.000000e+00 : f32
    %131 = vector.broadcast %cst_44 : f32 to vector<1x1xf32>
    %132 = arith.select %130, %131, %27 : vector<1x1xi1>, vector<1x1xf32>
    %133 = vector.shape_cast %29 : vector<1x1xi1> to vector<1x1xi1>
    %134 = vector.broadcast %133 : vector<1x1xi1> to vector<9x1xi1>
    %135 = arith.select %134, %13, %124 : vector<9x1xi1>, vector<9x1xf32>
    %136 = vector.shape_cast %29 : vector<1x1xi1> to vector<1x1xi1>
    %137 = vector.broadcast %136 : vector<1x1xi1> to vector<1x9xi1>
    %138 = arith.select %137, %14, %127 : vector<1x9xi1>, vector<1x9xf32>
    %139 = vector.shape_cast %29 : vector<1x1xi1> to vector<1x1xi1>
    %140 = vector.broadcast %139 : vector<1x1xi1> to vector<9x1xi1>
    %141 = arith.select %140, %15, %57 : vector<9x1xi1>, vector<9x1xf32>
    %142 = vector.shape_cast %29 : vector<1x1xi1> to vector<1x1xi1>
    %143 = vector.broadcast %142 : vector<1x1xi1> to vector<1x9xi1>
    %144 = arith.select %143, %16, %64 : vector<1x9xi1>, vector<1x9xf32>
    %145 = vector.shape_cast %29 : vector<1x1xi1> to vector<1x1xi1>
    %146 = vector.broadcast %145 : vector<1x1xi1> to vector<9x9xi1>
    %147 = arith.select %146, %25, %84 : vector<9x9xi1>, vector<9x9xf32>
    %148 = arith.select %29, %26, %106 : vector<1x1xi1>, vector<1x1xf32>
    %c0_i32 = arith.constant 0 : i32
    %c19_i32 = arith.constant 19 : i32
    %149 = arith.addi %c0_i32, %c19_i32 : i32
    %c1_i32 = arith.constant 1 : i32
    %150:7 = scf.for %arg15 = %c0_i32 to %149 step %c1_i32 iter_args(%arg16 = %135, %arg17 = %138, %arg18 = %141, %arg19 = %144, %arg20 = %147, %arg21 = %148, %arg22 = %132) -> (vector<9x1xf32>, vector<1x9xf32>, vector<9x1xf32>, vector<1x9xf32>, vector<9x9xf32>, vector<1x1xf32>, vector<1x1xf32>)  : i32 {
      %cst_61 = arith.constant 0.000000e+00 : f32
      %173 = vector.broadcast %cst_61 : f32 to vector<1x1xf32>
      %174 = arith.cmpf ogt, %arg22, %173 : vector<1x1xf32>
      %175 = vector.broadcast %arg16 : vector<9x1xf32> to vector<9x9xf32>
      %176 = arith.mulf %arg20, %175 : vector<9x9xf32>
      %cst_62 = arith.constant dense<0.000000e+00> : vector<9xf32>
      %177 = vector.multi_reduction <add>, %176, %cst_62 [0] : vector<9x9xf32> to vector<9xf32>
      %178 = vector.shape_cast %177 : vector<9xf32> to vector<1x9xf32>
      %179 = arith.divf %12, %178 : vector<1x9xf32>
      %180 = vector.broadcast %179 : vector<1x9xf32> to vector<9x9xf32>
      %181 = arith.mulf %arg20, %180 : vector<9x9xf32>
      %cst_63 = arith.constant dense<0.000000e+00> : vector<9xf32>
      %182 = vector.multi_reduction <add>, %181, %cst_63 [1] : vector<9x9xf32> to vector<9xf32>
      %183 = vector.shape_cast %182 : vector<9xf32> to vector<9x1xf32>
      %184 = arith.divf %6, %183 : vector<9x1xf32>
      %185 = math.absf %184 : vector<9x1xf32>
      %cst_64 = arith.constant dense<0xFF800000> : vector<1xf32>
      %186 = vector.multi_reduction <maximumf>, %185, %cst_64 [0] : vector<9x1xf32> to vector<1xf32>
      %187 = vector.shape_cast %186 : vector<1xf32> to vector<1x1xf32>
      %188 = math.absf %179 : vector<1x9xf32>
      %cst_65 = arith.constant dense<0xFF800000> : vector<1xf32>
      %189 = vector.multi_reduction <maximumf>, %188, %cst_65 [1] : vector<1x9xf32> to vector<1xf32>
      %190 = vector.shape_cast %189 : vector<1xf32> to vector<1x1xf32>
      %cst_66 = arith.constant 1.000000e+03 : f32
      %191 = vector.broadcast %cst_66 : f32 to vector<1x1xf32>
      %192 = arith.cmpf ogt, %187, %191 : vector<1x1xf32>
      %cst_67 = arith.constant 1.000000e+03 : f32
      %193 = vector.broadcast %cst_67 : f32 to vector<1x1xf32>
      %194 = arith.cmpf ogt, %190, %193 : vector<1x1xf32>
      %195 = arith.ori %192, %194 : vector<1x1xi1>
      %196 = math.log %184 : vector<9x1xf32>
      %cst_68 = arith.constant 1.000000e-03 : f32
      %197 = vector.broadcast %cst_68 : f32 to vector<9x1xf32>
      %198 = arith.mulf %197, %196 : vector<9x1xf32>
      %199 = arith.addf %arg18, %198 : vector<9x1xf32>
      %200 = vector.shape_cast %195 : vector<1x1xi1> to vector<1x1xi1>
      %201 = vector.broadcast %200 : vector<1x1xi1> to vector<9x1xi1>
      %202 = arith.select %201, %199, %arg18 : vector<9x1xi1>, vector<9x1xf32>
      %203 = math.log %179 : vector<1x9xf32>
      %cst_69 = arith.constant 1.000000e-03 : f32
      %204 = vector.broadcast %cst_69 : f32 to vector<1x9xf32>
      %205 = arith.mulf %204, %203 : vector<1x9xf32>
      %206 = arith.addf %arg19, %205 : vector<1x9xf32>
      %207 = vector.shape_cast %195 : vector<1x1xi1> to vector<1x1xi1>
      %208 = vector.broadcast %207 : vector<1x1xi1> to vector<1x9xi1>
      %209 = arith.select %208, %206, %arg19 : vector<1x9xi1>, vector<1x9xf32>
      %cst_70 = arith.constant 0.111111112 : f32
      %210 = vector.broadcast %cst_70 : f32 to vector<9x1xf32>
      %211 = vector.shape_cast %195 : vector<1x1xi1> to vector<1x1xi1>
      %212 = vector.broadcast %211 : vector<1x1xi1> to vector<9x1xi1>
      %213 = arith.select %212, %210, %184 : vector<9x1xi1>, vector<9x1xf32>
      %cst_71 = arith.constant 0.111111112 : f32
      %214 = vector.broadcast %cst_71 : f32 to vector<1x9xf32>
      %215 = vector.shape_cast %195 : vector<1x1xi1> to vector<1x1xi1>
      %216 = vector.broadcast %215 : vector<1x1xi1> to vector<1x9xi1>
      %217 = arith.select %216, %214, %179 : vector<1x9xi1>, vector<1x9xf32>
      %218 = vector.broadcast %202 : vector<9x1xf32> to vector<9x9xf32>
      %219 = arith.subf %0, %218 : vector<9x9xf32>
      %220 = vector.broadcast %209 : vector<1x9xf32> to vector<9x9xf32>
      %221 = arith.subf %219, %220 : vector<9x9xf32>
      %cst_72 = arith.constant 0.000000e+00 : f32
      %222 = vector.broadcast %cst_72 : f32 to vector<9x9xf32>
      %223 = arith.subf %222, %221 : vector<9x9xf32>
      %cst_73 = arith.constant 1.000000e+03 : f32
      %224 = vector.broadcast %cst_73 : f32 to vector<9x9xf32>
      %225 = arith.mulf %223, %224 : vector<9x9xf32>
      %226 = math.exp %225 : vector<9x9xf32>
      %227 = vector.shape_cast %195 : vector<1x1xi1> to vector<1x1xi1>
      %228 = vector.broadcast %227 : vector<1x1xi1> to vector<9x9xi1>
      %229 = arith.select %228, %226, %arg20 : vector<9x9xi1>, vector<9x9xf32>
      %230 = arith.cmpf one, %213, %213 : vector<9x1xf32>
      %cst_74 = arith.constant 1.000000e+00 : f32
      %cst_75 = arith.constant 0.000000e+00 : f32
      %231 = vector.broadcast %cst_74 : f32 to vector<9x1xf32>
      %232 = vector.broadcast %cst_75 : f32 to vector<9x1xf32>
      %233 = arith.select %230, %231, %232 : vector<9x1xi1>, vector<9x1xf32>
      %cst_76 = arith.constant dense<0xFF800000> : vector<1xf32>
      %234 = vector.multi_reduction <maximumf>, %233, %cst_76 [0] : vector<9x1xf32> to vector<1xf32>
      %235 = vector.shape_cast %234 : vector<1xf32> to vector<1x1xf32>
      %236 = arith.cmpf one, %217, %217 : vector<1x9xf32>
      %cst_77 = arith.constant 1.000000e+00 : f32
      %cst_78 = arith.constant 0.000000e+00 : f32
      %237 = vector.broadcast %cst_77 : f32 to vector<1x9xf32>
      %238 = vector.broadcast %cst_78 : f32 to vector<1x9xf32>
      %239 = arith.select %236, %237, %238 : vector<1x9xi1>, vector<1x9xf32>
      %cst_79 = arith.constant dense<0xFF800000> : vector<1xf32>
      %240 = vector.multi_reduction <maximumf>, %239, %cst_79 [1] : vector<1x9xf32> to vector<1xf32>
      %241 = vector.shape_cast %240 : vector<1xf32> to vector<1x1xf32>
      %242 = arith.addf %235, %241 : vector<1x1xf32>
      %cst_80 = arith.constant 0.000000e+00 : f32
      %243 = vector.broadcast %cst_80 : f32 to vector<1x1xf32>
      %244 = arith.cmpf ogt, %242, %243 : vector<1x1xf32>
      %245 = vector.shape_cast %244 : vector<1x1xi1> to vector<1x1xi1>
      %246 = vector.broadcast %245 : vector<1x1xi1> to vector<9x1xi1>
      %247 = arith.select %246, %arg16, %213 : vector<9x1xi1>, vector<9x1xf32>
      %248 = vector.shape_cast %244 : vector<1x1xi1> to vector<1x1xi1>
      %249 = vector.broadcast %248 : vector<1x1xi1> to vector<1x9xi1>
      %250 = arith.select %249, %arg17, %217 : vector<1x9xi1>, vector<1x9xf32>
      %cst_81 = arith.constant 9.99999971E-10 : f32
      %251 = vector.broadcast %cst_81 : f32 to vector<1x1xf32>
      %252 = arith.cmpf ole, %arg21, %251 : vector<1x1xf32>
      %253 = arith.ori %252, %244 : vector<1x1xi1>
      %cst_82 = arith.constant 1.000000e+00 : f32
      %254 = vector.broadcast %cst_82 : f32 to vector<1x1xf32>
      %255 = arith.select %253, %254, %arg22 : vector<1x1xi1>, vector<1x1xf32>
      %256 = vector.shape_cast %174 : vector<1x1xi1> to vector<1x1xi1>
      %257 = vector.broadcast %256 : vector<1x1xi1> to vector<9x1xi1>
      %258 = arith.select %257, %arg16, %247 : vector<9x1xi1>, vector<9x1xf32>
      %259 = vector.shape_cast %174 : vector<1x1xi1> to vector<1x1xi1>
      %260 = vector.broadcast %259 : vector<1x1xi1> to vector<1x9xi1>
      %261 = arith.select %260, %arg17, %250 : vector<1x9xi1>, vector<1x9xf32>
      %262 = vector.shape_cast %174 : vector<1x1xi1> to vector<1x1xi1>
      %263 = vector.broadcast %262 : vector<1x1xi1> to vector<9x1xi1>
      %264 = arith.select %263, %arg18, %202 : vector<9x1xi1>, vector<9x1xf32>
      %265 = vector.shape_cast %174 : vector<1x1xi1> to vector<1x1xi1>
      %266 = vector.broadcast %265 : vector<1x1xi1> to vector<1x9xi1>
      %267 = arith.select %266, %arg19, %209 : vector<1x9xi1>, vector<1x9xf32>
      %268 = vector.shape_cast %174 : vector<1x1xi1> to vector<1x1xi1>
      %269 = vector.broadcast %268 : vector<1x1xi1> to vector<9x9xi1>
      %270 = arith.select %269, %arg20, %229 : vector<9x9xi1>, vector<9x9xf32>
      %271 = arith.select %174, %arg21, %arg21 : vector<1x1xi1>, vector<1x1xf32>
      scf.yield %258, %261, %264, %267, %270, %271, %255 : vector<9x1xf32>, vector<1x9xf32>, vector<9x1xf32>, vector<1x9xf32>, vector<9x9xf32>, vector<1x1xf32>, vector<1x1xf32>
    }
    %c0_45 = arith.constant 0 : index
    %c0_46 = arith.constant 0 : index
    %151 = vector.load %arg8[%c0_45, %c0_46] : memref<9x1xf32, #tpu.memory_space<vmem>>, vector<9x1xf32>
    tpu.vector_store %arg8[%c0_45, %c0_46], %150#0 {strides = array<i32>} : memref<9x1xf32, #tpu.memory_space<vmem>>, vector<9x1xf32>,
    %c0_47 = arith.constant 0 : index
    %c0_48 = arith.constant 0 : index
    %152 = vector.load %arg9[%c0_47, %c0_48] : memref<1x9xf32, #tpu.memory_space<vmem>>, vector<1x9xf32>
    tpu.vector_store %arg9[%c0_47, %c0_48], %150#1 {strides = array<i32>} : memref<1x9xf32, #tpu.memory_space<vmem>>, vector<1x9xf32>,
    %c0_49 = arith.constant 0 : index
    %c0_50 = arith.constant 0 : index
    %153 = vector.load %arg10[%c0_49, %c0_50] : memref<9x1xf32, #tpu.memory_space<vmem>>, vector<9x1xf32>
    tpu.vector_store %arg10[%c0_49, %c0_50], %150#2 {strides = array<i32>} : memref<9x1xf32, #tpu.memory_space<vmem>>, vector<9x1xf32>,
    %c0_51 = arith.constant 0 : index
    %c0_52 = arith.constant 0 : index
    %154 = vector.load %arg11[%c0_51, %c0_52] : memref<1x9xf32, #tpu.memory_space<vmem>>, vector<1x9xf32>
    tpu.vector_store %arg11[%c0_51, %c0_52], %150#3 {strides = array<i32>} : memref<1x9xf32, #tpu.memory_space<vmem>>, vector<1x9xf32>,
    %c0_53 = arith.constant 0 : index
    %c0_54 = arith.constant 0 : index
    %155 = vector.load %arg12[%c0_53, %c0_54] : memref<1x1xf32, #tpu.memory_space<vmem>>, vector<1x1xf32>
    tpu.vector_store %arg12[%c0_53, %c0_54], %150#5 {strides = array<i32>} : memref<1x1xf32, #tpu.memory_space<vmem>>, vector<1x1xf32>,
    %c0_55 = arith.constant 0 : index
    %c0_56 = arith.constant 0 : index
    %156 = vector.load %arg13[%c0_55, %c0_56] : memref<1x1xf32, #tpu.memory_space<vmem>>, vector<1x1xf32>
    tpu.vector_store %arg13[%c0_55, %c0_56], %150#6 {strides = array<i32>} : memref<1x1xf32, #tpu.memory_space<vmem>>, vector<1x1xf32>,
    %157 = vector.broadcast %150#2 : vector<9x1xf32> to vector<9x9xf32>
    %158 = arith.subf %0, %157 : vector<9x9xf32>
    %159 = vector.broadcast %150#3 : vector<1x9xf32> to vector<9x9xf32>
    %160 = arith.subf %158, %159 : vector<9x9xf32>
    %cst_57 = arith.constant 0.000000e+00 : f32
    %161 = vector.broadcast %cst_57 : f32 to vector<9x9xf32>
    %162 = arith.subf %161, %160 : vector<9x9xf32>
    %cst_58 = arith.constant 1.000000e+03 : f32
    %163 = vector.broadcast %cst_58 : f32 to vector<9x9xf32>
    %164 = arith.mulf %162, %163 : vector<9x9xf32>
    %165 = math.log %150#0 : vector<9x1xf32>
    %166 = vector.broadcast %165 : vector<9x1xf32> to vector<9x9xf32>
    %167 = arith.addf %164, %166 : vector<9x9xf32>
    %168 = math.log %150#1 : vector<1x9xf32>
    %169 = vector.broadcast %168 : vector<1x9xf32> to vector<9x9xf32>
    %170 = arith.addf %167, %169 : vector<9x9xf32>
    %171 = math.exp %170 : vector<9x9xf32>
    %c0_59 = arith.constant 0 : index
    %c0_60 = arith.constant 0 : index
    %172 = vector.load %arg14[%c0_59, %c0_60] : memref<9x9xf32, #tpu.memory_space<vmem>>, vector<9x9xf32>
    tpu.vector_store %arg14[%c0_59, %c0_60], %171 {strides = array<i32>} : memref<9x9xf32, #tpu.memory_space<vmem>>, vector<9x9xf32>,
    return
  }
  func.func @transform_0(%arg0: i32) -> (i32, i32) {
    %c0_i32 = arith.constant 0 : i32
    %c0_i32_0 = arith.constant 0 : i32
    %c0_i32_1 = arith.constant 0 : i32
    return %c0_i32, %c0_i32_0 : i32, i32
  }
  func.func @transform_1(%arg0: i32) -> (i32, i32) {
    %c0_i32 = arith.constant 0 : i32
    %c0_i32_0 = arith.constant 0 : i32
    %c0_i32_1 = arith.constant 0 : i32
    return %c0_i32, %c0_i32_0 : i32, i32
  }
  func.func @transform_2(%arg0: i32) -> (i32, i32) {
    %c0_i32 = arith.constant 0 : i32
    %c0_i32_0 = arith.constant 0 : i32
    %c0_i32_1 = arith.constant 0 : i32
    return %c0_i32, %c0_i32_0 : i32, i32
  }
  func.func @transform_3(%arg0: i32) -> (i32, i32) {
    %c0_i32 = arith.constant 0 : i32
    %c0_i32_0 = arith.constant 0 : i32
    %c0_i32_1 = arith.constant 0 : i32
    return %c0_i32, %c0_i32_0 : i32, i32
  }
  func.func @transform_4(%arg0: i32) -> (i32, i32) {
    %c0_i32 = arith.constant 0 : i32
    %c0_i32_0 = arith.constant 0 : i32
    %c0_i32_1 = arith.constant 0 : i32
    return %c0_i32, %c0_i32_0 : i32, i32
  }
  func.func @transform_5(%arg0: i32) -> (i32, i32) {
    %c0_i32 = arith.constant 0 : i32
    %c0_i32_0 = arith.constant 0 : i32
    %c0_i32_1 = arith.constant 0 : i32
    return %c0_i32, %c0_i32_0 : i32, i32
  }
  func.func @transform_6(%arg0: i32) -> (i32, i32) {
    %c0_i32 = arith.constant 0 : i32
    %c0_i32_0 = arith.constant 0 : i32
    %c0_i32_1 = arith.constant 0 : i32
    return %c0_i32, %c0_i32_0 : i32, i32
  }
  func.func @transform_7(%arg0: i32) -> (i32, i32) {
    %c0_i32 = arith.constant 0 : i32
    %c0_i32_0 = arith.constant 0 : i32
    %c0_i32_1 = arith.constant 0 : i32
    return %c0_i32, %c0_i32_0 : i32, i32
  }
  func.func @transform_8(%arg0: i32) -> (i32, i32) {
    %c0_i32 = arith.constant 0 : i32
    %c0_i32_0 = arith.constant 0 : i32
    %c0_i32_1 = arith.constant 0 : i32
    return %c0_i32, %c0_i32_0 : i32, i32
  }
  func.func @transform_9(%arg0: i32) -> (i32, i32) {
    %c0_i32 = arith.constant 0 : i32
    %c0_i32_0 = arith.constant 0 : i32
    %c0_i32_1 = arith.constant 0 : i32
    return %c0_i32, %c0_i32_0 : i32, i32
  }
  func.func @transform_10(%arg0: i32) -> (i32, i32) {
    %c0_i32 = arith.constant 0 : i32
    %c0_i32_0 = arith.constant 0 : i32
    %c0_i32_1 = arith.constant 0 : i32
    return %c0_i32, %c0_i32_0 : i32, i32
  }
  func.func @transform_11(%arg0: i32) -> (i32, i32) {
    %c0_i32 = arith.constant 0 : i32
    %c0_i32_0 = arith.constant 0 : i32
    %c0_i32_1 = arith.constant 0 : i32
    return %c0_i32, %c0_i32_0 : i32, i32
  }
  func.func @transform_12(%arg0: i32) -> (i32, i32) {
    %c0_i32 = arith.constant 0 : i32
    %c0_i32_0 = arith.constant 0 : i32
    %c0_i32_1 = arith.constant 0 : i32
    return %c0_i32, %c0_i32_0 : i32, i32
  }
  func.func @transform_13(%arg0: i32) -> (i32, i32) {
    %c0_i32 = arith.constant 0 : i32
    %c0_i32_0 = arith.constant 0 : i32
    %c0_i32_1 = arith.constant 0 : i32
    return %c0_i32, %c0_i32_0 : i32, i32
  }
}

</mosaic_0001>

<llo_original>
// kernel: body.3
$region0: #{body.3}
  #allocation0 [shape = 'u32[]', space=smem, size = 0x4, offset = 0x4, fixed_abs, tag = 'smem constant byte address 0x4 - core index']
  #allocation1 [shape = 'u32[144,128]{1,0:T(1,128)}', space=vmem, size = 0x12000, scoped, tag = 'internal scratch']
  #allocation2 [shape = 'f32[1,1]{1,0:T(1,128)S(1)}', space=vmem, size = 0x200, scoped, tag = 'scoped memory for body.3']
  #allocation3 [shape = 'f32[1,1]{1,0:T(1,128)S(1)}', space=vmem, size = 0x200, scoped, tag = 'scoped memory for body.3']
  %s0 = inlined_call_operand.vmem [shape: f32[9,9], index: 0, kind: input, shape index: {}]
  %s1 = inlined_call_operand.vmem [shape: f32[9,1], index: 1, kind: input, shape index: {}]
  %s2 = inlined_call_operand.vmem [shape: f32[1,9], index: 2, kind: input, shape index: {}]
  %s3 = inlined_call_operand.vmem [shape: f32[9,1], index: 3, kind: input, shape index: {}]
  %s4 = inlined_call_operand.vmem [shape: f32[1,9], index: 4, kind: input, shape index: {}]
  %s5 = inlined_call_operand.<no memory space> [shape: f32[1,1], index: 5, kind: input, shape index: {}]
  %s6 = inlined_call_operand.<no memory space> [shape: f32[1,1], index: 6, kind: input, shape index: {}]
  %s7 = inlined_call_operand.vmem [shape: f32[9,1], index: 7, kind: output, shape index: {0}]
  %s8 = inlined_call_operand.vmem [shape: f32[1,9], index: 8, kind: output, shape index: {1}]
  %s9 = inlined_call_operand.vmem [shape: f32[9,1], index: 9, kind: output, shape index: {2}]
  %s10 = inlined_call_operand.vmem [shape: f32[1,9], index: 10, kind: output, shape index: {3}]
  %s11 = inlined_call_operand.hbm [shape: f32[1,1], index: 11, kind: output, shape index: {4}]
  %s12 = inlined_call_operand.hbm [shape: f32[1,1], index: 12, kind: output, shape index: {5}]
  %s13 = inlined_call_operand.hbm [shape: f32[9,9], index: 13, kind: output, shape index: {6}]
  %14 = xla_tuple %s7, %s8, %s9, %s10, %s11, %s12, %s13
  %s15 = sld [smem:[#allocation0]]
  $region93: #{body.3} parent=0
    _
  %s17 = ssub.s32 1, %s15
  %s18 = scalar_select 0, %s17, %s15
  %v19 = vstv %s5
  %20 = vst [vmem:[#allocation2] sm:$0x1] %v19
  %v21 = vstv %s6
  %22 = vst [vmem:[#allocation3] sm:$0x1] %v21
  $region1: #{body.3} parent=0
    #allocation4 [shape = 'u8[512]{0}', space=vmem, size = 0x400, scoped, tag = 'output window, operand 4, single buffered']
    #allocation5 [shape = 's32[1]{0}', space=sflag, size = 0x4, scoped, tag = 'scoped memory for body.3']
    #allocation6 [shape = 'u8[512]{0}', space=vmem, size = 0x400, scoped, tag = 'output window, operand 5, single buffered']
    #allocation7 [shape = 's32[1]{0}', space=sflag, size = 0x4, scoped, tag = 'scoped memory for body.3']
    #allocation8 [shape = 'u8[8192]{0}', space=vmem, size = 0x2000, scoped, tag = 'output window, operand 6, single buffered']
    %23 = vsyncpa [#allocation5], 0
    %24 = vsyncpa [#allocation7], 0
    // Predicated region
    $region2: #{body.3} parent=1 // pred_check
      _
    $region3: #{body.3} parent=1 // pred_check_branch
      %26 = sbr.rel (0) target = $region5
    $region4: #{body.3} parent=1 // pred_region
      _
    $region5: #{body.3} parent=1 // pred_fallthru
      _
    // Predicated region
    $region6: #{body.3} parent=1 // pred_check
      _
    $region7: #{body.3} parent=1 // pred_check_branch
      %28 = sbr.rel (0) target = $region9
    $region8: #{body.3} parent=1 // pred_region
      _
    $region9: #{body.3} parent=1 // pred_fallthru
      _
    // Predicated region
    $region10: #{body.3} parent=1 // pred_check
      _
    $region11: #{body.3} parent=1 // pred_check_branch
      %30 = sbr.rel (0) target = $region13
    $region12: #{body.3} parent=1 // pred_region
      _
    $region13: #{body.3} parent=1 // pred_fallthru
      _
    // Predicated region
    $region14: #{body.3} parent=1 // pred_check
      _
    $region15: #{body.3} parent=1 // pred_check_branch
      %32 = sbr.rel (0) target = $region17
    $region16: #{body.3} parent=1 // pred_region
      _
    $region17: #{body.3} parent=1 // pred_fallthru
      _
    // Predicated region
    $region18: #{body.3} parent=1 // pred_check
      _
    $region19: #{body.3} parent=1 // pred_check_branch
      %34 = sbr.rel (0) target = $region21
    $region20: #{body.3} parent=1 // pred_region
      _
    $region21: #{body.3} parent=1 // pred_fallthru
      _
    // Predicated region
    $region22: #{body.3} parent=1 // pred_check
      _
    $region23: #{body.3} parent=1 // pred_check_branch
      %36 = sbr.rel (0) target = $region25
    $region24: #{body.3} parent=1 // pred_region
      _
    $region25: #{body.3} parent=1 // pred_fallthru
      _
    // Predicated region
    $region26: #{body.3} parent=1 // pred_check
      _
    $region27: #{body.3} parent=1 // pred_check_branch
      %38 = sbr.rel (0) target = $region29
    $region28: #{body.3} parent=1 // pred_region
      _
    $region29: #{body.3} parent=1 // pred_fallthru
      _
    %v39 = vld [vmem:[%s0] sm:$0xff]
    %v40 = vld [vmem:[%s0 + $0x8] sm:$0x1]
    %v41 = vlaneseq
    %v42 = vshrl.u32 %v41, 7
    %v43 = vadd.s32 %v42, 8
    %vm44 = vcmp.eq.s32.totalorder %v42, 8
    %vm45 = vcmp.eq.s32.totalorder %v43, 8
    %v46 = vsel %vm44, 8.0, 1.0
    %v47 = vsel %vm45, 8.0, 1.0
    %v48 = vlaneseq
    %v49 = vand.u32 %v48, 127
    %vm50 = vcmp.eq.s32.totalorder %v49, 8
    %v51 = vsel %vm50, 8.0, 1.0
    %v52 = vld [vmem:[%s1] sm:$0xff]
    %v53 = vld [vmem:[%s1 + $0x8] sm:$0x1]
    %v54 = vld [vmem:[%s2] sm:$0x1]
    %v55 = vld [vmem:[%s3] sm:$0xff]
    %v56 = vld [vmem:[%s3 + $0x8] sm:$0x1]
    %v57 = vld [vmem:[%s4] sm:$0x1]
    %59 = vset.pattern.permute.xlu0 0
    %60 = vperm.xlu0 %59, %v55
    %v61 = vpop.permute.xlu0 %60
    %64 = vset.pattern.permute.xlu0 0
    %65 = vperm.xlu0 %64, %v56
    %v66 = vpop.permute.xlu0 %65
    %v68 = vsub.f32 %v39, %v61
    %v69 = vsub.f32 %v40, %v66
    %v71 = vlaneseq
    %v72 = vshrl.u32 %v71, 7
    %v73 = vsub.s32 0, %v72
    %v74 = vrot.slane %v57, %v73
    %v76 = vsub.f32 %v68, %v74
    %v77 = vsub.f32 %v69, %v74
    %v78 = vsub.f32 0.0, %v76
    %v79 = vsub.f32 0.0, %v77
    %v80 = vmul.f32 %v78, 1000.0
    %v81 = vmul.f32 %v79, 1000.0
    %v82 = vmul.f32 %v80, 1.442695
    %v83 = vpow.pop %v82
    %v84 = vmul.f32 %v81, 1.442695
    %v85 = vpow.pop %v84
    %v86 = vld [vmem:[#allocation2] sm:$0x1]
    %v87 = vld [vmem:[#allocation3] sm:$0x1]
    %vm88 = vcmp.gt.f32.partialorder %v87, 0.0
    %90 = vset.pattern.permute.xlu0 0
    %91 = vperm.xlu0 %90, %v52
    %v92 = vpop.permute.xlu0 %91
    %95 = vset.pattern.permute.xlu0 0
    %96 = vperm.xlu0 %95, %v53
    %v97 = vpop.permute.xlu0 %96
    %v99 = vmul.f32 %v83, %v92
    %v100 = vmul.f32 %v85, %v97
    %vm101 = vcmask 72704
    %v102 = vsel %vm101, %v99, 0.0
    %vm103 = vcmask 65536
    %v104 = vsel %vm103, %v100, 0.0
    %v105 = vadd.f32 %v102, %v104
    %v106 = vrot.slane %v105, 4
    %v107 = vadd.f32 %v105, %v106
    %v108 = vrot.slane %v107, 2
    %v109 = vadd.f32 %v107, %v108
    %v110 = vrot.slane %v109, 1
    %v111 = vadd.f32 %v109, %v110
    %v112 = vrcp.pop %v111
    %v113 = vmul.f32 %v51, %v112
    %v114 = vmul.f32 %v83, %v113
    %v115 = vmul.f32 %v85, %v113
    %v116 = vsel %vm101, %v114, 0.0
    %117 = vadd.xlane.f32.xlu0 %v116
    %v118 = vpop.xlane.xlu0 %117
    %v119 = vsel %vm103, %v115, 0.0
    %120 = vadd.xlane.f32.xlu0 %v119
    %v121 = vpop.xlane.xlu0 %120
    %v122 = vrcp.pop %v118
    %v123 = vmul.f32 %v46, %v122
    %v124 = vrcp.pop %v121
    %v125 = vmul.f32 %v47, %v124
    %v126 = vand.u32 2147483647, %v123
    %v127 = vand.u32 2147483647, %v125
    %vm128 = vcmask 1040384
    %v129 = vsel %vm128, %v127, -inf
    %v130 = vmax.f32 %v126, %v129
    %v131 = vrot.slane %v130, 4
    %v132 = vmax.f32 %v130, %v131
    %v133 = vrot.slane %v132, 2
    %v134 = vmax.f32 %v132, %v133
    %v135 = vrot.slane %v134, 1
    %v136 = vmax.f32 %v134, %v135
    %v137 = vand.u32 2147483647, %v113
    %v138 = vsel %vm101, %v137, -inf
    %139 = vmax.xlane.f32.xlu0 %v138
    %v140 = vpop.xlane.xlu0 %139
    %vm141 = vcmp.gt.f32.partialorder %v136, 1000.0
    %vm142 = vcmp.gt.f32.partialorder %v140, 1000.0
    %vm143 = vmor %vm141, %vm142
    %v144 = vlog2.pop %v123
    %v145 = vmul.f32 %v144, 0.6931472
    %v146 = vlog2.pop %v125
    %v147 = vmul.f32 %v146, 0.6931472
    %v148 = vmul.f32 %v145, 0.001
    %v149 = vmul.f32 %v147, 0.001
    %v150 = vadd.f32 %v55, %v148
    %v151 = vadd.f32 %v56, %v149
    %v152 = vsel %vm143, 1, 0
    %vm153 = vcmp.eq.s32.totalorder %v152, 1
    %v154 = vsel %vm153, %v150, %v55
    %v155 = vsel %vm153, %v151, %v56
    %v156 = vlog2.pop %v113
    %v157 = vmul.f32 %v156, 0.6931472
    %v158 = vmul.f32 %v157, 0.001
    %v159 = vadd.f32 %v57, %v158
    %v160 = vsel %vm153, %v159, %v57
    %v161 = vsel %vm153, 0.11111111, %v123
    %v162 = vsel %vm153, 0.11111111, %v125
    %v163 = vsel %vm153, 0.11111111, %v113
    %165 = vset.pattern.permute.xlu0 0
    %166 = vperm.xlu0 %165, %v154
    %v167 = vpop.permute.xlu0 %166
    %170 = vset.pattern.permute.xlu0 0
    %171 = vperm.xlu0 %170, %v155
    %v172 = vpop.permute.xlu0 %171
    %v174 = vsub.f32 %v39, %v167
    %v175 = vsub.f32 %v40, %v172
    %v177 = vlaneseq
    %v178 = vshrl.u32 %v177, 7
    %v179 = vsub.s32 0, %v178
    %v180 = vrot.slane %v160, %v179
    %v182 = vsub.f32 %v174, %v180
    %v183 = vsub.f32 %v175, %v180
    %v184 = vsub.f32 0.0, %v182
    %v185 = vsub.f32 0.0, %v183
    %v186 = vmul.f32 %v184, 1000.0
    %v187 = vmul.f32 %v185, 1000.0
    %v188 = vmul.f32 %v186, 1.442695
    %v189 = vpow.pop %v188
    %v190 = vmul.f32 %v187, 1.442695
    %v191 = vpow.pop %v190
    %v192 = vsel %vm153, %v189, %v83
    %v193 = vsel %vm153, %v191, %v85
    %v194 = vlog2.pop %v161
    %v195 = vmul.f32 %v194, 0.6931472
    %v196 = vlog2.pop %v162
    %v197 = vmul.f32 %v196, 0.6931472
    %v198 = vadd.f32 %v186, %v195
    %v199 = vadd.f32 %v187, %v197
    %v200 = vlog2.pop %v163
    %v201 = vmul.f32 %v200, 0.6931472
    %v202 = vadd.f32 %v198, %v201
    %v203 = vadd.f32 %v199, %v201
    %v204 = vmul.f32 %v202, 1.442695
    %v205 = vpow.pop %v204
    %v206 = vmul.f32 %v203, 1.442695
    %v207 = vpow.pop %v206
    %v208 = vsel %vm101, %v205, 0.0
    %v209 = vsel %vm103, %v207, 0.0
    %v210 = vadd.f32 %v208, %v209
    %v211 = vrot.slane %v210, 4
    %v212 = vadd.f32 %v210, %v211
    %v213 = vrot.slane %v212, 2
    %v214 = vadd.f32 %v212, %v213
    %v215 = vrot.slane %v214, 1
    %v216 = vadd.f32 %v214, %v215
    %v217 = vsub.f32 %v216, %v51
    %v218 = vmul.f32 %v217, %v217
    %v219 = vsel %vm101, %v218, 0.0
    %220 = vadd.xlane.f32.xlu0 %v219
    %v221 = vpop.xlane.xlu0 %220
    %v222 = vrsqrt.pop %v221
    %v223 = vmul.f32 %v221, %v222
    %vm224 = vcmp.eq.f32.partialorder %v221, inf
    %v225 = vsel %vm224, %v221, %v223
    %vm226 = vcmp.eq.f32.partialorder %v221, 0.0
    %v227 = vand.u32 %v221, 2147483648
    %v228 = vsel %vm226, %v227, %v225
    %vm229 = vcmp.ne.f32.partialorder %v161, %v161
    %vm230 = vcmp.ne.f32.partialorder %v162, %v162
    %v231 = vsel %vm229, 1.0, 0.0
    %v232 = vsel %vm230, 1.0, 0.0
    %v233 = vsel %vm128, %v232, -inf
    %v234 = vmax.f32 %v231, %v233
    %v235 = vrot.slane %v234, 4
    %v236 = vmax.f32 %v234, %v235
    %v237 = vrot.slane %v236, 2
    %v238 = vmax.f32 %v236, %v237
    %v239 = vrot.slane %v238, 1
    %v240 = vmax.f32 %v238, %v239
    %vm241 = vcmp.ne.f32.partialorder %v163, %v163
    %v242 = vsel %vm241, 1.0, 0.0
    %v243 = vsel %vm101, %v242, -inf
    %244 = vmax.xlane.f32.xlu0 %v243
    %v245 = vpop.xlane.xlu0 %244
    %v246 = vadd.f32 %v240, %v245
    %vm247 = vcmp.gt.f32.partialorder %v246, 0.0
    %v248 = vsel %vm247, 1, 0
    %vm249 = vcmp.eq.s32.totalorder %v248, 1
    %v250 = vsel %vm249, %v52, %v161
    %v251 = vsel %vm249, %v53, %v162
    %v252 = vsel %vm249, %v54, %v163
    %vm253 = vcmp.le.f32.partialorder %v228, 1e-09
    %vm254 = vmor %vm253, %vm247
    %v255 = vsel %vm254, 1.0, %v87
    %v256 = vsel %vm88, 1, 0
    %v257 = vlaneseq
    %v258 = vshrl.u32 %v257, 7
    %v259 = vsub.s32 0, %v258
    %v260 = vrot.slane %v256, %v259
    %vm261 = vcmp.eq.s32.totalorder %v260, 1
    %v262 = vsel %vm261, %v52, %v250
    %v263 = vsel %vm261, %v53, %v251
    %264 = vset.pattern.permute.xlu0 0
    %265 = vperm.xlu0 %264, %v256
    %v266 = vpop.permute.xlu0 %265
    %v267 = vlaneseq
    %v268 = vshrl.u32 %v267, 7
    %v269 = vsub.s32 0, %v268
    %v270 = vrot.slane %v266, %v269
    %vm271 = vcmp.eq.s32.totalorder %v270, 1
    %v272 = vsel %vm271, %v54, %v252
    %v273 = vsel %vm261, %v55, %v154
    %v274 = vsel %vm261, %v56, %v155
    %v275 = vsel %vm271, %v57, %v160
    %276 = vset.pattern.permute.xlu0 0
    %277 = vperm.xlu0 %276, %v260
    %v278 = vpop.permute.xlu0 %277
    %vm279 = vcmp.eq.s32.totalorder %v278, 1
    %v280 = vsel %vm279, %v83, %v192
    %v281 = vsel %vm279, %v85, %v193
    %v282 = vsel %vm88, %v86, %v228
    loop: start=0, step=1, limit=19
    $region30: #{body.3} parent=1 // loop_pre_header
      _
    $region31: #{body.3} parent=1 // loop_header
      %s284 = sphi 0, %s288
      %p285 = scmp.ge.s32.totalorder %s284, 19
      %v289 = vphi %v262, %v434
      %v290 = vphi %v263, %v435
      %v291 = vphi %v272, %v444
      %v292 = vphi %v273, %v445
      %v293 = vphi %v274, %v446
      %v294 = vphi %v275, %v447
      %v295 = vphi %v280, %v452
      %v296 = vphi %v281, %v453
      %v297 = vphi %v255, %v427
    $region32: #{body.3} parent=1 // loop_header_branch
      %287 = sbr.rel (%p285) target = $region36
    $region33: #{body.3} parent=1 // loop_body
      %vm298 = vcmp.gt.f32.partialorder %v297, 0.0
      %300 = vset.pattern.permute.xlu0 0
      %301 = vperm.xlu0 %300, %v289
      %v302 = vpop.permute.xlu0 %301
      %305 = vset.pattern.permute.xlu0 0
      %306 = vperm.xlu0 %305, %v290
      %v307 = vpop.permute.xlu0 %306
      %v309 = vmul.f32 %v295, %v302
      %v310 = vmul.f32 %v296, %v307
      %v311 = vsel %vm101, %v309, 0.0
      %v312 = vsel %vm103, %v310, 0.0
      %v313 = vadd.f32 %v311, %v312
      %v314 = vrot.slane %v313, 4
      %v315 = vadd.f32 %v313, %v314
      %v316 = vrot.slane %v315, 2
      %v317 = vadd.f32 %v315, %v316
      %v318 = vrot.slane %v317, 1
      %v319 = vadd.f32 %v317, %v318
      %v320 = vrcp.pop %v319
      %v321 = vmul.f32 %v51, %v320
      %v322 = vmul.f32 %v295, %v321
      %v323 = vmul.f32 %v296, %v321
      %v324 = vsel %vm101, %v322, 0.0
      %325 = vadd.xlane.f32.xlu0 %v324
      %v326 = vpop.xlane.xlu0 %325
      %v327 = vsel %vm103, %v323, 0.0
      %328 = vadd.xlane.f32.xlu0 %v327
      %v329 = vpop.xlane.xlu0 %328
      %v330 = vrcp.pop %v326
      %v331 = vmul.f32 %v46, %v330
      %v332 = vrcp.pop %v329
      %v333 = vmul.f32 %v47, %v332
      %v334 = vand.u32 2147483647, %v331
      %v335 = vand.u32 2147483647, %v333
      %v336 = vsel %vm128, %v335, -inf
      %v337 = vmax.f32 %v334, %v336
      %v338 = vrot.slane %v337, 4
      %v339 = vmax.f32 %v337, %v338
      %v340 = vrot.slane %v339, 2
      %v341 = vmax.f32 %v339, %v340
      %v342 = vrot.slane %v341, 1
      %v343 = vmax.f32 %v341, %v342
      %v344 = vand.u32 2147483647, %v321
      %v345 = vsel %vm101, %v344, -inf
      %346 = vmax.xlane.f32.xlu0 %v345
      %v347 = vpop.xlane.xlu0 %346
      %vm348 = vcmp.gt.f32.partialorder %v343, 1000.0
      %vm349 = vcmp.gt.f32.partialorder %v347, 1000.0
      %vm350 = vmor %vm348, %vm349
      %v351 = vlog2.pop %v331
      %v352 = vmul.f32 %v351, 0.6931472
      %v353 = vlog2.pop %v333
      %v354 = vmul.f32 %v353, 0.6931472
      %v355 = vmul.f32 %v352, 0.001
      %v356 = vmul.f32 %v354, 0.001
      %v357 = vadd.f32 %v292, %v355
      %v358 = vadd.f32 %v293, %v356
      %v359 = vsel %vm350, 1, 0
      %vm360 = vcmp.eq.s32.totalorder %v359, 1
      %v361 = vsel %vm360, %v357, %v292
      %v362 = vsel %vm360, %v358, %v293
      %v363 = vlog2.pop %v321
      %v364 = vmul.f32 %v363, 0.6931472
      %v365 = vmul.f32 %v364, 0.001
      %v366 = vadd.f32 %v294, %v365
      %v367 = vsel %vm360, %v366, %v294
      %v368 = vsel %vm360, 0.11111111, %v331
      %v369 = vsel %vm360, 0.11111111, %v333
      %v370 = vsel %vm360, 0.11111111, %v321
      %372 = vset.pattern.permute.xlu0 0
      %373 = vperm.xlu0 %372, %v361
      %v374 = vpop.permute.xlu0 %373
      %377 = vset.pattern.permute.xlu0 0
      %378 = vperm.xlu0 %377, %v362
      %v379 = vpop.permute.xlu0 %378
      %v381 = vsub.f32 %v39, %v374
      %v382 = vsub.f32 %v40, %v379
      %v384 = vlaneseq
      %v385 = vshrl.u32 %v384, 7
      %v386 = vsub.s32 0, %v385
      %v387 = vrot.slane %v367, %v386
      %v389 = vsub.f32 %v381, %v387
      %v390 = vsub.f32 %v382, %v387
      %v391 = vsub.f32 0.0, %v389
      %v392 = vsub.f32 0.0, %v390
      %v393 = vmul.f32 %v391, 1000.0
      %v394 = vmul.f32 %v392, 1000.0
      %v395 = vmul.f32 %v393, 1.442695
      %v396 = vpow.pop %v395
      %v397 = vmul.f32 %v394, 1.442695
      %v398 = vpow.pop %v397
      %v399 = vsel %vm360, %v396, %v295
      %v400 = vsel %vm360, %v398, %v296
      %vm401 = vcmp.ne.f32.partialorder %v368, %v368
      %vm402 = vcmp.ne.f32.partialorder %v369, %v369
      %v403 = vsel %vm401, 1.0, 0.0
      %v404 = vsel %vm402, 1.0, 0.0
      %v405 = vsel %vm128, %v404, -inf
      %v406 = vmax.f32 %v403, %v405
      %v407 = vrot.slane %v406, 4
      %v408 = vmax.f32 %v406, %v407
      %v409 = vrot.slane %v408, 2
      %v410 = vmax.f32 %v408, %v409
      %v411 = vrot.slane %v410, 1
      %v412 = vmax.f32 %v410, %v411
      %vm413 = vcmp.ne.f32.partialorder %v370, %v370
      %v414 = vsel %vm413, 1.0, 0.0
      %v415 = vsel %vm101, %v414, -inf
      %416 = vmax.xlane.f32.xlu0 %v415
      %v417 = vpop.xlane.xlu0 %416
      %v418 = vadd.f32 %v412, %v417
      %vm419 = vcmp.gt.f32.partialorder %v418, 0.0
      %v420 = vsel %vm419, 1, 0
      %vm421 = vcmp.eq.s32.totalorder %v420, 1
      %v422 = vsel %vm421, %v289, %v368
      %v423 = vsel %vm421, %v290, %v369
      %v424 = vsel %vm421, %v291, %v370
      %vm425 = vcmp.le.f32.partialorder %v282, 1e-09
      %vm426 = vmor %vm425, %vm419
      %v427 = vsel %vm426, 1.0, %v297
      %v428 = vsel %vm298, 1, 0
      %v429 = vlaneseq
      %v430 = vshrl.u32 %v429, 7
      %v431 = vsub.s32 0, %v430
      %v432 = vrot.slane %v428, %v431
      %vm433 = vcmp.eq.s32.totalorder %v432, 1
      %v434 = vsel %vm433, %v289, %v422
      %v435 = vsel %vm433, %v290, %v423
      %436 = vset.pattern.permute.xlu0 0
      %437 = vperm.xlu0 %436, %v428
      %v438 = vpop.permute.xlu0 %437
      %v439 = vlaneseq
      %v440 = vshrl.u32 %v439, 7
      %v441 = vsub.s32 0, %v440
      %v442 = vrot.slane %v438, %v441
      %vm443 = vcmp.eq.s32.totalorder %v442, 1
      %v444 = vsel %vm443, %v291, %v424
      %v445 = vsel %vm433, %v292, %v361
      %v446 = vsel %vm433, %v293, %v362
      %v447 = vsel %vm443, %v294, %v367
      %448 = vset.pattern.permute.xlu0 0
      %449 = vperm.xlu0 %448, %v432
      %v450 = vpop.permute.xlu0 %449
      %vm451 = vcmp.eq.s32.totalorder %v450, 1
      %v452 = vsel %vm451, %v295, %v399
      %v453 = vsel %vm451, %v296, %v400
    $region34: #{body.3} parent=1 // loop_footer
      %s288 = sadd.s32 1, %s284
    $region35: #{body.3} parent=1 // loop_footer_branch
      %283 = sbr.rel target = $region31
    $region36: #{body.3} parent=1 // loop_exit
      _
    %vm454 = vcmask 7168
    %455 = vst.msk [vmem:[%s7] sm:$0xff] %vm454, %v289
    %vm456 = vcmask 0
    %457 = vst.msk [vmem:[%s7 + $0x8] sm:$0x1] %vm456, %v290
    %458 = vst.msk [vmem:[%s8] sm:$0x1] %vm103, %v291
    %459 = vst.msk [vmem:[%s9] sm:$0xff] %vm454, %v292
    %460 = vst.msk [vmem:[%s9 + $0x8] sm:$0x1] %vm456, %v293
    %461 = vst.msk [vmem:[%s10] sm:$0x1] %vm103, %v294
    %462 = vst.msk [vmem:[#allocation4] sm:$0x1] %vm456, %v282
    %463 = vst.msk [vmem:[#allocation6] sm:$0x1] %vm456, %v297
    %465 = vset.pattern.permute.xlu0 0
    %466 = vperm.xlu0 %465, %v292
    %v467 = vpop.permute.xlu0 %466
    %470 = vset.pattern.permute.xlu0 0
    %471 = vperm.xlu0 %470, %v293
    %v472 = vpop.permute.xlu0 %471
    %v474 = vsub.f32 %v39, %v467
    %v475 = vsub.f32 %v40, %v472
    %v477 = vlaneseq
    %v478 = vshrl.u32 %v477, 7
    %v479 = vsub.s32 0, %v478
    %v480 = vrot.slane %v294, %v479
    %v482 = vsub.f32 %v474, %v480
    %v483 = vsub.f32 %v475, %v480
    %v484 = vsub.f32 0.0, %v482
    %v485 = vsub.f32 0.0, %v483
    %v486 = vmul.f32 %v484, 1000.0
    %v487 = vmul.f32 %v485, 1000.0
    %v488 = vlog2.pop %v289
    %v489 = vmul.f32 %v488, 0.6931472
    %v490 = vlog2.pop %v290
    %v491 = vmul.f32 %v490, 0.6931472
    %493 = vset.pattern.permute.xlu0 0
    %494 = vperm.xlu0 %493, %v489
    %v495 = vpop.permute.xlu0 %494
    %498 = vset.pattern.permute.xlu0 0
    %499 = vperm.xlu0 %498, %v491
    %v500 = vpop.permute.xlu0 %499
    %v502 = vadd.f32 %v486, %v495
    %v503 = vadd.f32 %v487, %v500
    %v504 = vlog2.pop %v291
    %v505 = vmul.f32 %v504, 0.6931472
    %v507 = vlaneseq
    %v508 = vshrl.u32 %v507, 7
    %v509 = vsub.s32 0, %v508
    %v510 = vrot.slane %v505, %v509
    %v512 = vadd.f32 %v502, %v510
    %v513 = vadd.f32 %v503, %v510
    %v514 = vmul.f32 %v512, 1.442695
    %v515 = vpow.pop %v514
    %v516 = vmul.f32 %v513, 1.442695
    %v517 = vpow.pop %v516
    %518 = vst.msk [vmem:[#allocation8] sm:$0xff] %vm101, %v515
    %519 = vst.msk [vmem:[#allocation8 + $0x8] sm:$0x1] %vm103, %v517
    // Predicated region
    $region37: #{body.3} parent=1 // pred_check
      _
    $region38: #{body.3} parent=1 // pred_check_branch
      %521 = sbr.rel (0) target = $region40
    $region39: #{body.3} parent=1 // pred_region
      _
    $region40: #{body.3} parent=1 // pred_fallthru
      _
    // Predicated region
    $region41: #{body.3} parent=1 // pred_check
      _
    $region42: #{body.3} parent=1 // pred_check_branch
      %523 = sbr.rel (0) target = $region44
    $region43: #{body.3} parent=1 // pred_region
      _
    $region44: #{body.3} parent=1 // pred_fallthru
      _
    // Predicated region
    $region45: #{body.3} parent=1 // pred_check
      _
    $region46: #{body.3} parent=1 // pred_check_branch
      %525 = sbr.rel (0) target = $region48
    $region47: #{body.3} parent=1 // pred_region
      _
    $region48: #{body.3} parent=1 // pred_fallthru
      _
    // Predicated region
    $region49: #{body.3} parent=1 // pred_check
      _
    $region50: #{body.3} parent=1 // pred_check_branch
      %527 = sbr.rel (0) target = $region52
    $region51: #{body.3} parent=1 // pred_region
      _
    $region52: #{body.3} parent=1 // pred_fallthru
      _
    // Predicated region
    $region53: #{body.3} parent=1 // pred_check
      _
    $region54: #{body.3} parent=1 // pred_check_branch
      %529 = sbr.rel (0) target = $region56
    $region55: #{body.3} parent=1 // pred_region
      %s531 = ssub.s32 16, 16
      %532 = vsyncadd [#allocation5], %s531
      %s534 = sshll.u32 [#allocation4], 4
      %s535 = int_to_ptr.vmem [resolvable:$true] %s534
      %537 = dma.vmem_to_hbm [thread:$0]  %s535, 16, %s11, [#allocation5]
    $region56: #{body.3} parent=1 // pred_fallthru
      _
    // Predicated region
    $region57: #{body.3} parent=1 // pred_check
      _
    $region58: #{body.3} parent=1 // pred_check_branch
      %539 = sbr.rel (0) target = $region60
    $region59: #{body.3} parent=1 // pred_region
      %s541 = ssub.s32 16, 16
      %542 = vsyncadd [#allocation7], %s541
      %s544 = sshll.u32 [#allocation6], 4
      %s545 = int_to_ptr.vmem [resolvable:$true] %s544
      %547 = dma.vmem_to_hbm [thread:$0]  %s545, 16, %s12, [#allocation7]
    $region60: #{body.3} parent=1 // pred_fallthru
      _
    // Predicated region
    $region61: #{body.3} parent=1 // pred_check
      _
    $region62: #{body.3} parent=1 // pred_check_branch
      %549 = sbr.rel (0) target = $region64
    $region63: #{body.3} parent=1 // pred_region
      %s551 = ssub.s32 256, 256
      %552 = vsyncadd [#allocation7], %s551
      %s553 = sshll.u32 [#allocation8], 4
      %s554 = int_to_ptr.vmem [resolvable:$true] %s553
      %559 = dma.vmem_to_hbm [thread:$0]  %s554, 256, %s13, [#allocation7], 128, 128, 8
    $region64: #{body.3} parent=1 // pred_fallthru
      _
    // Predicated region
    $region65: #{body.3} parent=1 // pred_check
      _
    $region66: #{body.3} parent=1 // pred_check_branch
      %561 = sbr.rel (0) target = $region68
    $region67: #{body.3} parent=1 // pred_region
      _
    $region68: #{body.3} parent=1 // pred_fallthru
      _
    // Predicated region
    $region69: #{body.3} parent=1 // pred_check
      _
    $region70: #{body.3} parent=1 // pred_check_branch
      %563 = sbr.rel (0) target = $region72
    $region71: #{body.3} parent=1 // pred_region
      _
    $region72: #{body.3} parent=1 // pred_fallthru
      _
    // Predicated region
    $region73: #{body.3} parent=1 // pred_check
      _
    $region74: #{body.3} parent=1 // pred_check_branch
      %565 = sbr.rel (0) target = $region76
    $region75: #{body.3} parent=1 // pred_region
      _
    $region76: #{body.3} parent=1 // pred_fallthru
      _
    // Predicated region
    $region77: #{body.3} parent=1 // pred_check
      _
    $region78: #{body.3} parent=1 // pred_check_branch
      %567 = sbr.rel (0) target = $region80
    $region79: #{body.3} parent=1 // pred_region
      _
    $region80: #{body.3} parent=1 // pred_fallthru
      _
    // Predicated region
    $region81: #{body.3} parent=1 // pred_check
      _
    $region82: #{body.3} parent=1 // pred_check_branch
      %569 = sbr.rel (0) target = $region84
    $region83: #{body.3} parent=1 // pred_region
      %570 = dma.done [#allocation5], 16
    $region84: #{body.3} parent=1 // pred_fallthru
      _
    // Predicated region
    $region85: #{body.3} parent=1 // pred_check
      _
    $region86: #{body.3} parent=1 // pred_check_branch
      %572 = sbr.rel (0) target = $region88
    $region87: #{body.3} parent=1 // pred_region
      %573 = dma.done [#allocation7], 16
    $region88: #{body.3} parent=1 // pred_fallthru
      _
    // Predicated region
    $region89: #{body.3} parent=1 // pred_check
      _
    $region90: #{body.3} parent=1 // pred_check_branch
      %575 = sbr.rel (0) target = $region92
    $region91: #{body.3} parent=1 // pred_region
      %576 = dma.done [#allocation7], 256
    $region92: #{body.3} parent=1 // pred_fallthru
      _
    %577 = vsyncpa [#allocation5], 1
    %578 = vsyncpa [#allocation7], 1

// kernel: superglue_forward.1
$region0: #{superglue_forward.1}
  #allocation0 [shape = 'u32[]', space=smem, size = 0x4, offset = 0x4, fixed_abs, tag = 'smem constant byte address 0x4 - core index']
  #allocation1 [shape = 'u32[144,128]{1,0:T(1,128)}', space=vmem, size = 0x12000, scoped, tag = 'internal scratch']
  %s0 = inlined_call_operand.vmem [shape: f32[16,2], index: 0, kind: input, shape index: {}]
  %s1 = inlined_call_operand.vmem [shape: f32[16,128], index: 1, kind: input, shape index: {}]
  %s2 = inlined_call_operand.vmem [shape: f32[2,32], index: 2, kind: input, shape index: {}]
  %s3 = inlined_call_operand.vmem [shape: f32[1,32], index: 3, kind: input, shape index: {}]
  %s4 = inlined_call_operand.vmem [shape: bf16[32,128], index: 4, kind: input, shape index: {}]
  %s5 = inlined_call_operand.hbm [shape: f32[1,128], index: 5, kind: input, shape index: {}]
  %s6 = inlined_call_operand.hbm [shape: bf16[4,128,384], index: 6, kind: input, shape index: {}]
  %s7 = inlined_call_operand.hbm [shape: f32[4,384], index: 7, kind: input, shape index: {}]
  %s8 = inlined_call_operand.vmem [shape: bf16[128,128], index: 8, kind: input, shape index: {}]
  %s9 = inlined_call_operand.hbm [shape: f32[1,128], index: 9, kind: input, shape index: {}]
  %s10 = inlined_call_operand.vmem [shape: f32[8,8], index: 10, kind: output, shape index: {}]
  %s11 = sld [smem:[#allocation0]]
  $region66: #{superglue_forward.1} parent=0
    _
  %s13 = ssub.s32 1, %s11
  %s14 = scalar_select 0, %s13, %s11
  $region1: #{superglue_forward.1} parent=0
    #allocation2 [shape = 'u8[512]{0}', space=vmem, size = 0x400, scoped, tag = 'input window, operand 5, single buffered']
    #allocation3 [shape = 's32[1]{0}', space=sflag, size = 0x4, scoped, tag = 'scoped memory for superglue_forward.1']
    #allocation4 [shape = 'u8[393216]{0}', space=vmem, size = 0x60000, scoped, tag = 'input window, operand 6, single buffered']
    #allocation5 [shape = 's32[1]{0}', space=sflag, size = 0x4, scoped, tag = 'scoped memory for superglue_forward.1']
    #allocation6 [shape = 'u8[6144]{0}', space=vmem, size = 0x1800, scoped, tag = 'input window, operand 7, single buffered']
    #allocation7 [shape = 'u8[512]{0}', space=vmem, size = 0x400, scoped, tag = 'input window, operand 9, single buffered']
    #allocation8 [shape = 's32[1]{0}', space=sflag, size = 0x4, scoped, tag = 'scoped memory for superglue_forward.1']
    %15 = vsyncpa [#allocation3], 0
    %16 = vsyncpa [#allocation5], 0
    %17 = vsyncpa [#allocation8], 0
    // Predicated region
    $region2: #{superglue_forward.1} parent=1 // pred_check
      _
    $region3: #{superglue_forward.1} parent=1 // pred_check_branch
      %19 = sbr.rel (0) target = $region5
    $region4: #{superglue_forward.1} parent=1 // pred_region
      _
    $region5: #{superglue_forward.1} parent=1 // pred_fallthru
      _
    // Predicated region
    $region6: #{superglue_forward.1} parent=1 // pred_check
      _
    $region7: #{superglue_forward.1} parent=1 // pred_check_branch
      %21 = sbr.rel (0) target = $region9
    $region8: #{superglue_forward.1} parent=1 // pred_region
      _
    $region9: #{superglue_forward.1} parent=1 // pred_fallthru
      _
    // Predicated region
    $region10: #{superglue_forward.1} parent=1 // pred_check
      _
    $region11: #{superglue_forward.1} parent=1 // pred_check_branch
      %23 = sbr.rel (0) target = $region13
    $region12: #{superglue_forward.1} parent=1 // pred_region
      _
    $region13: #{superglue_forward.1} parent=1 // pred_fallthru
      _
    // Predicated region
    $region14: #{superglue_forward.1} parent=1 // pred_check
      _
    $region15: #{superglue_forward.1} parent=1 // pred_check_branch
      %25 = sbr.rel (0) target = $region17
    $region16: #{superglue_forward.1} parent=1 // pred_region
      _
    $region17: #{superglue_forward.1} parent=1 // pred_fallthru
      _
    // Predicated region
    $region18: #{superglue_forward.1} parent=1 // pred_check
      _
    $region19: #{superglue_forward.1} parent=1 // pred_check_branch
      %27 = sbr.rel (0) target = $region21
    $region20: #{superglue_forward.1} parent=1 // pred_region
      _
    $region21: #{superglue_forward.1} parent=1 // pred_fallthru
      _
    // Predicated region
    $region22: #{superglue_forward.1} parent=1 // pred_check
      _
    $region23: #{superglue_forward.1} parent=1 // pred_check_branch
      %29 = sbr.rel (0) target = $region25
    $region24: #{superglue_forward.1} parent=1 // pred_region
      %s31 = ssub.s32 16, 16
      %32 = vsyncadd [#allocation3], %s31
      %s34 = sshll.u32 [#allocation2], 4
      %s35 = int_to_ptr.vmem [resolvable:$true] %s34
      %37 = dma.hbm_to_vmem [thread:$0]  %s5, 16, %s35, [#allocation3]
    $region25: #{superglue_forward.1} parent=1 // pred_fallthru
      _
    // Predicated region
    $region26: #{superglue_forward.1} parent=1 // pred_check
      _
    $region27: #{superglue_forward.1} parent=1 // pred_check_branch
      %39 = sbr.rel (0) target = $region29
    $region28: #{superglue_forward.1} parent=1 // pred_region
      %s41 = ssub.s32 12288, 12288
      %42 = vsyncadd [#allocation5], %s41
      %s43 = sshll.u32 [#allocation4], 4
      %s44 = int_to_ptr.vmem [resolvable:$true] %s43
      %49 = dma.hbm_to_vmem [thread:$0]  %s6, 12288, %s44, [#allocation5], 192, 192, 12
    $region29: #{superglue_forward.1} parent=1 // pred_fallthru
      _
    // Predicated region
    $region30: #{superglue_forward.1} parent=1 // pred_check
      _
    $region31: #{superglue_forward.1} parent=1 // pred_check_branch
      %51 = sbr.rel (0) target = $region33
    $region32: #{superglue_forward.1} parent=1 // pred_region
      %s53 = ssub.s32 192, 192
      %54 = vsyncadd [#allocation5], %s53
      %s56 = sshll.u32 [#allocation6], 4
      %s57 = int_to_ptr.vmem [resolvable:$true] %s56
      %59 = dma.hbm_to_vmem [thread:$0]  %s7, 192, %s57, [#allocation5]
    $region33: #{superglue_forward.1} parent=1 // pred_fallthru
      _
    // Predicated region
    $region34: #{superglue_forward.1} parent=1 // pred_check
      _
    $region35: #{superglue_forward.1} parent=1 // pred_check_branch
      %61 = sbr.rel (0) target = $region37
    $region36: #{superglue_forward.1} parent=1 // pred_region
      _
    $region37: #{superglue_forward.1} parent=1 // pred_fallthru
      _
    // Predicated region
    $region38: #{superglue_forward.1} parent=1 // pred_check
      _
    $region39: #{superglue_forward.1} parent=1 // pred_check_branch
      %63 = sbr.rel (0) target = $region41
    $region40: #{superglue_forward.1} parent=1 // pred_region
      %s65 = ssub.s32 16, 16
      %66 = vsyncadd [#allocation8], %s65
      %s68 = sshll.u32 [#allocation7], 4
      %s69 = int_to_ptr.vmem [resolvable:$true] %s68
      %71 = dma.hbm_to_vmem [thread:$0]  %s9, 16, %s69, [#allocation8]
    $region41: #{superglue_forward.1} parent=1 // pred_fallthru
      _
    // Predicated region
    $region42: #{superglue_forward.1} parent=1 // pred_check
      _
    $region43: #{superglue_forward.1} parent=1 // pred_check_branch
      %73 = sbr.rel (0) target = $region45
    $region44: #{superglue_forward.1} parent=1 // pred_region
      %74 = dma.done [#allocation3], 16
    $region45: #{superglue_forward.1} parent=1 // pred_fallthru
      _
    // Predicated region
    $region46: #{superglue_forward.1} parent=1 // pred_check
      _
    $region47: #{superglue_forward.1} parent=1 // pred_check_branch
      %76 = sbr.rel (0) target = $region49
    $region48: #{superglue_forward.1} parent=1 // pred_region
      %77 = dma.done [#allocation5], 12288
    $region49: #{superglue_forward.1} parent=1 // pred_fallthru
      _
    // Predicated region
    $region50: #{superglue_forward.1} parent=1 // pred_check
      _
    $region51: #{superglue_forward.1} parent=1 // pred_check_branch
      %79 = sbr.rel (0) target = $region53
    $region52: #{superglue_forward.1} parent=1 // pred_region
      %80 = dma.done [#allocation5], 192
    $region53: #{superglue_forward.1} parent=1 // pred_fallthru
      _
    // Predicated region
    $region54: #{superglue_forward.1} parent=1 // pred_check
      _
    $region55: #{superglue_forward.1} parent=1 // pred_check_branch
      %82 = sbr.rel (0) target = $region57
    $region56: #{superglue_forward.1} parent=1 // pred_region
      %83 = dma.done [#allocation8], 16
    $region57: #{superglue_forward.1} parent=1 // pred_fallthru
      _
    %v85 = vld [vmem:[%s0] sm:$0xff]
    %v86 = vld [vmem:[%s0 + $0x8] sm:$0xff]
    %v87 = vld [vmem:[%s2] sm:$0x3]
    %89 = vset.pattern.permute.xlu0 0
    %90 = vperm.xlu0 %89, %v85
    %v91 = vpop.permute.xlu0 %90
    %94 = vset.pattern.permute.xlu0 0
    %95 = vperm.xlu0 %94, %v86
    %v96 = vpop.permute.xlu0 %95
    %v98 = vlaneseq
    %v99 = vshrl.u32 %v98, 7
    %v100 = vsub.s32 0, %v99
    %v101 = vrot.slane %v87, %v100
    %v102 = vmul.f32 %v91, %v101
    %v103 = vmul.f32 %v96, %v101
    %104 = vset.pattern.permute.xlu0 1
    %105 = vperm.xlu0 %104, %v85
    %v106 = vpop.permute.xlu0 %105
    %108 = vset.pattern.permute.xlu0 1
    %109 = vperm.xlu0 %108, %v86
    %v110 = vpop.permute.xlu0 %109
    %v112 = vlaneseq
    %v113 = vshrl.u32 %v112, 7
    %v114 = vsub.s32 1, %v113
    %v115 = vrot.slane %v87, %v114
    %v116 = vmul.f32 %v106, %v115
    %v117 = vmul.f32 %v110, %v115
    %v118 = vadd.f32 %v102, %v116
    %v119 = vadd.f32 %v103, %v117
    %v120 = vld [vmem:[%s3] sm:$0x1]
    %v122 = vlaneseq
    %v123 = vshrl.u32 %v122, 7
    %v124 = vsub.s32 0, %v123
    %v125 = vrot.slane %v120, %v124
    %v127 = vadd.f32 %v118, %v125
    %v128 = vadd.f32 %v119, %v125
    %v129 = vmax.f32 %v127, 0.0
    %v130 = vmax.f32 %v128, 0.0
    %v131 = vpack.c.bf16 %v130, %v129
    %v132 = vld [vmem:[%s4] sm:$0xf]
    %v133 = vld [vmem:[%s4 + $0x4] sm:$0xf]
    %v134 = vld [vmem:[%s4 + $0x8] sm:$0xf]
    %v135 = vld [vmem:[%s4 + $0xc] sm:$0xf]
    %v136 = vld [vmem:[#allocation2] sm:$0x1]
    %v138 = vlaneseq
    %v139 = vshrl.u32 %v138, 7
    %v140 = vsub.s32 0, %v139
    %v141 = vrot.slane %v136, %v140
    %v147 = vunpack.c.l.b16 %v132
    %v148 = vunpack.c.l.b16 %v133
    %v149 = vunpack.c.l.b16 %v134
    %v150 = vunpack.c.l.b16 %v135
    %v151 = vpack.c.b16 %v148, %v147
    %v152 = vpack.c.b16 %v150, %v149
    %vm155 = vcmask 261120
    %v157 = vsel %vm155, %v131, 0
    %159 = vmatprep.subr.bf16.mxu0 0
    %160 = vmatpush1.bf16.msra.mxu0 %v151
    %161 = vmatprep.subr.bf16.mxu0 0
    %162 = vmatpush1.bf16.msra.mxu0 %v152
    %163 = vmatprep.subr.bf16.mxu0 0
    %164 = vmatpush1.bf16.msra.mxu0 0
    %165 = vmatprep.subr.bf16.mxu0 0
    %166 = vmatpush1.bf16.msra.mxu0 0
    %167 = vmatprep.subr.bf16.mxu0 0
    %168 = vmatpush1.bf16.msra.mxu0 0
    %169 = vmatprep.subr.bf16.mxu0 0
    %170 = vmatpush1.bf16.msra.mxu0 0
    %171 = vmatprep.subr.bf16.mxu0 0
    %172 = vmatpush1.bf16.msra.mxu0 0
    %173 = vmatprep.subr.bf16.mxu0 0
    %174 = vmatpush1.bf16.msra.mxu0 0
    %175 = vmatprep.subr.bf16.mxu0 0
    %176 = vmatpush1.bf16.msra.mxu0 0
    %177 = vmatprep.subr.bf16.mxu0 0
    %178 = vmatpush1.bf16.msra.mxu0 0
    %179 = vmatprep.subr.bf16.mxu0 0
    %180 = vmatpush1.bf16.msra.mxu0 0
    %181 = vmatprep.subr.bf16.mxu0 0
    %182 = vmatpush1.bf16.msra.mxu0 0
    %183 = vmatprep.subr.bf16.mxu0 0
    %184 = vmatpush1.bf16.msra.mxu0 0
    %185 = vmatprep.subr.bf16.mxu0 0
    %186 = vmatpush1.bf16.msra.mxu0 0
    %187 = vmatprep.subr.bf16.mxu0 0
    %188 = vmatpush1.bf16.msra.mxu0 0
    %189 = vmatprep.subr.bf16.mxu0 0
    %190 = vmatpush1.bf16.msra.mxu0 0
    %191 = vmatprep.mubr.bf16.mxu0 0
    %192 = vmatmul.mubr.bf16.gmra.mrb[0].mxu0 %v157
    %v193 = vpop.f32.mrb[0].mxu0
    %v194 = vadd.f32 %v141, %v193
    %v195 = vpop.f32.mrb[0].mxu0
    %v196 = vpop.f32.mrb[0].mxu0
    %v197 = vadd.f32 %v141, %v196
    %v198 = vpop.f32.mrb[0].mxu0
    %199 = vdwg.mxu0
    %v200 = vmax.f32 %v194, 0.0
    %v201 = vmax.f32 %v197, 0.0
    %v202 = vld [vmem:[%s1] sm:$0xff]
    %v203 = vld [vmem:[%s1 + $0x8] sm:$0xff]
    %v204 = vadd.f32 %v200, %v202
    %v205 = vadd.f32 %v201, %v203
    %v206 = vlaneseq
    %v207 = vshrl.u32 %v206, 7
    %v208 = vlaneseq
    %v209 = vand.u32 %v208, 127
    %vm210 = vcmp.ne.s32.totalorder %v207, %v209
    %v211 = vsel %vm210, 1, 0
    %v212 = vcvt.s32.f32 %v211
    %v213 = vpack.c.bf16 %v205, %v204
    %v214 = vld [vmem:[#allocation4] sm:$0xff]
    %v215 = vld [vmem:[#allocation4 + $0x8] sm:$0xf]
    %v216 = vld [vmem:[#allocation4 + $0xc] sm:$0xff]
    %v217 = vld [vmem:[#allocation4 + $0x14] sm:$0xf]
    %v218 = vld [vmem:[#allocation4 + $0x18] sm:$0xff]
    %v219 = vld [vmem:[#allocation4 + $0x20] sm:$0xf]
    %v220 = vld [vmem:[#allocation4 + $0x24] sm:$0xff]
    %v221 = vld [vmem:[#allocation4 + $0x2c] sm:$0xf]
    %v222 = vld [vmem:[#allocation4 + $0x30] sm:$0xff]
    %v223 = vld [vmem:[#allocation4 + $0x38] sm:$0xf]
    %v224 = vld [vmem:[#allocation4 + $0x3c] sm:$0xff]
    %v225 = vld [vmem:[#allocation4 + $0x44] sm:$0xf]
    %v226 = vld [vmem:[#allocation4 + $0x48] sm:$0xff]
    %v227 = vld [vmem:[#allocation4 + $0x50] sm:$0xf]
    %v228 = vld [vmem:[#allocation4 + $0x54] sm:$0xff]
    %v229 = vld [vmem:[#allocation4 + $0x5c] sm:$0xf]
    %v230 = vld [vmem:[#allocation4 + $0x60] sm:$0xff]
    %v231 = vld [vmem:[#allocation4 + $0x68] sm:$0xf]
    %v232 = vld [vmem:[#allocation4 + $0x6c] sm:$0xff]
    %v233 = vld [vmem:[#allocation4 + $0x74] sm:$0xf]
    %v234 = vld [vmem:[#allocation4 + $0x78] sm:$0xff]
    %v235 = vld [vmem:[#allocation4 + $0x80] sm:$0xf]
    %v236 = vld [vmem:[#allocation4 + $0x84] sm:$0xff]
    %v237 = vld [vmem:[#allocation4 + $0x8c] sm:$0xf]
    %v238 = vld [vmem:[#allocation4 + $0x90] sm:$0xff]
    %v239 = vld [vmem:[#allocation4 + $0x98] sm:$0xf]
    %v240 = vld [vmem:[#allocation4 + $0x9c] sm:$0xff]
    %v241 = vld [vmem:[#allocation4 + $0xa4] sm:$0xf]
    %v242 = vld [vmem:[#allocation4 + $0xa8] sm:$0xff]
    %v243 = vld [vmem:[#allocation4 + $0xb0] sm:$0xf]
    %v244 = vld [vmem:[#allocation4 + $0xb4] sm:$0xff]
    %v245 = vld [vmem:[#allocation4 + $0xbc] sm:$0xf]
    %v246 = vld [vmem:[#allocation6] ss:$4 sm:$0x7]
    %v248 = vlaneseq
    %v249 = vshrl.u32 %v248, 7
    %v250 = vsub.s32 0, %v249
    %v251 = vrot.slane %v246, %v250
    %v252 = vlaneseq
    %v253 = vshrl.u32 %v252, 7
    %v254 = vsub.s32 1, %v253
    %v255 = vrot.slane %v246, %v254
    %v256 = vlaneseq
    %v257 = vshrl.u32 %v256, 7
    %v258 = vsub.s32 2, %v257
    %v259 = vrot.slane %v246, %v258
    %v295 = vunpack.c.l.b16 %v214
    %v296 = vunpack.c.h.b16 %v214
    %v297 = vunpack.c.l.b16 %v215
    %v298 = vunpack.c.l.b16 %v216
    %v299 = vunpack.c.h.b16 %v216
    %v300 = vunpack.c.l.b16 %v217
    %v301 = vunpack.c.l.b16 %v218
    %v302 = vunpack.c.h.b16 %v218
    %v303 = vunpack.c.l.b16 %v219
    %v304 = vunpack.c.l.b16 %v220
    %v305 = vunpack.c.h.b16 %v220
    %v306 = vunpack.c.l.b16 %v221
    %v307 = vunpack.c.l.b16 %v222
    %v308 = vunpack.c.h.b16 %v222
    %v309 = vunpack.c.l.b16 %v223
    %v310 = vunpack.c.l.b16 %v224
    %v311 = vunpack.c.h.b16 %v224
    %v312 = vunpack.c.l.b16 %v225
    %v313 = vunpack.c.l.b16 %v226
    %v314 = vunpack.c.h.b16 %v226
    %v315 = vunpack.c.l.b16 %v227
    %v316 = vunpack.c.l.b16 %v228
    %v317 = vunpack.c.h.b16 %v228
    %v318 = vunpack.c.l.b16 %v229
    %v319 = vunpack.c.l.b16 %v230
    %v320 = vunpack.c.h.b16 %v230
    %v321 = vunpack.c.l.b16 %v231
    %v322 = vunpack.c.l.b16 %v232
    %v323 = vunpack.c.h.b16 %v232
    %v324 = vunpack.c.l.b16 %v233
    %v325 = vunpack.c.l.b16 %v234
    %v326 = vunpack.c.h.b16 %v234
    %v327 = vunpack.c.l.b16 %v235
    %v328 = vunpack.c.l.b16 %v236
    %v329 = vunpack.c.h.b16 %v236
    %v330 = vunpack.c.l.b16 %v237
    %v331 = vunpack.c.l.b16 %v238
    %v332 = vunpack.c.h.b16 %v238
    %v333 = vunpack.c.l.b16 %v239
    %v334 = vunpack.c.l.b16 %v240
    %v335 = vunpack.c.h.b16 %v240
    %v336 = vunpack.c.l.b16 %v241
    %v337 = vunpack.c.l.b16 %v242
    %v338 = vunpack.c.h.b16 %v242
    %v339 = vunpack.c.l.b16 %v243
    %v340 = vunpack.c.l.b16 %v244
    %v341 = vunpack.c.h.b16 %v244
    %v342 = vunpack.c.l.b16 %v245
    %v343 = vpack.c.b16 %v298, %v295
    %v344 = vpack.c.b16 %v299, %v296
    %v345 = vpack.c.b16 %v300, %v297
    %v346 = vpack.c.b16 %v304, %v301
    %v347 = vpack.c.b16 %v305, %v302
    %v348 = vpack.c.b16 %v306, %v303
    %v349 = vpack.c.b16 %v310, %v307
    %v350 = vpack.c.b16 %v311, %v308
    %v351 = vpack.c.b16 %v312, %v309
    %v352 = vpack.c.b16 %v316, %v313
    %v353 = vpack.c.b16 %v317, %v314
    %v354 = vpack.c.b16 %v318, %v315
    %v355 = vpack.c.b16 %v322, %v319
    %v356 = vpack.c.b16 %v323, %v320
    %v357 = vpack.c.b16 %v324, %v321
    %v358 = vpack.c.b16 %v328, %v325
    %v359 = vpack.c.b16 %v329, %v326
    %v360 = vpack.c.b16 %v330, %v327
    %v361 = vpack.c.b16 %v334, %v331
    %v362 = vpack.c.b16 %v335, %v332
    %v363 = vpack.c.b16 %v336, %v333
    %v364 = vpack.c.b16 %v340, %v337
    %v365 = vpack.c.b16 %v341, %v338
    %v366 = vpack.c.b16 %v342, %v339
    %391 = vmatprep.subr.bf16.mxu0 %v344
    %392 = vmatpush1.bf16.msra.mxu0 %v343
    %393 = vmatprep.subr.bf16.mxu0 %v347
    %394 = vmatpush1.bf16.msra.mxu0 %v346
    %395 = vmatprep.subr.bf16.mxu0 %v350
    %396 = vmatpush1.bf16.msra.mxu0 %v349
    %397 = vmatprep.subr.bf16.mxu0 %v353
    %398 = vmatpush1.bf16.msra.mxu0 %v352
    %399 = vmatprep.subr.bf16.mxu0 %v356
    %400 = vmatpush1.bf16.msra.mxu0 %v355
    %401 = vmatprep.subr.bf16.mxu0 %v359
    %402 = vmatpush1.bf16.msra.mxu0 %v358
    %403 = vmatprep.subr.bf16.mxu0 %v362
    %404 = vmatpush1.bf16.msra.mxu0 %v361
    %405 = vmatprep.subr.bf16.mxu0 %v365
    %406 = vmatpush1.bf16.msra.mxu0 %v364
    %407 = vmatprep.subr.bf16.mxu0 0
    %408 = vmatpush1.bf16.msra.mxu0 0
    %409 = vmatprep.subr.bf16.mxu0 0
    %410 = vmatpush1.bf16.msra.mxu0 0
    %411 = vmatprep.subr.bf16.mxu0 0
    %412 = vmatpush1.bf16.msra.mxu0 0
    %413 = vmatprep.subr.bf16.mxu0 0
    %414 = vmatpush1.bf16.msra.mxu0 0
    %415 = vmatprep.subr.bf16.mxu0 0
    %416 = vmatpush1.bf16.msra.mxu0 0
    %417 = vmatprep.subr.bf16.mxu0 0
    %418 = vmatpush1.bf16.msra.mxu0 0
    %419 = vmatprep.subr.bf16.mxu0 0
    %420 = vmatpush1.bf16.msra.mxu0 0
    %421 = vmatprep.subr.bf16.mxu0 0
    %422 = vmatpush1.bf16.msra.mxu0 0
    %423 = vmatprep.mubr.bf16.mxu0 0
    %424 = vmatmul.mubr.bf16.gmra.mrb[0].mxu0 %v213
    %v425 = vpop.f32.mrb[0].mxu0
    %v426 = vadd.f32 %v251, %v425
    %v427 = vpop.f32.mrb[0].mxu0
    %v428 = vadd.f32 %v255, %v427
    %v429 = vpop.f32.mrb[0].mxu0
    %v430 = vadd.f32 %v251, %v429
    %v431 = vpop.f32.mrb[0].mxu0
    %v432 = vadd.f32 %v255, %v431
    %433 = vdwg.mxu0
    %434 = vmatprep.subr.bf16.mxu0 0
    %435 = vmatpush1.bf16.msra.mxu0 %v345
    %436 = vmatprep.subr.bf16.mxu0 0
    %437 = vmatpush1.bf16.msra.mxu0 %v348
    %438 = vmatprep.subr.bf16.mxu0 0
    %439 = vmatpush1.bf16.msra.mxu0 %v351
    %440 = vmatprep.subr.bf16.mxu0 0
    %441 = vmatpush1.bf16.msra.mxu0 %v354
    %442 = vmatprep.subr.bf16.mxu0 0
    %443 = vmatpush1.bf16.msra.mxu0 %v357
    %444 = vmatprep.subr.bf16.mxu0 0
    %445 = vmatpush1.bf16.msra.mxu0 %v360
    %446 = vmatprep.subr.bf16.mxu0 0
    %447 = vmatpush1.bf16.msra.mxu0 %v363
    %448 = vmatprep.subr.bf16.mxu0 0
    %449 = vmatpush1.bf16.msra.mxu0 %v366
    %450 = vmatprep.subr.bf16.mxu0 0
    %451 = vmatpush1.bf16.msra.mxu0 0
    %452 = vmatprep.subr.bf16.mxu0 0
    %453 = vmatpush1.bf16.msra.mxu0 0
    %454 = vmatprep.subr.bf16.mxu0 0
    %455 = vmatpush1.bf16.msra.mxu0 0
    %456 = vmatprep.subr.bf16.mxu0 0
    %457 = vmatpush1.bf16.msra.mxu0 0
    %458 = vmatprep.subr.bf16.mxu0 0
    %459 = vmatpush1.bf16.msra.mxu0 0
    %460 = vmatprep.subr.bf16.mxu0 0
    %461 = vmatpush1.bf16.msra.mxu0 0
    %462 = vmatprep.subr.bf16.mxu0 0
    %463 = vmatpush1.bf16.msra.mxu0 0
    %464 = vmatprep.subr.bf16.mxu0 0
    %465 = vmatpush1.bf16.msra.mxu0 0
    %466 = vmatprep.mubr.bf16.mxu0 0
    %467 = vmatmul.mubr.bf16.gmra.mrb[0].mxu0 %v213
    %v468 = vpop.f32.mrb[0].mxu0
    %v469 = vadd.f32 %v259, %v468
    %v470 = vpop.f32.mrb[0].mxu0
    %v471 = vpop.f32.mrb[0].mxu0
    %v472 = vadd.f32 %v259, %v471
    %v473 = vpop.f32.mrb[0].mxu0
    %474 = vdwg.mxu0
    %v475 = vand.u32 2147483647, %v426
    %476 = vmax.xlane.f32.xlu0 %v475
    %v477 = vpop.xlane.xlu0 %476
    %v478 = vand.u32 2147483647, %v428
    %479 = vmax.xlane.f32.xlu0 %v478
    %v480 = vpop.xlane.xlu0 %479
    %v482 = vlaneseq
    %v483 = vshrl.u32 %v482, 7
    %v484 = vsub.s32 0, %v483
    %v485 = vrot.slane %v477, %v484
    %v486 = vlaneseq
    %v487 = vshrl.u32 %v486, 7
    %v488 = vsub.s32 1, %v487
    %v489 = vrot.slane %v477, %v488
    %v490 = vlaneseq
    %v491 = vshrl.u32 %v490, 7
    %v492 = vsub.s32 2, %v491
    %v493 = vrot.slane %v477, %v492
    %v494 = vlaneseq
    %v495 = vshrl.u32 %v494, 7
    %v496 = vsub.s32 3, %v495
    %v497 = vrot.slane %v477, %v496
    %v498 = vlaneseq
    %v499 = vshrl.u32 %v498, 7
    %v500 = vsub.s32 4, %v499
    %v501 = vrot.slane %v477, %v500
    %v502 = vlaneseq
    %v503 = vshrl.u32 %v502, 7
    %v504 = vsub.s32 5, %v503
    %v505 = vrot.slane %v477, %v504
    %v506 = vlaneseq
    %v507 = vshrl.u32 %v506, 7
    %v508 = vsub.s32 6, %v507
    %v509 = vrot.slane %v477, %v508
    %v510 = vlaneseq
    %v511 = vshrl.u32 %v510, 7
    %v512 = vsub.s32 7, %v511
    %v513 = vrot.slane %v477, %v512
    %v522 = vmul.f32 %v485, %v480
    %v523 = vmul.f32 %v489, %v480
    %v524 = vmul.f32 %v493, %v480
    %v525 = vmul.f32 %v497, %v480
    %v526 = vmul.f32 %v501, %v480
    %v527 = vmul.f32 %v505, %v480
    %v528 = vmul.f32 %v509, %v480
    %v529 = vmul.f32 %v513, %v480
    %v531 = vcombine.high %v426, %v426
    %v533 = vunpack.c.l.s4 1966171168
    %v534 = vunpack.c.0.s8 %v533
    %v535 = vlaneseq
    %v536 = vshrl.u32 %v535, 7
    %v537 = vsub.s32 %v534, %v536
    %v538 = vrot.slane %v426, %v537
    %v540 = vunpack.c.l.s4 1966171168
    %v541 = vunpack.c.0.s8 %v540
    %v542 = vlaneseq
    %v543 = vshrl.u32 %v542, 7
    %v544 = vsub.s32 %v541, %v543
    %v545 = vrot.slane %v531, %v544
    %v546 = vcombine.high %v538, %v538
    %v547 = vcombine.high %v545, %v545
    %v549 = vunpack.c.l.s4 1966171168
    %v550 = vunpack.c.0.s8 %v549
    %v551 = vlaneseq
    %v552 = vshrl.u32 %v551, 7
    %v553 = vsub.s32 %v550, %v552
    %v554 = vrot.slane %v538, %v553
    %v556 = vunpack.c.l.s4 1966171168
    %v557 = vunpack.c.0.s8 %v556
    %v558 = vlaneseq
    %v559 = vshrl.u32 %v558, 7
    %v560 = vsub.s32 %v557, %v559
    %v561 = vrot.slane %v545, %v560
    %v563 = vunpack.c.l.s4 1966171168
    %v564 = vunpack.c.0.s8 %v563
    %v565 = vlaneseq
    %v566 = vshrl.u32 %v565, 7
    %v567 = vsub.s32 %v564, %v566
    %v568 = vrot.slane %v546, %v567
    %v570 = vunpack.c.l.s4 1966171168
    %v571 = vunpack.c.0.s8 %v570
    %v572 = vlaneseq
    %v573 = vshrl.u32 %v572, 7
    %v574 = vsub.s32 %v571, %v573
    %v575 = vrot.slane %v547, %v574
    %v576 = vcombine.high %v554, %v554
    %v577 = vcombine.high %v561, %v561
    %v578 = vcombine.high %v568, %v568
    %v579 = vcombine.high %v575, %v575
    %v580 = vlaneseq
    %v581 = vshrl.u32 %v580, 7
    %v582 = vsub.s32 0, %v581
    %v583 = vrot.slane %v554, %v582
    %v584 = vlaneseq
    %v585 = vshrl.u32 %v584, 7
    %v586 = vsub.s32 0, %v585
    %v587 = vrot.slane %v568, %v586
    %v588 = vlaneseq
    %v589 = vshrl.u32 %v588, 7
    %v590 = vsub.s32 0, %v589
    %v591 = vrot.slane %v576, %v590
    %v592 = vlaneseq
    %v593 = vshrl.u32 %v592, 7
    %v594 = vsub.s32 0, %v593
    %v595 = vrot.slane %v578, %v594
    %v596 = vlaneseq
    %v597 = vshrl.u32 %v596, 7
    %v598 = vsub.s32 0, %v597
    %v599 = vrot.slane %v561, %v598
    %v600 = vlaneseq
    %v601 = vshrl.u32 %v600, 7
    %v602 = vsub.s32 0, %v601
    %v603 = vrot.slane %v575, %v602
    %v604 = vlaneseq
    %v605 = vshrl.u32 %v604, 7
    %v606 = vsub.s32 0, %v605
    %v607 = vrot.slane %v577, %v606
    %v608 = vlaneseq
    %v609 = vshrl.u32 %v608, 7
    %v610 = vsub.s32 0, %v609
    %v611 = vrot.slane %v579, %v610
    %v620 = vmul.f32 %v583, %v428
    %v621 = vmul.f32 %v587, %v428
    %v622 = vmul.f32 %v591, %v428
    %v623 = vmul.f32 %v595, %v428
    %v624 = vmul.f32 %v599, %v428
    %v625 = vmul.f32 %v603, %v428
    %v626 = vmul.f32 %v607, %v428
    %v627 = vmul.f32 %v611, %v428
    %v628 = vsub.f32 %v620, %v522
    %v629 = vsub.f32 %v621, %v523
    %v630 = vsub.f32 %v622, %v524
    %v631 = vsub.f32 %v623, %v525
    %v632 = vsub.f32 %v624, %v526
    %v633 = vsub.f32 %v625, %v527
    %v634 = vsub.f32 %v626, %v528
    %v635 = vsub.f32 %v627, %v529
    %v636 = vmul.f32 %v628, 1.442695
    %v637 = vpow.pop %v636
    %v638 = vmul.f32 %v629, 1.442695
    %v639 = vpow.pop %v638
    %v640 = vmul.f32 %v630, 1.442695
    %v641 = vpow.pop %v640
    %v642 = vmul.f32 %v631, 1.442695
    %v643 = vpow.pop %v642
    %v644 = vmul.f32 %v632, 1.442695
    %v645 = vpow.pop %v644
    %v646 = vmul.f32 %v633, 1.442695
    %v647 = vpow.pop %v646
    %v648 = vmul.f32 %v634, 1.442695
    %v649 = vpow.pop %v648
    %v650 = vmul.f32 %v635, 1.442695
    %v651 = vpow.pop %v650
    %652 = vadd.xlane.f32.xlu0 %v637
    %v653 = vpop.xlane.xlu0 %652
    %654 = vadd.xlane.f32.xlu0 %v639
    %v655 = vpop.xlane.xlu0 %654
    %656 = vadd.xlane.f32.xlu0 %v641
    %v657 = vpop.xlane.xlu0 %656
    %658 = vadd.xlane.f32.xlu0 %v643
    %v659 = vpop.xlane.xlu0 %658
    %660 = vadd.xlane.f32.xlu0 %v645
    %v661 = vpop.xlane.xlu0 %660
    %662 = vadd.xlane.f32.xlu0 %v647
    %v663 = vpop.xlane.xlu0 %662
    %664 = vadd.xlane.f32.xlu0 %v649
    %v665 = vpop.xlane.xlu0 %664
    %666 = vadd.xlane.f32.xlu0 %v651
    %v667 = vpop.xlane.xlu0 %666
    %v668 = vadd.f32 %v653, 1e-30
    %v669 = vadd.f32 %v655, 1e-30
    %v670 = vadd.f32 %v657, 1e-30
    %v671 = vadd.f32 %v659, 1e-30
    %v672 = vadd.f32 %v661, 1e-30
    %v673 = vadd.f32 %v663, 1e-30
    %v674 = vadd.f32 %v665, 1e-30
    %v675 = vadd.f32 %v667, 1e-30
    %v676 = vrcp.pop %v668
    %v677 = vrcp.pop %v669
    %v678 = vrcp.pop %v670
    %v679 = vrcp.pop %v671
    %v680 = vrcp.pop %v672
    %v681 = vrcp.pop %v673
    %v682 = vrcp.pop %v674
    %v683 = vrcp.pop %v675
    %v685 = vlaneseq
    %v686 = vshrl.u32 %v685, 7
    %v687 = vsub.s32 0, %v686
    %v688 = vrot.slane %v212, %v687
    %690 = vbcast.lane.b32.xlu0 %v688, 256
    %v691 = vpop.permute.xlu0 %690
    %v692 = vlaneseq
    %v693 = vshrl.u32 %v692, 7
    %v694 = vsub.s32 1, %v693
    %v695 = vrot.slane %v212, %v694
    %697 = vbcast.lane.b32.xlu0 %v695, 256
    %v698 = vpop.permute.xlu0 %697
    %v699 = vlaneseq
    %v700 = vshrl.u32 %v699, 7
    %v701 = vsub.s32 2, %v700
    %v702 = vrot.slane %v212, %v701
    %704 = vbcast.lane.b32.xlu0 %v702, 256
    %v705 = vpop.permute.xlu0 %704
    %v706 = vlaneseq
    %v707 = vshrl.u32 %v706, 7
    %v708 = vsub.s32 3, %v707
    %v709 = vrot.slane %v212, %v708
    %711 = vbcast.lane.b32.xlu0 %v709, 256
    %v712 = vpop.permute.xlu0 %711
    %v713 = vlaneseq
    %v714 = vshrl.u32 %v713, 7
    %v715 = vsub.s32 4, %v714
    %v716 = vrot.slane %v212, %v715
    %718 = vbcast.lane.b32.xlu0 %v716, 256
    %v719 = vpop.permute.xlu0 %718
    %v720 = vlaneseq
    %v721 = vshrl.u32 %v720, 7
    %v722 = vsub.s32 5, %v721
    %v723 = vrot.slane %v212, %v722
    %725 = vbcast.lane.b32.xlu0 %v723, 256
    %v726 = vpop.permute.xlu0 %725
    %v727 = vlaneseq
    %v728 = vshrl.u32 %v727, 7
    %v729 = vsub.s32 6, %v728
    %v730 = vrot.slane %v212, %v729
    %732 = vbcast.lane.b32.xlu0 %v730, 256
    %v733 = vpop.permute.xlu0 %732
    %v734 = vlaneseq
    %v735 = vshrl.u32 %v734, 7
    %v736 = vsub.s32 7, %v735
    %v737 = vrot.slane %v212, %v736
    %739 = vbcast.lane.b32.xlu0 %v737, 256
    %v740 = vpop.permute.xlu0 %739
    %v749 = vmul.f32 %v676, %v691
    %v750 = vmul.f32 %v677, %v698
    %v751 = vmul.f32 %v678, %v705
    %v752 = vmul.f32 %v679, %v712
    %v753 = vmul.f32 %v680, %v719
    %v754 = vmul.f32 %v681, %v726
    %v755 = vmul.f32 %v682, %v733
    %v756 = vmul.f32 %v683, %v740
    %v757 = vmul.f32 %v637, %v469
    %v758 = vmul.f32 %v639, %v469
    %v759 = vmul.f32 %v641, %v469
    %v760 = vmul.f32 %v643, %v469
    %v761 = vmul.f32 %v645, %v469
    %v762 = vmul.f32 %v647, %v469
    %v763 = vmul.f32 %v649, %v469
    %v764 = vmul.f32 %v651, %v469
    %766 = vset.pattern.permute.xlu0 0
    %767 = vperm.xlu0 %766, %v749
    %v768 = vpop.permute.xlu0 %767
    %771 = vset.pattern.permute.xlu0 0
    %772 = vperm.xlu0 %771, %v750
    %v773 = vpop.permute.xlu0 %772
    %776 = vset.pattern.permute.xlu0 0
    %777 = vperm.xlu0 %776, %v751
    %v778 = vpop.permute.xlu0 %777
    %781 = vset.pattern.permute.xlu0 0
    %782 = vperm.xlu0 %781, %v752
    %v783 = vpop.permute.xlu0 %782
    %786 = vset.pattern.permute.xlu0 0
    %787 = vperm.xlu0 %786, %v753
    %v788 = vpop.permute.xlu0 %787
    %791 = vset.pattern.permute.xlu0 0
    %792 = vperm.xlu0 %791, %v754
    %v793 = vpop.permute.xlu0 %792
    %796 = vset.pattern.permute.xlu0 0
    %797 = vperm.xlu0 %796, %v755
    %v798 = vpop.permute.xlu0 %797
    %801 = vset.pattern.permute.xlu0 0
    %802 = vperm.xlu0 %801, %v756
    %v803 = vpop.permute.xlu0 %802
    %v805 = vmul.f32 %v757, %v768
    %v806 = vmul.f32 %v758, %v773
    %v807 = vmul.f32 %v759, %v778
    %v808 = vmul.f32 %v760, %v783
    %v809 = vmul.f32 %v761, %v788
    %v810 = vmul.f32 %v762, %v793
    %v811 = vmul.f32 %v763, %v798
    %v812 = vmul.f32 %v764, %v803
    %v813 = vrot.slane %v805, 4
    %v814 = vadd.f32 %v805, %v813
    %v815 = vrot.slane %v814, 2
    %v816 = vadd.f32 %v814, %v815
    %v817 = vrot.slane %v816, 1
    %v818 = vadd.f32 %v816, %v817
    %v819 = vrot.slane %v806, 4
    %v820 = vadd.f32 %v806, %v819
    %v821 = vrot.slane %v820, 2
    %v822 = vadd.f32 %v820, %v821
    %v823 = vrot.slane %v822, 1
    %v824 = vadd.f32 %v822, %v823
    %v825 = vrot.slane %v807, 4
    %v826 = vadd.f32 %v807, %v825
    %v827 = vrot.slane %v826, 2
    %v828 = vadd.f32 %v826, %v827
    %v829 = vrot.slane %v828, 1
    %v830 = vadd.f32 %v828, %v829
    %v831 = vrot.slane %v808, 4
    %v832 = vadd.f32 %v808, %v831
    %v833 = vrot.slane %v832, 2
    %v834 = vadd.f32 %v832, %v833
    %v835 = vrot.slane %v834, 1
    %v836 = vadd.f32 %v834, %v835
    %v837 = vrot.slane %v809, 4
    %v838 = vadd.f32 %v809, %v837
    %v839 = vrot.slane %v838, 2
    %v840 = vadd.f32 %v838, %v839
    %v841 = vrot.slane %v840, 1
    %v842 = vadd.f32 %v840, %v841
    %v843 = vrot.slane %v810, 4
    %v844 = vadd.f32 %v810, %v843
    %v845 = vrot.slane %v844, 2
    %v846 = vadd.f32 %v844, %v845
    %v847 = vrot.slane %v846, 1
    %v848 = vadd.f32 %v846, %v847
    %v849 = vrot.slane %v811, 4
    %v850 = vadd.f32 %v811, %v849
    %v851 = vrot.slane %v850, 2
    %v852 = vadd.f32 %v850, %v851
    %v853 = vrot.slane %v852, 1
    %v854 = vadd.f32 %v852, %v853
    %v855 = vrot.slane %v812, 4
    %v856 = vadd.f32 %v812, %v855
    %v857 = vrot.slane %v856, 2
    %v858 = vadd.f32 %v856, %v857
    %v859 = vrot.slane %v858, 1
    %v860 = vadd.f32 %v858, %v859
    %v861 = vand.u32 2147483647, %v430
    %862 = vmax.xlane.f32.xlu0 %v861
    %v863 = vpop.xlane.xlu0 %862
    %v864 = vand.u32 2147483647, %v432
    %865 = vmax.xlane.f32.xlu0 %v864
    %v866 = vpop.xlane.xlu0 %865
    %v868 = vlaneseq
    %v869 = vshrl.u32 %v868, 7
    %v870 = vsub.s32 0, %v869
    %v871 = vrot.slane %v863, %v870
    %v872 = vlaneseq
    %v873 = vshrl.u32 %v872, 7
    %v874 = vsub.s32 1, %v873
    %v875 = vrot.slane %v863, %v874
    %v876 = vlaneseq
    %v877 = vshrl.u32 %v876, 7
    %v878 = vsub.s32 2, %v877
    %v879 = vrot.slane %v863, %v878
    %v880 = vlaneseq
    %v881 = vshrl.u32 %v880, 7
    %v882 = vsub.s32 3, %v881
    %v883 = vrot.slane %v863, %v882
    %v884 = vlaneseq
    %v885 = vshrl.u32 %v884, 7
    %v886 = vsub.s32 4, %v885
    %v887 = vrot.slane %v863, %v886
    %v888 = vlaneseq
    %v889 = vshrl.u32 %v888, 7
    %v890 = vsub.s32 5, %v889
    %v891 = vrot.slane %v863, %v890
    %v892 = vlaneseq
    %v893 = vshrl.u32 %v892, 7
    %v894 = vsub.s32 6, %v893
    %v895 = vrot.slane %v863, %v894
    %v896 = vlaneseq
    %v897 = vshrl.u32 %v896, 7
    %v898 = vsub.s32 7, %v897
    %v899 = vrot.slane %v863, %v898
    %v908 = vmul.f32 %v871, %v866
    %v909 = vmul.f32 %v875, %v866
    %v910 = vmul.f32 %v879, %v866
    %v911 = vmul.f32 %v883, %v866
    %v912 = vmul.f32 %v887, %v866
    %v913 = vmul.f32 %v891, %v866
    %v914 = vmul.f32 %v895, %v866
    %v915 = vmul.f32 %v899, %v866
    %v917 = vcombine.high %v430, %v430
    %v919 = vunpack.c.l.s4 1966171168
    %v920 = vunpack.c.0.s8 %v919
    %v921 = vlaneseq
    %v922 = vshrl.u32 %v921, 7
    %v923 = vsub.s32 %v920, %v922
    %v924 = vrot.slane %v430, %v923
    %v926 = vunpack.c.l.s4 1966171168
    %v927 = vunpack.c.0.s8 %v926
    %v928 = vlaneseq
    %v929 = vshrl.u32 %v928, 7
    %v930 = vsub.s32 %v927, %v929
    %v931 = vrot.slane %v917, %v930
    %v932 = vcombine.high %v924, %v924
    %v933 = vcombine.high %v931, %v931
    %v935 = vunpack.c.l.s4 1966171168
    %v936 = vunpack.c.0.s8 %v935
    %v937 = vlaneseq
    %v938 = vshrl.u32 %v937, 7
    %v939 = vsub.s32 %v936, %v938
    %v940 = vrot.slane %v924, %v939
    %v942 = vunpack.c.l.s4 1966171168
    %v943 = vunpack.c.0.s8 %v942
    %v944 = vlaneseq
    %v945 = vshrl.u32 %v944, 7
    %v946 = vsub.s32 %v943, %v945
    %v947 = vrot.slane %v931, %v946
    %v949 = vunpack.c.l.s4 1966171168
    %v950 = vunpack.c.0.s8 %v949
    %v951 = vlaneseq
    %v952 = vshrl.u32 %v951, 7
    %v953 = vsub.s32 %v950, %v952
    %v954 = vrot.slane %v932, %v953
    %v956 = vunpack.c.l.s4 1966171168
    %v957 = vunpack.c.0.s8 %v956
    %v958 = vlaneseq
    %v959 = vshrl.u32 %v958, 7
    %v960 = vsub.s32 %v957, %v959
    %v961 = vrot.slane %v933, %v960
    %v962 = vcombine.high %v940, %v940
    %v963 = vcombine.high %v947, %v947
    %v964 = vcombine.high %v954, %v954
    %v965 = vcombine.high %v961, %v961
    %v966 = vlaneseq
    %v967 = vshrl.u32 %v966, 7
    %v968 = vsub.s32 0, %v967
    %v969 = vrot.slane %v940, %v968
    %v970 = vlaneseq
    %v971 = vshrl.u32 %v970, 7
    %v972 = vsub.s32 0, %v971
    %v973 = vrot.slane %v954, %v972
    %v974 = vlaneseq
    %v975 = vshrl.u32 %v974, 7
    %v976 = vsub.s32 0, %v975
    %v977 = vrot.slane %v962, %v976
    %v978 = vlaneseq
    %v979 = vshrl.u32 %v978, 7
    %v980 = vsub.s32 0, %v979
    %v981 = vrot.slane %v964, %v980
    %v982 = vlaneseq
    %v983 = vshrl.u32 %v982, 7
    %v984 = vsub.s32 0, %v983
    %v985 = vrot.slane %v947, %v984
    %v986 = vlaneseq
    %v987 = vshrl.u32 %v986, 7
    %v988 = vsub.s32 0, %v987
    %v989 = vrot.slane %v961, %v988
    %v990 = vlaneseq
    %v991 = vshrl.u32 %v990, 7
    %v992 = vsub.s32 0, %v991
    %v993 = vrot.slane %v963, %v992
    %v994 = vlaneseq
    %v995 = vshrl.u32 %v994, 7
    %v996 = vsub.s32 0, %v995
    %v997 = vrot.slane %v965, %v996
    %v1006 = vmul.f32 %v969, %v432
    %v1007 = vmul.f32 %v973, %v432
    %v1008 = vmul.f32 %v977, %v432
    %v1009 = vmul.f32 %v981, %v432
    %v1010 = vmul.f32 %v985, %v432
    %v1011 = vmul.f32 %v989, %v432
    %v1012 = vmul.f32 %v993, %v432
    %v1013 = vmul.f32 %v997, %v432
    %v1014 = vsub.f32 %v1006, %v908
    %v1015 = vsub.f32 %v1007, %v909
    %v1016 = vsub.f32 %v1008, %v910
    %v1017 = vsub.f32 %v1009, %v911
    %v1018 = vsub.f32 %v1010, %v912
    %v1019 = vsub.f32 %v1011, %v913
    %v1020 = vsub.f32 %v1012, %v914
    %v1021 = vsub.f32 %v1013, %v915
    %v1022 = vmul.f32 %v1014, 1.442695
    %v1023 = vpow.pop %v1022
    %v1024 = vmul.f32 %v1015, 1.442695
    %v1025 = vpow.pop %v1024
    %v1026 = vmul.f32 %v1016, 1.442695
    %v1027 = vpow.pop %v1026
    %v1028 = vmul.f32 %v1017, 1.442695
    %v1029 = vpow.pop %v1028
    %v1030 = vmul.f32 %v1018, 1.442695
    %v1031 = vpow.pop %v1030
    %v1032 = vmul.f32 %v1019, 1.442695
    %v1033 = vpow.pop %v1032
    %v1034 = vmul.f32 %v1020, 1.442695
    %v1035 = vpow.pop %v1034
    %v1036 = vmul.f32 %v1021, 1.442695
    %v1037 = vpow.pop %v1036
    %1038 = vadd.xlane.f32.xlu0 %v1023
    %v1039 = vpop.xlane.xlu0 %1038
    %1040 = vadd.xlane.f32.xlu0 %v1025
    %v1041 = vpop.xlane.xlu0 %1040
    %1042 = vadd.xlane.f32.xlu0 %v1027
    %v1043 = vpop.xlane.xlu0 %1042
    %1044 = vadd.xlane.f32.xlu0 %v1029
    %v1045 = vpop.xlane.xlu0 %1044
    %1046 = vadd.xlane.f32.xlu0 %v1031
    %v1047 = vpop.xlane.xlu0 %1046
    %1048 = vadd.xlane.f32.xlu0 %v1033
    %v1049 = vpop.xlane.xlu0 %1048
    %1050 = vadd.xlane.f32.xlu0 %v1035
    %v1051 = vpop.xlane.xlu0 %1050
    %1052 = vadd.xlane.f32.xlu0 %v1037
    %v1053 = vpop.xlane.xlu0 %1052
    %v1054 = vadd.f32 %v1039, 1e-30
    %v1055 = vadd.f32 %v1041, 1e-30
    %v1056 = vadd.f32 %v1043, 1e-30
    %v1057 = vadd.f32 %v1045, 1e-30
    %v1058 = vadd.f32 %v1047, 1e-30
    %v1059 = vadd.f32 %v1049, 1e-30
    %v1060 = vadd.f32 %v1051, 1e-30
    %v1061 = vadd.f32 %v1053, 1e-30
    %v1062 = vrcp.pop %v1054
    %v1063 = vrcp.pop %v1055
    %v1064 = vrcp.pop %v1056
    %v1065 = vrcp.pop %v1057
    %v1066 = vrcp.pop %v1058
    %v1067 = vrcp.pop %v1059
    %v1068 = vrcp.pop %v1060
    %v1069 = vrcp.pop %v1061
    %v1070 = vmul.f32 %v1062, %v691
    %v1071 = vmul.f32 %v1063, %v698
    %v1072 = vmul.f32 %v1064, %v705
    %v1073 = vmul.f32 %v1065, %v712
    %v1074 = vmul.f32 %v1066, %v719
    %v1075 = vmul.f32 %v1067, %v726
    %v1076 = vmul.f32 %v1068, %v733
    %v1077 = vmul.f32 %v1069, %v740
    %v1078 = vmul.f32 %v1023, %v472
    %v1079 = vmul.f32 %v1025, %v472
    %v1080 = vmul.f32 %v1027, %v472
    %v1081 = vmul.f32 %v1029, %v472
    %v1082 = vmul.f32 %v1031, %v472
    %v1083 = vmul.f32 %v1033, %v472
    %v1084 = vmul.f32 %v1035, %v472
    %v1085 = vmul.f32 %v1037, %v472
    %1087 = vset.pattern.permute.xlu0 0
    %1088 = vperm.xlu0 %1087, %v1070
    %v1089 = vpop.permute.xlu0 %1088
    %1092 = vset.pattern.permute.xlu0 0
    %1093 = vperm.xlu0 %1092, %v1071
    %v1094 = vpop.permute.xlu0 %1093
    %1097 = vset.pattern.permute.xlu0 0
    %1098 = vperm.xlu0 %1097, %v1072
    %v1099 = vpop.permute.xlu0 %1098
    %1102 = vset.pattern.permute.xlu0 0
    %1103 = vperm.xlu0 %1102, %v1073
    %v1104 = vpop.permute.xlu0 %1103
    %1107 = vset.pattern.permute.xlu0 0
    %1108 = vperm.xlu0 %1107, %v1074
    %v1109 = vpop.permute.xlu0 %1108
    %1112 = vset.pattern.permute.xlu0 0
    %1113 = vperm.xlu0 %1112, %v1075
    %v1114 = vpop.permute.xlu0 %1113
    %1117 = vset.pattern.permute.xlu0 0
    %1118 = vperm.xlu0 %1117, %v1076
    %v1119 = vpop.permute.xlu0 %1118
    %1122 = vset.pattern.permute.xlu0 0
    %1123 = vperm.xlu0 %1122, %v1077
    %v1124 = vpop.permute.xlu0 %1123
    %v1126 = vmul.f32 %v1078, %v1089
    %v1127 = vmul.f32 %v1079, %v1094
    %v1128 = vmul.f32 %v1080, %v1099
    %v1129 = vmul.f32 %v1081, %v1104
    %v1130 = vmul.f32 %v1082, %v1109
    %v1131 = vmul.f32 %v1083, %v1114
    %v1132 = vmul.f32 %v1084, %v1119
    %v1133 = vmul.f32 %v1085, %v1124
    %v1134 = vrot.slane %v1126, 4
    %v1135 = vadd.f32 %v1126, %v1134
    %v1136 = vrot.slane %v1135, 2
    %v1137 = vadd.f32 %v1135, %v1136
    %v1138 = vrot.slane %v1137, 1
    %v1139 = vadd.f32 %v1137, %v1138
    %v1140 = vrot.slane %v1127, 4
    %v1141 = vadd.f32 %v1127, %v1140
    %v1142 = vrot.slane %v1141, 2
    %v1143 = vadd.f32 %v1141, %v1142
    %v1144 = vrot.slane %v1143, 1
    %v1145 = vadd.f32 %v1143, %v1144
    %v1146 = vrot.slane %v1128, 4
    %v1147 = vadd.f32 %v1128, %v1146
    %v1148 = vrot.slane %v1147, 2
    %v1149 = vadd.f32 %v1147, %v1148
    %v1150 = vrot.slane %v1149, 1
    %v1151 = vadd.f32 %v1149, %v1150
    %v1152 = vrot.slane %v1129, 4
    %v1153 = vadd.f32 %v1129, %v1152
    %v1154 = vrot.slane %v1153, 2
    %v1155 = vadd.f32 %v1153, %v1154
    %v1156 = vrot.slane %v1155, 1
    %v1157 = vadd.f32 %v1155, %v1156
    %v1158 = vrot.slane %v1130, 4
    %v1159 = vadd.f32 %v1130, %v1158
    %v1160 = vrot.slane %v1159, 2
    %v1161 = vadd.f32 %v1159, %v1160
    %v1162 = vrot.slane %v1161, 1
    %v1163 = vadd.f32 %v1161, %v1162
    %v1164 = vrot.slane %v1131, 4
    %v1165 = vadd.f32 %v1131, %v1164
    %v1166 = vrot.slane %v1165, 2
    %v1167 = vadd.f32 %v1165, %v1166
    %v1168 = vrot.slane %v1167, 1
    %v1169 = vadd.f32 %v1167, %v1168
    %v1170 = vrot.slane %v1132, 4
    %v1171 = vadd.f32 %v1132, %v1170
    %v1172 = vrot.slane %v1171, 2
    %v1173 = vadd.f32 %v1171, %v1172
    %v1174 = vrot.slane %v1173, 1
    %v1175 = vadd.f32 %v1173, %v1174
    %v1176 = vrot.slane %v1133, 4
    %v1177 = vadd.f32 %v1133, %v1176
    %v1178 = vrot.slane %v1177, 2
    %v1179 = vadd.f32 %v1177, %v1178
    %v1180 = vrot.slane %v1179, 1
    %v1181 = vadd.f32 %v1179, %v1180
    %vm1190 = vcmask 1041409
    %v1191 = vsel %vm1190, %v824, %v818
    %vm1192 = vcmask 1042434
    %v1193 = vsel %vm1192, %v830, %v1191
    %vm1194 = vcmask 1043459
    %v1195 = vsel %vm1194, %v836, %v1193
    %vm1196 = vcmask 1044484
    %v1197 = vsel %vm1196, %v842, %v1195
    %vm1198 = vcmask 1045509
    %v1199 = vsel %vm1198, %v848, %v1197
    %vm1200 = vcmask 1046534
    %v1201 = vsel %vm1200, %v854, %v1199
    %vm1202 = vcmask 1047559
    %v1203 = vsel %vm1202, %v860, %v1201
    %v1213 = vsel %vm1190, %v1145, %v1139
    %v1214 = vsel %vm1192, %v1151, %v1213
    %v1215 = vsel %vm1194, %v1157, %v1214
    %v1216 = vsel %vm1196, %v1163, %v1215
    %v1217 = vsel %vm1198, %v1169, %v1216
    %v1218 = vsel %vm1200, %v1175, %v1217
    %v1219 = vsel %vm1202, %v1181, %v1218
    %v1221 = vpack.c.bf16 %v1219, %v1203
    %s1222 = scalar_lea.vmem [#allocation4], 192
    %v1223 = vld [vmem:[%s1222] sm:$0xff]
    %v1224 = vld [vmem:[%s1222 + $0x8] sm:$0xf]
    %v1225 = vld [vmem:[%s1222 + $0xc] sm:$0xff]
    %v1226 = vld [vmem:[%s1222 + $0x14] sm:$0xf]
    %v1227 = vld [vmem:[%s1222 + $0x18] sm:$0xff]
    %v1228 = vld [vmem:[%s1222 + $0x20] sm:$0xf]
    %v1229 = vld [vmem:[%s1222 + $0x24] sm:$0xff]
    %v1230 = vld [vmem:[%s1222 + $0x2c] sm:$0xf]
    %v1231 = vld [vmem:[%s1222 + $0x30] sm:$0xff]
    %v1232 = vld [vmem:[%s1222 + $0x38] sm:$0xf]
    %v1233 = vld [vmem:[%s1222 + $0x3c] sm:$0xff]
    %v1234 = vld [vmem:[%s1222 + $0x44] sm:$0xf]
    %v1235 = vld [vmem:[%s1222 + $0x48] sm:$0xff]
    %v1236 = vld [vmem:[%s1222 + $0x50] sm:$0xf]
    %v1237 = vld [vmem:[%s1222 + $0x54] sm:$0xff]
    %v1238 = vld [vmem:[%s1222 + $0x5c] sm:$0xf]
    %v1239 = vld [vmem:[%s1222 + $0x60] sm:$0xff]
    %v1240 = vld [vmem:[%s1222 + $0x68] sm:$0xf]
    %v1241 = vld [vmem:[%s1222 + $0x6c] sm:$0xff]
    %v1242 = vld [vmem:[%s1222 + $0x74] sm:$0xf]
    %v1243 = vld [vmem:[%s1222 + $0x78] sm:$0xff]
    %v1244 = vld [vmem:[%s1222 + $0x80] sm:$0xf]
    %v1245 = vld [vmem:[%s1222 + $0x84] sm:$0xff]
    %v1246 = vld [vmem:[%s1222 + $0x8c] sm:$0xf]
    %v1247 = vld [vmem:[%s1222 + $0x90] sm:$0xff]
    %v1248 = vld [vmem:[%s1222 + $0x98] sm:$0xf]
    %v1249 = vld [vmem:[%s1222 + $0x9c] sm:$0xff]
    %v1250 = vld [vmem:[%s1222 + $0xa4] sm:$0xf]
    %v1251 = vld [vmem:[%s1222 + $0xa8] sm:$0xff]
    %v1252 = vld [vmem:[%s1222 + $0xb0] sm:$0xf]
    %v1253 = vld [vmem:[%s1222 + $0xb4] sm:$0xff]
    %v1254 = vld [vmem:[%s1222 + $0xbc] sm:$0xf]
    %s1255 = scalar_lea.vmem [#allocation6], 1
    %v1256 = vld [vmem:[%s1255] ss:$4 sm:$0x7]
    %v1258 = vlaneseq
    %v1259 = vshrl.u32 %v1258, 7
    %v1260 = vsub.s32 0, %v1259
    %v1261 = vrot.slane %v1256, %v1260
    %v1262 = vlaneseq
    %v1263 = vshrl.u32 %v1262, 7
    %v1264 = vsub.s32 1, %v1263
    %v1265 = vrot.slane %v1256, %v1264
    %v1266 = vlaneseq
    %v1267 = vshrl.u32 %v1266, 7
    %v1268 = vsub.s32 2, %v1267
    %v1269 = vrot.slane %v1256, %v1268
    %v1305 = vunpack.c.l.b16 %v1223
    %v1306 = vunpack.c.h.b16 %v1223
    %v1307 = vunpack.c.l.b16 %v1224
    %v1308 = vunpack.c.l.b16 %v1225
    %v1309 = vunpack.c.h.b16 %v1225
    %v1310 = vunpack.c.l.b16 %v1226
    %v1311 = vunpack.c.l.b16 %v1227
    %v1312 = vunpack.c.h.b16 %v1227
    %v1313 = vunpack.c.l.b16 %v1228
    %v1314 = vunpack.c.l.b16 %v1229
    %v1315 = vunpack.c.h.b16 %v1229
    %v1316 = vunpack.c.l.b16 %v1230
    %v1317 = vunpack.c.l.b16 %v1231
    %v1318 = vunpack.c.h.b16 %v1231
    %v1319 = vunpack.c.l.b16 %v1232
    %v1320 = vunpack.c.l.b16 %v1233
    %v1321 = vunpack.c.h.b16 %v1233
    %v1322 = vunpack.c.l.b16 %v1234
    %v1323 = vunpack.c.l.b16 %v1235
    %v1324 = vunpack.c.h.b16 %v1235
    %v1325 = vunpack.c.l.b16 %v1236
    %v1326 = vunpack.c.l.b16 %v1237
    %v1327 = vunpack.c.h.b16 %v1237
    %v1328 = vunpack.c.l.b16 %v1238
    %v1329 = vunpack.c.l.b16 %v1239
    %v1330 = vunpack.c.h.b16 %v1239
    %v1331 = vunpack.c.l.b16 %v1240
    %v1332 = vunpack.c.l.b16 %v1241
    %v1333 = vunpack.c.h.b16 %v1241
    %v1334 = vunpack.c.l.b16 %v1242
    %v1335 = vunpack.c.l.b16 %v1243
    %v1336 = vunpack.c.h.b16 %v1243
    %v1337 = vunpack.c.l.b16 %v1244
    %v1338 = vunpack.c.l.b16 %v1245
    %v1339 = vunpack.c.h.b16 %v1245
    %v1340 = vunpack.c.l.b16 %v1246
    %v1341 = vunpack.c.l.b16 %v1247
    %v1342 = vunpack.c.h.b16 %v1247
    %v1343 = vunpack.c.l.b16 %v1248
    %v1344 = vunpack.c.l.b16 %v1249
    %v1345 = vunpack.c.h.b16 %v1249
    %v1346 = vunpack.c.l.b16 %v1250
    %v1347 = vunpack.c.l.b16 %v1251
    %v1348 = vunpack.c.h.b16 %v1251
    %v1349 = vunpack.c.l.b16 %v1252
    %v1350 = vunpack.c.l.b16 %v1253
    %v1351 = vunpack.c.h.b16 %v1253
    %v1352 = vunpack.c.l.b16 %v1254
    %v1353 = vpack.c.b16 %v1308, %v1305
    %v1354 = vpack.c.b16 %v1309, %v1306
    %v1355 = vpack.c.b16 %v1310, %v1307
    %v1356 = vpack.c.b16 %v1314, %v1311
    %v1357 = vpack.c.b16 %v1315, %v1312
    %v1358 = vpack.c.b16 %v1316, %v1313
    %v1359 = vpack.c.b16 %v1320, %v1317
    %v1360 = vpack.c.b16 %v1321, %v1318
    %v1361 = vpack.c.b16 %v1322, %v1319
    %v1362 = vpack.c.b16 %v1326, %v1323
    %v1363 = vpack.c.b16 %v1327, %v1324
    %v1364 = vpack.c.b16 %v1328, %v1325
    %v1365 = vpack.c.b16 %v1332, %v1329
    %v1366 = vpack.c.b16 %v1333, %v1330
    %v1367 = vpack.c.b16 %v1334, %v1331
    %v1368 = vpack.c.b16 %v1338, %v1335
    %v1369 = vpack.c.b16 %v1339, %v1336
    %v1370 = vpack.c.b16 %v1340, %v1337
    %v1371 = vpack.c.b16 %v1344, %v1341
    %v1372 = vpack.c.b16 %v1345, %v1342
    %v1373 = vpack.c.b16 %v1346, %v1343
    %v1374 = vpack.c.b16 %v1350, %v1347
    %v1375 = vpack.c.b16 %v1351, %v1348
    %v1376 = vpack.c.b16 %v1352, %v1349
    %1401 = vmatprep.subr.bf16.mxu0 %v1354
    %1402 = vmatpush1.bf16.msra.mxu0 %v1353
    %1403 = vmatprep.subr.bf16.mxu0 %v1357
    %1404 = vmatpush1.bf16.msra.mxu0 %v1356
    %1405 = vmatprep.subr.bf16.mxu0 %v1360
    %1406 = vmatpush1.bf16.msra.mxu0 %v1359
    %1407 = vmatprep.subr.bf16.mxu0 %v1363
    %1408 = vmatpush1.bf16.msra.mxu0 %v1362
    %1409 = vmatprep.subr.bf16.mxu0 %v1366
    %1410 = vmatpush1.bf16.msra.mxu0 %v1365
    %1411 = vmatprep.subr.bf16.mxu0 %v1369
    %1412 = vmatpush1.bf16.msra.mxu0 %v1368
    %1413 = vmatprep.subr.bf16.mxu0 %v1372
    %1414 = vmatpush1.bf16.msra.mxu0 %v1371
    %1415 = vmatprep.subr.bf16.mxu0 %v1375
    %1416 = vmatpush1.bf16.msra.mxu0 %v1374
    %1417 = vmatprep.subr.bf16.mxu0 0
    %1418 = vmatpush1.bf16.msra.mxu0 0
    %1419 = vmatprep.subr.bf16.mxu0 0
    %1420 = vmatpush1.bf16.msra.mxu0 0
    %1421 = vmatprep.subr.bf16.mxu0 0
    %1422 = vmatpush1.bf16.msra.mxu0 0
    %1423 = vmatprep.subr.bf16.mxu0 0
    %1424 = vmatpush1.bf16.msra.mxu0 0
    %1425 = vmatprep.subr.bf16.mxu0 0
    %1426 = vmatpush1.bf16.msra.mxu0 0
    %1427 = vmatprep.subr.bf16.mxu0 0
    %1428 = vmatpush1.bf16.msra.mxu0 0
    %1429 = vmatprep.subr.bf16.mxu0 0
    %1430 = vmatpush1.bf16.msra.mxu0 0
    %1431 = vmatprep.subr.bf16.mxu0 0
    %1432 = vmatpush1.bf16.msra.mxu0 0
    %1433 = vmatprep.mubr.bf16.mxu0 0
    %1434 = vmatmul.mubr.bf16.gmra.mrb[0].mxu0 %v1221
    %v1435 = vpop.f32.mrb[0].mxu0
    %v1436 = vpop.f32.mrb[0].mxu0
    %v1437 = vadd.f32 %v1265, %v1436
    %v1438 = vpop.f32.mrb[0].mxu0
    %v1439 = vadd.f32 %v1261, %v1438
    %v1440 = vpop.f32.mrb[0].mxu0
    %1441 = vdwg.mxu0
    %1442 = vmatprep.subr.bf16.mxu0 0
    %1443 = vmatpush1.bf16.msra.mxu0 %v1355
    %1444 = vmatprep.subr.bf16.mxu0 0
    %1445 = vmatpush1.bf16.msra.mxu0 %v1358
    %1446 = vmatprep.subr.bf16.mxu0 0
    %1447 = vmatpush1.bf16.msra.mxu0 %v1361
    %1448 = vmatprep.subr.bf16.mxu0 0
    %1449 = vmatpush1.bf16.msra.mxu0 %v1364
    %1450 = vmatprep.subr.bf16.mxu0 0
    %1451 = vmatpush1.bf16.msra.mxu0 %v1367
    %1452 = vmatprep.subr.bf16.mxu0 0
    %1453 = vmatpush1.bf16.msra.mxu0 %v1370
    %1454 = vmatprep.subr.bf16.mxu0 0
    %1455 = vmatpush1.bf16.msra.mxu0 %v1373
    %1456 = vmatprep.subr.bf16.mxu0 0
    %1457 = vmatpush1.bf16.msra.mxu0 %v1376
    %1458 = vmatprep.subr.bf16.mxu0 0
    %1459 = vmatpush1.bf16.msra.mxu0 0
    %1460 = vmatprep.subr.bf16.mxu0 0
    %1461 = vmatpush1.bf16.msra.mxu0 0
    %1462 = vmatprep.subr.bf16.mxu0 0
    %1463 = vmatpush1.bf16.msra.mxu0 0
    %1464 = vmatprep.subr.bf16.mxu0 0
    %1465 = vmatpush1.bf16.msra.mxu0 0
    %1466 = vmatprep.subr.bf16.mxu0 0
    %1467 = vmatpush1.bf16.msra.mxu0 0
    %1468 = vmatprep.subr.bf16.mxu0 0
    %1469 = vmatpush1.bf16.msra.mxu0 0
    %1470 = vmatprep.subr.bf16.mxu0 0
    %1471 = vmatpush1.bf16.msra.mxu0 0
    %1472 = vmatprep.subr.bf16.mxu0 0
    %1473 = vmatpush1.bf16.msra.mxu0 0
    %1474 = vmatprep.mubr.bf16.mxu0 0
    %1475 = vmatmul.mubr.bf16.gmra.mrb[0].mxu0 %v1221
    %v1476 = vpop.f32.mrb[0].mxu0
    %v1477 = vadd.f32 %v1269, %v1476
    %v1478 = vpop.f32.mrb[0].mxu0
    %v1479 = vpop.f32.mrb[0].mxu0
    %v1480 = vpop.f32.mrb[0].mxu0
    %1481 = vdwg.mxu0
    %v1482 = vand.u32 2147483647, %v1439
    %1483 = vmax.xlane.f32.xlu0 %v1482
    %v1484 = vpop.xlane.xlu0 %1483
    %v1485 = vand.u32 2147483647, %v1437
    %1486 = vmax.xlane.f32.xlu0 %v1485
    %v1487 = vpop.xlane.xlu0 %1486
    %v1489 = vlaneseq
    %v1490 = vshrl.u32 %v1489, 7
    %v1491 = vsub.s32 0, %v1490
    %v1492 = vrot.slane %v1484, %v1491
    %v1493 = vlaneseq
    %v1494 = vshrl.u32 %v1493, 7
    %v1495 = vsub.s32 1, %v1494
    %v1496 = vrot.slane %v1484, %v1495
    %v1497 = vlaneseq
    %v1498 = vshrl.u32 %v1497, 7
    %v1499 = vsub.s32 2, %v1498
    %v1500 = vrot.slane %v1484, %v1499
    %v1501 = vlaneseq
    %v1502 = vshrl.u32 %v1501, 7
    %v1503 = vsub.s32 3, %v1502
    %v1504 = vrot.slane %v1484, %v1503
    %v1505 = vlaneseq
    %v1506 = vshrl.u32 %v1505, 7
    %v1507 = vsub.s32 4, %v1506
    %v1508 = vrot.slane %v1484, %v1507
    %v1509 = vlaneseq
    %v1510 = vshrl.u32 %v1509, 7
    %v1511 = vsub.s32 5, %v1510
    %v1512 = vrot.slane %v1484, %v1511
    %v1513 = vlaneseq
    %v1514 = vshrl.u32 %v1513, 7
    %v1515 = vsub.s32 6, %v1514
    %v1516 = vrot.slane %v1484, %v1515
    %v1517 = vlaneseq
    %v1518 = vshrl.u32 %v1517, 7
    %v1519 = vsub.s32 7, %v1518
    %v1520 = vrot.slane %v1484, %v1519
    %v1529 = vmul.f32 %v1492, %v1487
    %v1530 = vmul.f32 %v1496, %v1487
    %v1531 = vmul.f32 %v1500, %v1487
    %v1532 = vmul.f32 %v1504, %v1487
    %v1533 = vmul.f32 %v1508, %v1487
    %v1534 = vmul.f32 %v1512, %v1487
    %v1535 = vmul.f32 %v1516, %v1487
    %v1536 = vmul.f32 %v1520, %v1487
    %v1538 = vcombine.high %v1439, %v1439
    %v1540 = vunpack.c.l.s4 1966171168
    %v1541 = vunpack.c.0.s8 %v1540
    %v1542 = vlaneseq
    %v1543 = vshrl.u32 %v1542, 7
    %v1544 = vsub.s32 %v1541, %v1543
    %v1545 = vrot.slane %v1439, %v1544
    %v1547 = vunpack.c.l.s4 1966171168
    %v1548 = vunpack.c.0.s8 %v1547
    %v1549 = vlaneseq
    %v1550 = vshrl.u32 %v1549, 7
    %v1551 = vsub.s32 %v1548, %v1550
    %v1552 = vrot.slane %v1538, %v1551
    %v1553 = vcombine.high %v1545, %v1545
    %v1554 = vcombine.high %v1552, %v1552
    %v1556 = vunpack.c.l.s4 1966171168
    %v1557 = vunpack.c.0.s8 %v1556
    %v1558 = vlaneseq
    %v1559 = vshrl.u32 %v1558, 7
    %v1560 = vsub.s32 %v1557, %v1559
    %v1561 = vrot.slane %v1545, %v1560
    %v1563 = vunpack.c.l.s4 1966171168
    %v1564 = vunpack.c.0.s8 %v1563
    %v1565 = vlaneseq
    %v1566 = vshrl.u32 %v1565, 7
    %v1567 = vsub.s32 %v1564, %v1566
    %v1568 = vrot.slane %v1552, %v1567
    %v1570 = vunpack.c.l.s4 1966171168
    %v1571 = vunpack.c.0.s8 %v1570
    %v1572 = vlaneseq
    %v1573 = vshrl.u32 %v1572, 7
    %v1574 = vsub.s32 %v1571, %v1573
    %v1575 = vrot.slane %v1553, %v1574
    %v1577 = vunpack.c.l.s4 1966171168
    %v1578 = vunpack.c.0.s8 %v1577
    %v1579 = vlaneseq
    %v1580 = vshrl.u32 %v1579, 7
    %v1581 = vsub.s32 %v1578, %v1580
    %v1582 = vrot.slane %v1554, %v1581
    %v1583 = vcombine.high %v1561, %v1561
    %v1584 = vcombine.high %v1568, %v1568
    %v1585 = vcombine.high %v1575, %v1575
    %v1586 = vcombine.high %v1582, %v1582
    %v1587 = vlaneseq
    %v1588 = vshrl.u32 %v1587, 7
    %v1589 = vsub.s32 0, %v1588
    %v1590 = vrot.slane %v1561, %v1589
    %v1591 = vlaneseq
    %v1592 = vshrl.u32 %v1591, 7
    %v1593 = vsub.s32 0, %v1592
    %v1594 = vrot.slane %v1575, %v1593
    %v1595 = vlaneseq
    %v1596 = vshrl.u32 %v1595, 7
    %v1597 = vsub.s32 0, %v1596
    %v1598 = vrot.slane %v1583, %v1597
    %v1599 = vlaneseq
    %v1600 = vshrl.u32 %v1599, 7
    %v1601 = vsub.s32 0, %v1600
    %v1602 = vrot.slane %v1585, %v1601
    %v1603 = vlaneseq
    %v1604 = vshrl.u32 %v1603, 7
    %v1605 = vsub.s32 0, %v1604
    %v1606 = vrot.slane %v1568, %v1605
    %v1607 = vlaneseq
    %v1608 = vshrl.u32 %v1607, 7
    %v1609 = vsub.s32 0, %v1608
    %v1610 = vrot.slane %v1582, %v1609
    %v1611 = vlaneseq
    %v1612 = vshrl.u32 %v1611, 7
    %v1613 = vsub.s32 0, %v1612
    %v1614 = vrot.slane %v1584, %v1613
    %v1615 = vlaneseq
    %v1616 = vshrl.u32 %v1615, 7
    %v1617 = vsub.s32 0, %v1616
    %v1618 = vrot.slane %v1586, %v1617
    %v1627 = vmul.f32 %v1590, %v1437
    %v1628 = vmul.f32 %v1594, %v1437
    %v1629 = vmul.f32 %v1598, %v1437
    %v1630 = vmul.f32 %v1602, %v1437
    %v1631 = vmul.f32 %v1606, %v1437
    %v1632 = vmul.f32 %v1610, %v1437
    %v1633 = vmul.f32 %v1614, %v1437
    %v1634 = vmul.f32 %v1618, %v1437
    %v1635 = vsub.f32 %v1627, %v1529
    %v1636 = vsub.f32 %v1628, %v1530
    %v1637 = vsub.f32 %v1629, %v1531
    %v1638 = vsub.f32 %v1630, %v1532
    %v1639 = vsub.f32 %v1631, %v1533
    %v1640 = vsub.f32 %v1632, %v1534
    %v1641 = vsub.f32 %v1633, %v1535
    %v1642 = vsub.f32 %v1634, %v1536
    %v1643 = vmul.f32 %v1635, 1.442695
    %v1644 = vpow.pop %v1643
    %v1645 = vmul.f32 %v1636, 1.442695
    %v1646 = vpow.pop %v1645
    %v1647 = vmul.f32 %v1637, 1.442695
    %v1648 = vpow.pop %v1647
    %v1649 = vmul.f32 %v1638, 1.442695
    %v1650 = vpow.pop %v1649
    %v1651 = vmul.f32 %v1639, 1.442695
    %v1652 = vpow.pop %v1651
    %v1653 = vmul.f32 %v1640, 1.442695
    %v1654 = vpow.pop %v1653
    %v1655 = vmul.f32 %v1641, 1.442695
    %v1656 = vpow.pop %v1655
    %v1657 = vmul.f32 %v1642, 1.442695
    %v1658 = vpow.pop %v1657
    %1659 = vadd.xlane.f32.xlu0 %v1644
    %v1660 = vpop.xlane.xlu0 %1659
    %1661 = vadd.xlane.f32.xlu0 %v1646
    %v1662 = vpop.xlane.xlu0 %1661
    %1663 = vadd.xlane.f32.xlu0 %v1648
    %v1664 = vpop.xlane.xlu0 %1663
    %1665 = vadd.xlane.f32.xlu0 %v1650
    %v1666 = vpop.xlane.xlu0 %1665
    %1667 = vadd.xlane.f32.xlu0 %v1652
    %v1668 = vpop.xlane.xlu0 %1667
    %1669 = vadd.xlane.f32.xlu0 %v1654
    %v1670 = vpop.xlane.xlu0 %1669
    %1671 = vadd.xlane.f32.xlu0 %v1656
    %v1672 = vpop.xlane.xlu0 %1671
    %1673 = vadd.xlane.f32.xlu0 %v1658
    %v1674 = vpop.xlane.xlu0 %1673
    %v1675 = vadd.f32 %v1660, 1e-30
    %v1676 = vadd.f32 %v1662, 1e-30
    %v1677 = vadd.f32 %v1664, 1e-30
    %v1678 = vadd.f32 %v1666, 1e-30
    %v1679 = vadd.f32 %v1668, 1e-30
    %v1680 = vadd.f32 %v1670, 1e-30
    %v1681 = vadd.f32 %v1672, 1e-30
    %v1682 = vadd.f32 %v1674, 1e-30
    %v1683 = vrcp.pop %v1675
    %v1684 = vrcp.pop %v1676
    %v1685 = vrcp.pop %v1677
    %v1686 = vrcp.pop %v1678
    %v1687 = vrcp.pop %v1679
    %v1688 = vrcp.pop %v1680
    %v1689 = vrcp.pop %v1681
    %v1690 = vrcp.pop %v1682
    %v1691 = vmul.f32 %v1644, %v1477
    %v1692 = vmul.f32 %v1646, %v1477
    %v1693 = vmul.f32 %v1648, %v1477
    %v1694 = vmul.f32 %v1650, %v1477
    %v1695 = vmul.f32 %v1652, %v1477
    %v1696 = vmul.f32 %v1654, %v1477
    %v1697 = vmul.f32 %v1656, %v1477
    %v1698 = vmul.f32 %v1658, %v1477
    %v1699 = vmul.f32 %v1691, %v1683
    %v1700 = vmul.f32 %v1692, %v1684
    %v1701 = vmul.f32 %v1693, %v1685
    %v1702 = vmul.f32 %v1694, %v1686
    %v1703 = vmul.f32 %v1695, %v1687
    %v1704 = vmul.f32 %v1696, %v1688
    %v1705 = vmul.f32 %v1697, %v1689
    %v1706 = vmul.f32 %v1698, %v1690
    %v1707 = vrot.slane %v1699, 4
    %v1708 = vadd.f32 %v1699, %v1707
    %v1709 = vrot.slane %v1708, 2
    %v1710 = vadd.f32 %v1708, %v1709
    %v1711 = vrot.slane %v1710, 1
    %v1712 = vadd.f32 %v1710, %v1711
    %v1713 = vrot.slane %v1700, 4
    %v1714 = vadd.f32 %v1700, %v1713
    %v1715 = vrot.slane %v1714, 2
    %v1716 = vadd.f32 %v1714, %v1715
    %v1717 = vrot.slane %v1716, 1
    %v1718 = vadd.f32 %v1716, %v1717
    %v1719 = vrot.slane %v1701, 4
    %v1720 = vadd.f32 %v1701, %v1719
    %v1721 = vrot.slane %v1720, 2
    %v1722 = vadd.f32 %v1720, %v1721
    %v1723 = vrot.slane %v1722, 1
    %v1724 = vadd.f32 %v1722, %v1723
    %v1725 = vrot.slane %v1702, 4
    %v1726 = vadd.f32 %v1702, %v1725
    %v1727 = vrot.slane %v1726, 2
    %v1728 = vadd.f32 %v1726, %v1727
    %v1729 = vrot.slane %v1728, 1
    %v1730 = vadd.f32 %v1728, %v1729
    %v1731 = vrot.slane %v1703, 4
    %v1732 = vadd.f32 %v1703, %v1731
    %v1733 = vrot.slane %v1732, 2
    %v1734 = vadd.f32 %v1732, %v1733
    %v1735 = vrot.slane %v1734, 1
    %v1736 = vadd.f32 %v1734, %v1735
    %v1737 = vrot.slane %v1704, 4
    %v1738 = vadd.f32 %v1704, %v1737
    %v1739 = vrot.slane %v1738, 2
    %v1740 = vadd.f32 %v1738, %v1739
    %v1741 = vrot.slane %v1740, 1
    %v1742 = vadd.f32 %v1740, %v1741
    %v1743 = vrot.slane %v1705, 4
    %v1744 = vadd.f32 %v1705, %v1743
    %v1745 = vrot.slane %v1744, 2
    %v1746 = vadd.f32 %v1744, %v1745
    %v1747 = vrot.slane %v1746, 1
    %v1748 = vadd.f32 %v1746, %v1747
    %v1749 = vrot.slane %v1706, 4
    %v1750 = vadd.f32 %v1706, %v1749
    %v1751 = vrot.slane %v1750, 2
    %v1752 = vadd.f32 %v1750, %v1751
    %v1753 = vrot.slane %v1752, 1
    %v1754 = vadd.f32 %v1752, %v1753
    %v1763 = vsel %vm1190, %v1718, %v1712
    %v1764 = vsel %vm1192, %v1724, %v1763
    %v1765 = vsel %vm1194, %v1730, %v1764
    %v1766 = vsel %vm1196, %v1736, %v1765
    %v1767 = vsel %vm1198, %v1742, %v1766
    %v1768 = vsel %vm1200, %v1748, %v1767
    %v1769 = vsel %vm1202, %v1754, %v1768
    %v1771 = vadd.f32 %v1219, %v1769
    %v1772 = vpack.c.bf16 %v1771, %v1203
    %s1773 = scalar_lea.vmem [#allocation4], 384
    %v1774 = vld [vmem:[%s1773] sm:$0xff]
    %v1775 = vld [vmem:[%s1773 + $0x8] sm:$0xf]
    %v1776 = vld [vmem:[%s1773 + $0xc] sm:$0xff]
    %v1777 = vld [vmem:[%s1773 + $0x14] sm:$0xf]
    %v1778 = vld [vmem:[%s1773 + $0x18] sm:$0xff]
    %v1779 = vld [vmem:[%s1773 + $0x20] sm:$0xf]
    %v1780 = vld [vmem:[%s1773 + $0x24] sm:$0xff]
    %v1781 = vld [vmem:[%s1773 + $0x2c] sm:$0xf]
    %v1782 = vld [vmem:[%s1773 + $0x30] sm:$0xff]
    %v1783 = vld [vmem:[%s1773 + $0x38] sm:$0xf]
    %v1784 = vld [vmem:[%s1773 + $0x3c] sm:$0xff]
    %v1785 = vld [vmem:[%s1773 + $0x44] sm:$0xf]
    %v1786 = vld [vmem:[%s1773 + $0x48] sm:$0xff]
    %v1787 = vld [vmem:[%s1773 + $0x50] sm:$0xf]
    %v1788 = vld [vmem:[%s1773 + $0x54] sm:$0xff]
    %v1789 = vld [vmem:[%s1773 + $0x5c] sm:$0xf]
    %v1790 = vld [vmem:[%s1773 + $0x60] sm:$0xff]
    %v1791 = vld [vmem:[%s1773 + $0x68] sm:$0xf]
    %v1792 = vld [vmem:[%s1773 + $0x6c] sm:$0xff]
    %v1793 = vld [vmem:[%s1773 + $0x74] sm:$0xf]
    %v1794 = vld [vmem:[%s1773 + $0x78] sm:$0xff]
    %v1795 = vld [vmem:[%s1773 + $0x80] sm:$0xf]
    %v1796 = vld [vmem:[%s1773 + $0x84] sm:$0xff]
    %v1797 = vld [vmem:[%s1773 + $0x8c] sm:$0xf]
    %v1798 = vld [vmem:[%s1773 + $0x90] sm:$0xff]
    %v1799 = vld [vmem:[%s1773 + $0x98] sm:$0xf]
    %v1800 = vld [vmem:[%s1773 + $0x9c] sm:$0xff]
    %v1801 = vld [vmem:[%s1773 + $0xa4] sm:$0xf]
    %v1802 = vld [vmem:[%s1773 + $0xa8] sm:$0xff]
    %v1803 = vld [vmem:[%s1773 + $0xb0] sm:$0xf]
    %v1804 = vld [vmem:[%s1773 + $0xb4] sm:$0xff]
    %v1805 = vld [vmem:[%s1773 + $0xbc] sm:$0xf]
    %s1806 = scalar_lea.vmem [#allocation6], 2
    %v1807 = vld [vmem:[%s1806] ss:$4 sm:$0x7]
    %v1809 = vlaneseq
    %v1810 = vshrl.u32 %v1809, 7
    %v1811 = vsub.s32 0, %v1810
    %v1812 = vrot.slane %v1807, %v1811
    %v1813 = vlaneseq
    %v1814 = vshrl.u32 %v1813, 7
    %v1815 = vsub.s32 1, %v1814
    %v1816 = vrot.slane %v1807, %v1815
    %v1817 = vlaneseq
    %v1818 = vshrl.u32 %v1817, 7
    %v1819 = vsub.s32 2, %v1818
    %v1820 = vrot.slane %v1807, %v1819
    %v1856 = vunpack.c.l.b16 %v1774
    %v1857 = vunpack.c.h.b16 %v1774
    %v1858 = vunpack.c.l.b16 %v1775
    %v1859 = vunpack.c.l.b16 %v1776
    %v1860 = vunpack.c.h.b16 %v1776
    %v1861 = vunpack.c.l.b16 %v1777
    %v1862 = vunpack.c.l.b16 %v1778
    %v1863 = vunpack.c.h.b16 %v1778
    %v1864 = vunpack.c.l.b16 %v1779
    %v1865 = vunpack.c.l.b16 %v1780
    %v1866 = vunpack.c.h.b16 %v1780
    %v1867 = vunpack.c.l.b16 %v1781
    %v1868 = vunpack.c.l.b16 %v1782
    %v1869 = vunpack.c.h.b16 %v1782
    %v1870 = vunpack.c.l.b16 %v1783
    %v1871 = vunpack.c.l.b16 %v1784
    %v1872 = vunpack.c.h.b16 %v1784
    %v1873 = vunpack.c.l.b16 %v1785
    %v1874 = vunpack.c.l.b16 %v1786
    %v1875 = vunpack.c.h.b16 %v1786
    %v1876 = vunpack.c.l.b16 %v1787
    %v1877 = vunpack.c.l.b16 %v1788
    %v1878 = vunpack.c.h.b16 %v1788
    %v1879 = vunpack.c.l.b16 %v1789
    %v1880 = vunpack.c.l.b16 %v1790
    %v1881 = vunpack.c.h.b16 %v1790
    %v1882 = vunpack.c.l.b16 %v1791
    %v1883 = vunpack.c.l.b16 %v1792
    %v1884 = vunpack.c.h.b16 %v1792
    %v1885 = vunpack.c.l.b16 %v1793
    %v1886 = vunpack.c.l.b16 %v1794
    %v1887 = vunpack.c.h.b16 %v1794
    %v1888 = vunpack.c.l.b16 %v1795
    %v1889 = vunpack.c.l.b16 %v1796
    %v1890 = vunpack.c.h.b16 %v1796
    %v1891 = vunpack.c.l.b16 %v1797
    %v1892 = vunpack.c.l.b16 %v1798
    %v1893 = vunpack.c.h.b16 %v1798
    %v1894 = vunpack.c.l.b16 %v1799
    %v1895 = vunpack.c.l.b16 %v1800
    %v1896 = vunpack.c.h.b16 %v1800
    %v1897 = vunpack.c.l.b16 %v1801
    %v1898 = vunpack.c.l.b16 %v1802
    %v1899 = vunpack.c.h.b16 %v1802
    %v1900 = vunpack.c.l.b16 %v1803
    %v1901 = vunpack.c.l.b16 %v1804
    %v1902 = vunpack.c.h.b16 %v1804
    %v1903 = vunpack.c.l.b16 %v1805
    %v1904 = vpack.c.b16 %v1859, %v1856
    %v1905 = vpack.c.b16 %v1860, %v1857
    %v1906 = vpack.c.b16 %v1861, %v1858
    %v1907 = vpack.c.b16 %v1865, %v1862
    %v1908 = vpack.c.b16 %v1866, %v1863
    %v1909 = vpack.c.b16 %v1867, %v1864
    %v1910 = vpack.c.b16 %v1871, %v1868
    %v1911 = vpack.c.b16 %v1872, %v1869
    %v1912 = vpack.c.b16 %v1873, %v1870
    %v1913 = vpack.c.b16 %v1877, %v1874
    %v1914 = vpack.c.b16 %v1878, %v1875
    %v1915 = vpack.c.b16 %v1879, %v1876
    %v1916 = vpack.c.b16 %v1883, %v1880
    %v1917 = vpack.c.b16 %v1884, %v1881
    %v1918 = vpack.c.b16 %v1885, %v1882
    %v1919 = vpack.c.b16 %v1889, %v1886
    %v1920 = vpack.c.b16 %v1890, %v1887
    %v1921 = vpack.c.b16 %v1891, %v1888
    %v1922 = vpack.c.b16 %v1895, %v1892
    %v1923 = vpack.c.b16 %v1896, %v1893
    %v1924 = vpack.c.b16 %v1897, %v1894
    %v1925 = vpack.c.b16 %v1901, %v1898
    %v1926 = vpack.c.b16 %v1902, %v1899
    %v1927 = vpack.c.b16 %v1903, %v1900
    %1952 = vmatprep.subr.bf16.mxu0 %v1905
    %1953 = vmatpush1.bf16.msra.mxu0 %v1904
    %1954 = vmatprep.subr.bf16.mxu0 %v1908
    %1955 = vmatpush1.bf16.msra.mxu0 %v1907
    %1956 = vmatprep.subr.bf16.mxu0 %v1911
    %1957 = vmatpush1.bf16.msra.mxu0 %v1910
    %1958 = vmatprep.subr.bf16.mxu0 %v1914
    %1959 = vmatpush1.bf16.msra.mxu0 %v1913
    %1960 = vmatprep.subr.bf16.mxu0 %v1917
    %1961 = vmatpush1.bf16.msra.mxu0 %v1916
    %1962 = vmatprep.subr.bf16.mxu0 %v1920
    %1963 = vmatpush1.bf16.msra.mxu0 %v1919
    %1964 = vmatprep.subr.bf16.mxu0 %v1923
    %1965 = vmatpush1.bf16.msra.mxu0 %v1922
    %1966 = vmatprep.subr.bf16.mxu0 %v1926
    %1967 = vmatpush1.bf16.msra.mxu0 %v1925
    %1968 = vmatprep.subr.bf16.mxu0 0
    %1969 = vmatpush1.bf16.msra.mxu0 0
    %1970 = vmatprep.subr.bf16.mxu0 0
    %1971 = vmatpush1.bf16.msra.mxu0 0
    %1972 = vmatprep.subr.bf16.mxu0 0
    %1973 = vmatpush1.bf16.msra.mxu0 0
    %1974 = vmatprep.subr.bf16.mxu0 0
    %1975 = vmatpush1.bf16.msra.mxu0 0
    %1976 = vmatprep.subr.bf16.mxu0 0
    %1977 = vmatpush1.bf16.msra.mxu0 0
    %1978 = vmatprep.subr.bf16.mxu0 0
    %1979 = vmatpush1.bf16.msra.mxu0 0
    %1980 = vmatprep.subr.bf16.mxu0 0
    %1981 = vmatpush1.bf16.msra.mxu0 0
    %1982 = vmatprep.subr.bf16.mxu0 0
    %1983 = vmatpush1.bf16.msra.mxu0 0
    %1984 = vmatprep.mubr.bf16.mxu0 0
    %1985 = vmatmul.mubr.bf16.gmra.mrb[0].mxu0 %v1772
    %v1986 = vpop.f32.mrb[0].mxu0
    %v1987 = vadd.f32 %v1812, %v1986
    %v1988 = vpop.f32.mrb[0].mxu0
    %v1989 = vadd.f32 %v1816, %v1988
    %v1990 = vpop.f32.mrb[0].mxu0
    %v1991 = vadd.f32 %v1812, %v1990
    %v1992 = vpop.f32.mrb[0].mxu0
    %v1993 = vadd.f32 %v1816, %v1992
    %1994 = vdwg.mxu0
    %1995 = vmatprep.subr.bf16.mxu0 0
    %1996 = vmatpush1.bf16.msra.mxu0 %v1906
    %1997 = vmatprep.subr.bf16.mxu0 0
    %1998 = vmatpush1.bf16.msra.mxu0 %v1909
    %1999 = vmatprep.subr.bf16.mxu0 0
    %2000 = vmatpush1.bf16.msra.mxu0 %v1912
    %2001 = vmatprep.subr.bf16.mxu0 0
    %2002 = vmatpush1.bf16.msra.mxu0 %v1915
    %2003 = vmatprep.subr.bf16.mxu0 0
    %2004 = vmatpush1.bf16.msra.mxu0 %v1918
    %2005 = vmatprep.subr.bf16.mxu0 0
    %2006 = vmatpush1.bf16.msra.mxu0 %v1921
    %2007 = vmatprep.subr.bf16.mxu0 0
    %2008 = vmatpush1.bf16.msra.mxu0 %v1924
    %2009 = vmatprep.subr.bf16.mxu0 0
    %2010 = vmatpush1.bf16.msra.mxu0 %v1927
    %2011 = vmatprep.subr.bf16.mxu0 0
    %2012 = vmatpush1.bf16.msra.mxu0 0
    %2013 = vmatprep.subr.bf16.mxu0 0
    %2014 = vmatpush1.bf16.msra.mxu0 0
    %2015 = vmatprep.subr.bf16.mxu0 0
    %2016 = vmatpush1.bf16.msra.mxu0 0
    %2017 = vmatprep.subr.bf16.mxu0 0
    %2018 = vmatpush1.bf16.msra.mxu0 0
    %2019 = vmatprep.subr.bf16.mxu0 0
    %2020 = vmatpush1.bf16.msra.mxu0 0
    %2021 = vmatprep.subr.bf16.mxu0 0
    %2022 = vmatpush1.bf16.msra.mxu0 0
    %2023 = vmatprep.subr.bf16.mxu0 0
    %2024 = vmatpush1.bf16.msra.mxu0 0
    %2025 = vmatprep.subr.bf16.mxu0 0
    %2026 = vmatpush1.bf16.msra.mxu0 0
    %2027 = vmatprep.mubr.bf16.mxu0 0
    %2028 = vmatmul.mubr.bf16.gmra.mrb[0].mxu0 %v1772
    %v2029 = vpop.f32.mrb[0].mxu0
    %v2030 = vadd.f32 %v1820, %v2029
    %v2031 = vpop.f32.mrb[0].mxu0
    %v2032 = vpop.f32.mrb[0].mxu0
    %v2033 = vadd.f32 %v1820, %v2032
    %v2034 = vpop.f32.mrb[0].mxu0
    %2035 = vdwg.mxu0
    %v2036 = vand.u32 2147483647, %v1987
    %2037 = vmax.xlane.f32.xlu0 %v2036
    %v2038 = vpop.xlane.xlu0 %2037
    %v2039 = vand.u32 2147483647, %v1989
    %2040 = vmax.xlane.f32.xlu0 %v2039
    %v2041 = vpop.xlane.xlu0 %2040
    %v2043 = vlaneseq
    %v2044 = vshrl.u32 %v2043, 7
    %v2045 = vsub.s32 0, %v2044
    %v2046 = vrot.slane %v2038, %v2045
    %v2047 = vlaneseq
    %v2048 = vshrl.u32 %v2047, 7
    %v2049 = vsub.s32 1, %v2048
    %v2050 = vrot.slane %v2038, %v2049
    %v2051 = vlaneseq
    %v2052 = vshrl.u32 %v2051, 7
    %v2053 = vsub.s32 2, %v2052
    %v2054 = vrot.slane %v2038, %v2053
    %v2055 = vlaneseq
    %v2056 = vshrl.u32 %v2055, 7
    %v2057 = vsub.s32 3, %v2056
    %v2058 = vrot.slane %v2038, %v2057
    %v2059 = vlaneseq
    %v2060 = vshrl.u32 %v2059, 7
    %v2061 = vsub.s32 4, %v2060
    %v2062 = vrot.slane %v2038, %v2061
    %v2063 = vlaneseq
    %v2064 = vshrl.u32 %v2063, 7
    %v2065 = vsub.s32 5, %v2064
    %v2066 = vrot.slane %v2038, %v2065
    %v2067 = vlaneseq
    %v2068 = vshrl.u32 %v2067, 7
    %v2069 = vsub.s32 6, %v2068
    %v2070 = vrot.slane %v2038, %v2069
    %v2071 = vlaneseq
    %v2072 = vshrl.u32 %v2071, 7
    %v2073 = vsub.s32 7, %v2072
    %v2074 = vrot.slane %v2038, %v2073
    %v2083 = vmul.f32 %v2046, %v2041
    %v2084 = vmul.f32 %v2050, %v2041
    %v2085 = vmul.f32 %v2054, %v2041
    %v2086 = vmul.f32 %v2058, %v2041
    %v2087 = vmul.f32 %v2062, %v2041
    %v2088 = vmul.f32 %v2066, %v2041
    %v2089 = vmul.f32 %v2070, %v2041
    %v2090 = vmul.f32 %v2074, %v2041
    %v2092 = vcombine.high %v1987, %v1987
    %v2094 = vunpack.c.l.s4 1966171168
    %v2095 = vunpack.c.0.s8 %v2094
    %v2096 = vlaneseq
    %v2097 = vshrl.u32 %v2096, 7
    %v2098 = vsub.s32 %v2095, %v2097
    %v2099 = vrot.slane %v1987, %v2098
    %v2101 = vunpack.c.l.s4 1966171168
    %v2102 = vunpack.c.0.s8 %v2101
    %v2103 = vlaneseq
    %v2104 = vshrl.u32 %v2103, 7
    %v2105 = vsub.s32 %v2102, %v2104
    %v2106 = vrot.slane %v2092, %v2105
    %v2107 = vcombine.high %v2099, %v2099
    %v2108 = vcombine.high %v2106, %v2106
    %v2110 = vunpack.c.l.s4 1966171168
    %v2111 = vunpack.c.0.s8 %v2110
    %v2112 = vlaneseq
    %v2113 = vshrl.u32 %v2112, 7
    %v2114 = vsub.s32 %v2111, %v2113
    %v2115 = vrot.slane %v2099, %v2114
    %v2117 = vunpack.c.l.s4 1966171168
    %v2118 = vunpack.c.0.s8 %v2117
    %v2119 = vlaneseq
    %v2120 = vshrl.u32 %v2119, 7
    %v2121 = vsub.s32 %v2118, %v2120
    %v2122 = vrot.slane %v2106, %v2121
    %v2124 = vunpack.c.l.s4 1966171168
    %v2125 = vunpack.c.0.s8 %v2124
    %v2126 = vlaneseq
    %v2127 = vshrl.u32 %v2126, 7
    %v2128 = vsub.s32 %v2125, %v2127
    %v2129 = vrot.slane %v2107, %v2128
    %v2131 = vunpack.c.l.s4 1966171168
    %v2132 = vunpack.c.0.s8 %v2131
    %v2133 = vlaneseq
    %v2134 = vshrl.u32 %v2133, 7
    %v2135 = vsub.s32 %v2132, %v2134
    %v2136 = vrot.slane %v2108, %v2135
    %v2137 = vcombine.high %v2115, %v2115
    %v2138 = vcombine.high %v2122, %v2122
    %v2139 = vcombine.high %v2129, %v2129
    %v2140 = vcombine.high %v2136, %v2136
    %v2141 = vlaneseq
    %v2142 = vshrl.u32 %v2141, 7
    %v2143 = vsub.s32 0, %v2142
    %v2144 = vrot.slane %v2115, %v2143
    %v2145 = vlaneseq
    %v2146 = vshrl.u32 %v2145, 7
    %v2147 = vsub.s32 0, %v2146
    %v2148 = vrot.slane %v2129, %v2147
    %v2149 = vlaneseq
    %v2150 = vshrl.u32 %v2149, 7
    %v2151 = vsub.s32 0, %v2150
    %v2152 = vrot.slane %v2137, %v2151
    %v2153 = vlaneseq
    %v2154 = vshrl.u32 %v2153, 7
    %v2155 = vsub.s32 0, %v2154
    %v2156 = vrot.slane %v2139, %v2155
    %v2157 = vlaneseq
    %v2158 = vshrl.u32 %v2157, 7
    %v2159 = vsub.s32 0, %v2158
    %v2160 = vrot.slane %v2122, %v2159
    %v2161 = vlaneseq
    %v2162 = vshrl.u32 %v2161, 7
    %v2163 = vsub.s32 0, %v2162
    %v2164 = vrot.slane %v2136, %v2163
    %v2165 = vlaneseq
    %v2166 = vshrl.u32 %v2165, 7
    %v2167 = vsub.s32 0, %v2166
    %v2168 = vrot.slane %v2138, %v2167
    %v2169 = vlaneseq
    %v2170 = vshrl.u32 %v2169, 7
    %v2171 = vsub.s32 0, %v2170
    %v2172 = vrot.slane %v2140, %v2171
    %v2181 = vmul.f32 %v2144, %v1989
    %v2182 = vmul.f32 %v2148, %v1989
    %v2183 = vmul.f32 %v2152, %v1989
    %v2184 = vmul.f32 %v2156, %v1989
    %v2185 = vmul.f32 %v2160, %v1989
    %v2186 = vmul.f32 %v2164, %v1989
    %v2187 = vmul.f32 %v2168, %v1989
    %v2188 = vmul.f32 %v2172, %v1989
    %v2189 = vsub.f32 %v2181, %v2083
    %v2190 = vsub.f32 %v2182, %v2084
    %v2191 = vsub.f32 %v2183, %v2085
    %v2192 = vsub.f32 %v2184, %v2086
    %v2193 = vsub.f32 %v2185, %v2087
    %v2194 = vsub.f32 %v2186, %v2088
    %v2195 = vsub.f32 %v2187, %v2089
    %v2196 = vsub.f32 %v2188, %v2090
    %v2197 = vmul.f32 %v2189, 1.442695
    %v2198 = vpow.pop %v2197
    %v2199 = vmul.f32 %v2190, 1.442695
    %v2200 = vpow.pop %v2199
    %v2201 = vmul.f32 %v2191, 1.442695
    %v2202 = vpow.pop %v2201
    %v2203 = vmul.f32 %v2192, 1.442695
    %v2204 = vpow.pop %v2203
    %v2205 = vmul.f32 %v2193, 1.442695
    %v2206 = vpow.pop %v2205
    %v2207 = vmul.f32 %v2194, 1.442695
    %v2208 = vpow.pop %v2207
    %v2209 = vmul.f32 %v2195, 1.442695
    %v2210 = vpow.pop %v2209
    %v2211 = vmul.f32 %v2196, 1.442695
    %v2212 = vpow.pop %v2211
    %2213 = vadd.xlane.f32.xlu0 %v2198
    %v2214 = vpop.xlane.xlu0 %2213
    %2215 = vadd.xlane.f32.xlu0 %v2200
    %v2216 = vpop.xlane.xlu0 %2215
    %2217 = vadd.xlane.f32.xlu0 %v2202
    %v2218 = vpop.xlane.xlu0 %2217
    %2219 = vadd.xlane.f32.xlu0 %v2204
    %v2220 = vpop.xlane.xlu0 %2219
    %2221 = vadd.xlane.f32.xlu0 %v2206
    %v2222 = vpop.xlane.xlu0 %2221
    %2223 = vadd.xlane.f32.xlu0 %v2208
    %v2224 = vpop.xlane.xlu0 %2223
    %2225 = vadd.xlane.f32.xlu0 %v2210
    %v2226 = vpop.xlane.xlu0 %2225
    %2227 = vadd.xlane.f32.xlu0 %v2212
    %v2228 = vpop.xlane.xlu0 %2227
    %v2229 = vadd.f32 %v2214, 1e-30
    %v2230 = vadd.f32 %v2216, 1e-30
    %v2231 = vadd.f32 %v2218, 1e-30
    %v2232 = vadd.f32 %v2220, 1e-30
    %v2233 = vadd.f32 %v2222, 1e-30
    %v2234 = vadd.f32 %v2224, 1e-30
    %v2235 = vadd.f32 %v2226, 1e-30
    %v2236 = vadd.f32 %v2228, 1e-30
    %v2237 = vrcp.pop %v2229
    %v2238 = vrcp.pop %v2230
    %v2239 = vrcp.pop %v2231
    %v2240 = vrcp.pop %v2232
    %v2241 = vrcp.pop %v2233
    %v2242 = vrcp.pop %v2234
    %v2243 = vrcp.pop %v2235
    %v2244 = vrcp.pop %v2236
    %v2245 = vmul.f32 %v2237, %v691
    %v2246 = vmul.f32 %v2238, %v698
    %v2247 = vmul.f32 %v2239, %v705
    %v2248 = vmul.f32 %v2240, %v712
    %v2249 = vmul.f32 %v2241, %v719
    %v2250 = vmul.f32 %v2242, %v726
    %v2251 = vmul.f32 %v2243, %v733
    %v2252 = vmul.f32 %v2244, %v740
    %v2253 = vmul.f32 %v2198, %v2030
    %v2254 = vmul.f32 %v2200, %v2030
    %v2255 = vmul.f32 %v2202, %v2030
    %v2256 = vmul.f32 %v2204, %v2030
    %v2257 = vmul.f32 %v2206, %v2030
    %v2258 = vmul.f32 %v2208, %v2030
    %v2259 = vmul.f32 %v2210, %v2030
    %v2260 = vmul.f32 %v2212, %v2030
    %2262 = vset.pattern.permute.xlu0 0
    %2263 = vperm.xlu0 %2262, %v2245
    %v2264 = vpop.permute.xlu0 %2263
    %2267 = vset.pattern.permute.xlu0 0
    %2268 = vperm.xlu0 %2267, %v2246
    %v2269 = vpop.permute.xlu0 %2268
    %2272 = vset.pattern.permute.xlu0 0
    %2273 = vperm.xlu0 %2272, %v2247
    %v2274 = vpop.permute.xlu0 %2273
    %2277 = vset.pattern.permute.xlu0 0
    %2278 = vperm.xlu0 %2277, %v2248
    %v2279 = vpop.permute.xlu0 %2278
    %2282 = vset.pattern.permute.xlu0 0
    %2283 = vperm.xlu0 %2282, %v2249
    %v2284 = vpop.permute.xlu0 %2283
    %2287 = vset.pattern.permute.xlu0 0
    %2288 = vperm.xlu0 %2287, %v2250
    %v2289 = vpop.permute.xlu0 %2288
    %2292 = vset.pattern.permute.xlu0 0
    %2293 = vperm.xlu0 %2292, %v2251
    %v2294 = vpop.permute.xlu0 %2293
    %2297 = vset.pattern.permute.xlu0 0
    %2298 = vperm.xlu0 %2297, %v2252
    %v2299 = vpop.permute.xlu0 %2298
    %v2301 = vmul.f32 %v2253, %v2264
    %v2302 = vmul.f32 %v2254, %v2269
    %v2303 = vmul.f32 %v2255, %v2274
    %v2304 = vmul.f32 %v2256, %v2279
    %v2305 = vmul.f32 %v2257, %v2284
    %v2306 = vmul.f32 %v2258, %v2289
    %v2307 = vmul.f32 %v2259, %v2294
    %v2308 = vmul.f32 %v2260, %v2299
    %v2309 = vrot.slane %v2301, 4
    %v2310 = vadd.f32 %v2301, %v2309
    %v2311 = vrot.slane %v2310, 2
    %v2312 = vadd.f32 %v2310, %v2311
    %v2313 = vrot.slane %v2312, 1
    %v2314 = vadd.f32 %v2312, %v2313
    %v2315 = vrot.slane %v2302, 4
    %v2316 = vadd.f32 %v2302, %v2315
    %v2317 = vrot.slane %v2316, 2
    %v2318 = vadd.f32 %v2316, %v2317
    %v2319 = vrot.slane %v2318, 1
    %v2320 = vadd.f32 %v2318, %v2319
    %v2321 = vrot.slane %v2303, 4
    %v2322 = vadd.f32 %v2303, %v2321
    %v2323 = vrot.slane %v2322, 2
    %v2324 = vadd.f32 %v2322, %v2323
    %v2325 = vrot.slane %v2324, 1
    %v2326 = vadd.f32 %v2324, %v2325
    %v2327 = vrot.slane %v2304, 4
    %v2328 = vadd.f32 %v2304, %v2327
    %v2329 = vrot.slane %v2328, 2
    %v2330 = vadd.f32 %v2328, %v2329
    %v2331 = vrot.slane %v2330, 1
    %v2332 = vadd.f32 %v2330, %v2331
    %v2333 = vrot.slane %v2305, 4
    %v2334 = vadd.f32 %v2305, %v2333
    %v2335 = vrot.slane %v2334, 2
    %v2336 = vadd.f32 %v2334, %v2335
    %v2337 = vrot.slane %v2336, 1
    %v2338 = vadd.f32 %v2336, %v2337
    %v2339 = vrot.slane %v2306, 4
    %v2340 = vadd.f32 %v2306, %v2339
    %v2341 = vrot.slane %v2340, 2
    %v2342 = vadd.f32 %v2340, %v2341
    %v2343 = vrot.slane %v2342, 1
    %v2344 = vadd.f32 %v2342, %v2343
    %v2345 = vrot.slane %v2307, 4
    %v2346 = vadd.f32 %v2307, %v2345
    %v2347 = vrot.slane %v2346, 2
    %v2348 = vadd.f32 %v2346, %v2347
    %v2349 = vrot.slane %v2348, 1
    %v2350 = vadd.f32 %v2348, %v2349
    %v2351 = vrot.slane %v2308, 4
    %v2352 = vadd.f32 %v2308, %v2351
    %v2353 = vrot.slane %v2352, 2
    %v2354 = vadd.f32 %v2352, %v2353
    %v2355 = vrot.slane %v2354, 1
    %v2356 = vadd.f32 %v2354, %v2355
    %v2357 = vand.u32 2147483647, %v1991
    %2358 = vmax.xlane.f32.xlu0 %v2357
    %v2359 = vpop.xlane.xlu0 %2358
    %v2360 = vand.u32 2147483647, %v1993
    %2361 = vmax.xlane.f32.xlu0 %v2360
    %v2362 = vpop.xlane.xlu0 %2361
    %v2364 = vlaneseq
    %v2365 = vshrl.u32 %v2364, 7
    %v2366 = vsub.s32 0, %v2365
    %v2367 = vrot.slane %v2359, %v2366
    %v2368 = vlaneseq
    %v2369 = vshrl.u32 %v2368, 7
    %v2370 = vsub.s32 1, %v2369
    %v2371 = vrot.slane %v2359, %v2370
    %v2372 = vlaneseq
    %v2373 = vshrl.u32 %v2372, 7
    %v2374 = vsub.s32 2, %v2373
    %v2375 = vrot.slane %v2359, %v2374
    %v2376 = vlaneseq
    %v2377 = vshrl.u32 %v2376, 7
    %v2378 = vsub.s32 3, %v2377
    %v2379 = vrot.slane %v2359, %v2378
    %v2380 = vlaneseq
    %v2381 = vshrl.u32 %v2380, 7
    %v2382 = vsub.s32 4, %v2381
    %v2383 = vrot.slane %v2359, %v2382
    %v2384 = vlaneseq
    %v2385 = vshrl.u32 %v2384, 7
    %v2386 = vsub.s32 5, %v2385
    %v2387 = vrot.slane %v2359, %v2386
    %v2388 = vlaneseq
    %v2389 = vshrl.u32 %v2388, 7
    %v2390 = vsub.s32 6, %v2389
    %v2391 = vrot.slane %v2359, %v2390
    %v2392 = vlaneseq
    %v2393 = vshrl.u32 %v2392, 7
    %v2394 = vsub.s32 7, %v2393
    %v2395 = vrot.slane %v2359, %v2394
    %v2404 = vmul.f32 %v2367, %v2362
    %v2405 = vmul.f32 %v2371, %v2362
    %v2406 = vmul.f32 %v2375, %v2362
    %v2407 = vmul.f32 %v2379, %v2362
    %v2408 = vmul.f32 %v2383, %v2362
    %v2409 = vmul.f32 %v2387, %v2362
    %v2410 = vmul.f32 %v2391, %v2362
    %v2411 = vmul.f32 %v2395, %v2362
    %v2413 = vcombine.high %v1991, %v1991
    %v2415 = vunpack.c.l.s4 1966171168
    %v2416 = vunpack.c.0.s8 %v2415
    %v2417 = vlaneseq
    %v2418 = vshrl.u32 %v2417, 7
    %v2419 = vsub.s32 %v2416, %v2418
    %v2420 = vrot.slane %v1991, %v2419
    %v2422 = vunpack.c.l.s4 1966171168
    %v2423 = vunpack.c.0.s8 %v2422
    %v2424 = vlaneseq
    %v2425 = vshrl.u32 %v2424, 7
    %v2426 = vsub.s32 %v2423, %v2425
    %v2427 = vrot.slane %v2413, %v2426
    %v2428 = vcombine.high %v2420, %v2420
    %v2429 = vcombine.high %v2427, %v2427
    %v2431 = vunpack.c.l.s4 1966171168
    %v2432 = vunpack.c.0.s8 %v2431
    %v2433 = vlaneseq
    %v2434 = vshrl.u32 %v2433, 7
    %v2435 = vsub.s32 %v2432, %v2434
    %v2436 = vrot.slane %v2420, %v2435
    %v2438 = vunpack.c.l.s4 1966171168
    %v2439 = vunpack.c.0.s8 %v2438
    %v2440 = vlaneseq
    %v2441 = vshrl.u32 %v2440, 7
    %v2442 = vsub.s32 %v2439, %v2441
    %v2443 = vrot.slane %v2427, %v2442
    %v2445 = vunpack.c.l.s4 1966171168
    %v2446 = vunpack.c.0.s8 %v2445
    %v2447 = vlaneseq
    %v2448 = vshrl.u32 %v2447, 7
    %v2449 = vsub.s32 %v2446, %v2448
    %v2450 = vrot.slane %v2428, %v2449
    %v2452 = vunpack.c.l.s4 1966171168
    %v2453 = vunpack.c.0.s8 %v2452
    %v2454 = vlaneseq
    %v2455 = vshrl.u32 %v2454, 7
    %v2456 = vsub.s32 %v2453, %v2455
    %v2457 = vrot.slane %v2429, %v2456
    %v2458 = vcombine.high %v2436, %v2436
    %v2459 = vcombine.high %v2443, %v2443
    %v2460 = vcombine.high %v2450, %v2450
    %v2461 = vcombine.high %v2457, %v2457
    %v2462 = vlaneseq
    %v2463 = vshrl.u32 %v2462, 7
    %v2464 = vsub.s32 0, %v2463
    %v2465 = vrot.slane %v2436, %v2464
    %v2466 = vlaneseq
    %v2467 = vshrl.u32 %v2466, 7
    %v2468 = vsub.s32 0, %v2467
    %v2469 = vrot.slane %v2450, %v2468
    %v2470 = vlaneseq
    %v2471 = vshrl.u32 %v2470, 7
    %v2472 = vsub.s32 0, %v2471
    %v2473 = vrot.slane %v2458, %v2472
    %v2474 = vlaneseq
    %v2475 = vshrl.u32 %v2474, 7
    %v2476 = vsub.s32 0, %v2475
    %v2477 = vrot.slane %v2460, %v2476
    %v2478 = vlaneseq
    %v2479 = vshrl.u32 %v2478, 7
    %v2480 = vsub.s32 0, %v2479
    %v2481 = vrot.slane %v2443, %v2480
    %v2482 = vlaneseq
    %v2483 = vshrl.u32 %v2482, 7
    %v2484 = vsub.s32 0, %v2483
    %v2485 = vrot.slane %v2457, %v2484
    %v2486 = vlaneseq
    %v2487 = vshrl.u32 %v2486, 7
    %v2488 = vsub.s32 0, %v2487
    %v2489 = vrot.slane %v2459, %v2488
    %v2490 = vlaneseq
    %v2491 = vshrl.u32 %v2490, 7
    %v2492 = vsub.s32 0, %v2491
    %v2493 = vrot.slane %v2461, %v2492
    %v2502 = vmul.f32 %v2465, %v1993
    %v2503 = vmul.f32 %v2469, %v1993
    %v2504 = vmul.f32 %v2473, %v1993
    %v2505 = vmul.f32 %v2477, %v1993
    %v2506 = vmul.f32 %v2481, %v1993
    %v2507 = vmul.f32 %v2485, %v1993
    %v2508 = vmul.f32 %v2489, %v1993
    %v2509 = vmul.f32 %v2493, %v1993
    %v2510 = vsub.f32 %v2502, %v2404
    %v2511 = vsub.f32 %v2503, %v2405
    %v2512 = vsub.f32 %v2504, %v2406
    %v2513 = vsub.f32 %v2505, %v2407
    %v2514 = vsub.f32 %v2506, %v2408
    %v2515 = vsub.f32 %v2507, %v2409
    %v2516 = vsub.f32 %v2508, %v2410
    %v2517 = vsub.f32 %v2509, %v2411
    %v2518 = vmul.f32 %v2510, 1.442695
    %v2519 = vpow.pop %v2518
    %v2520 = vmul.f32 %v2511, 1.442695
    %v2521 = vpow.pop %v2520
    %v2522 = vmul.f32 %v2512, 1.442695
    %v2523 = vpow.pop %v2522
    %v2524 = vmul.f32 %v2513, 1.442695
    %v2525 = vpow.pop %v2524
    %v2526 = vmul.f32 %v2514, 1.442695
    %v2527 = vpow.pop %v2526
    %v2528 = vmul.f32 %v2515, 1.442695
    %v2529 = vpow.pop %v2528
    %v2530 = vmul.f32 %v2516, 1.442695
    %v2531 = vpow.pop %v2530
    %v2532 = vmul.f32 %v2517, 1.442695
    %v2533 = vpow.pop %v2532
    %2534 = vadd.xlane.f32.xlu0 %v2519
    %v2535 = vpop.xlane.xlu0 %2534
    %2536 = vadd.xlane.f32.xlu0 %v2521
    %v2537 = vpop.xlane.xlu0 %2536
    %2538 = vadd.xlane.f32.xlu0 %v2523
    %v2539 = vpop.xlane.xlu0 %2538
    %2540 = vadd.xlane.f32.xlu0 %v2525
    %v2541 = vpop.xlane.xlu0 %2540
    %2542 = vadd.xlane.f32.xlu0 %v2527
    %v2543 = vpop.xlane.xlu0 %2542
    %2544 = vadd.xlane.f32.xlu0 %v2529
    %v2545 = vpop.xlane.xlu0 %2544
    %2546 = vadd.xlane.f32.xlu0 %v2531
    %v2547 = vpop.xlane.xlu0 %2546
    %2548 = vadd.xlane.f32.xlu0 %v2533
    %v2549 = vpop.xlane.xlu0 %2548
    %v2550 = vadd.f32 %v2535, 1e-30
    %v2551 = vadd.f32 %v2537, 1e-30
    %v2552 = vadd.f32 %v2539, 1e-30
    %v2553 = vadd.f32 %v2541, 1e-30
    %v2554 = vadd.f32 %v2543, 1e-30
    %v2555 = vadd.f32 %v2545, 1e-30
    %v2556 = vadd.f32 %v2547, 1e-30
    %v2557 = vadd.f32 %v2549, 1e-30
    %v2558 = vrcp.pop %v2550
    %v2559 = vrcp.pop %v2551
    %v2560 = vrcp.pop %v2552
    %v2561 = vrcp.pop %v2553
    %v2562 = vrcp.pop %v2554
    %v2563 = vrcp.pop %v2555
    %v2564 = vrcp.pop %v2556
    %v2565 = vrcp.pop %v2557
    %v2566 = vmul.f32 %v2558, %v691
    %v2567 = vmul.f32 %v2559, %v698
    %v2568 = vmul.f32 %v2560, %v705
    %v2569 = vmul.f32 %v2561, %v712
    %v2570 = vmul.f32 %v2562, %v719
    %v2571 = vmul.f32 %v2563, %v726
    %v2572 = vmul.f32 %v2564, %v733
    %v2573 = vmul.f32 %v2565, %v740
    %v2574 = vmul.f32 %v2519, %v2033
    %v2575 = vmul.f32 %v2521, %v2033
    %v2576 = vmul.f32 %v2523, %v2033
    %v2577 = vmul.f32 %v2525, %v2033
    %v2578 = vmul.f32 %v2527, %v2033
    %v2579 = vmul.f32 %v2529, %v2033
    %v2580 = vmul.f32 %v2531, %v2033
    %v2581 = vmul.f32 %v2533, %v2033
    %2583 = vset.pattern.permute.xlu0 0
    %2584 = vperm.xlu0 %2583, %v2566
    %v2585 = vpop.permute.xlu0 %2584
    %2588 = vset.pattern.permute.xlu0 0
    %2589 = vperm.xlu0 %2588, %v2567
    %v2590 = vpop.permute.xlu0 %2589
    %2593 = vset.pattern.permute.xlu0 0
    %2594 = vperm.xlu0 %2593, %v2568
    %v2595 = vpop.permute.xlu0 %2594
    %2598 = vset.pattern.permute.xlu0 0
    %2599 = vperm.xlu0 %2598, %v2569
    %v2600 = vpop.permute.xlu0 %2599
    %2603 = vset.pattern.permute.xlu0 0
    %2604 = vperm.xlu0 %2603, %v2570
    %v2605 = vpop.permute.xlu0 %2604
    %2608 = vset.pattern.permute.xlu0 0
    %2609 = vperm.xlu0 %2608, %v2571
    %v2610 = vpop.permute.xlu0 %2609
    %2613 = vset.pattern.permute.xlu0 0
    %2614 = vperm.xlu0 %2613, %v2572
    %v2615 = vpop.permute.xlu0 %2614
    %2618 = vset.pattern.permute.xlu0 0
    %2619 = vperm.xlu0 %2618, %v2573
    %v2620 = vpop.permute.xlu0 %2619
    %v2622 = vmul.f32 %v2574, %v2585
    %v2623 = vmul.f32 %v2575, %v2590
    %v2624 = vmul.f32 %v2576, %v2595
    %v2625 = vmul.f32 %v2577, %v2600
    %v2626 = vmul.f32 %v2578, %v2605
    %v2627 = vmul.f32 %v2579, %v2610
    %v2628 = vmul.f32 %v2580, %v2615
    %v2629 = vmul.f32 %v2581, %v2620
    %v2630 = vrot.slane %v2622, 4
    %v2631 = vadd.f32 %v2622, %v2630
    %v2632 = vrot.slane %v2631, 2
    %v2633 = vadd.f32 %v2631, %v2632
    %v2634 = vrot.slane %v2633, 1
    %v2635 = vadd.f32 %v2633, %v2634
    %v2636 = vrot.slane %v2623, 4
    %v2637 = vadd.f32 %v2623, %v2636
    %v2638 = vrot.slane %v2637, 2
    %v2639 = vadd.f32 %v2637, %v2638
    %v2640 = vrot.slane %v2639, 1
    %v2641 = vadd.f32 %v2639, %v2640
    %v2642 = vrot.slane %v2624, 4
    %v2643 = vadd.f32 %v2624, %v2642
    %v2644 = vrot.slane %v2643, 2
    %v2645 = vadd.f32 %v2643, %v2644
    %v2646 = vrot.slane %v2645, 1
    %v2647 = vadd.f32 %v2645, %v2646
    %v2648 = vrot.slane %v2625, 4
    %v2649 = vadd.f32 %v2625, %v2648
    %v2650 = vrot.slane %v2649, 2
    %v2651 = vadd.f32 %v2649, %v2650
    %v2652 = vrot.slane %v2651, 1
    %v2653 = vadd.f32 %v2651, %v2652
    %v2654 = vrot.slane %v2626, 4
    %v2655 = vadd.f32 %v2626, %v2654
    %v2656 = vrot.slane %v2655, 2
    %v2657 = vadd.f32 %v2655, %v2656
    %v2658 = vrot.slane %v2657, 1
    %v2659 = vadd.f32 %v2657, %v2658
    %v2660 = vrot.slane %v2627, 4
    %v2661 = vadd.f32 %v2627, %v2660
    %v2662 = vrot.slane %v2661, 2
    %v2663 = vadd.f32 %v2661, %v2662
    %v2664 = vrot.slane %v2663, 1
    %v2665 = vadd.f32 %v2663, %v2664
    %v2666 = vrot.slane %v2628, 4
    %v2667 = vadd.f32 %v2628, %v2666
    %v2668 = vrot.slane %v2667, 2
    %v2669 = vadd.f32 %v2667, %v2668
    %v2670 = vrot.slane %v2669, 1
    %v2671 = vadd.f32 %v2669, %v2670
    %v2672 = vrot.slane %v2629, 4
    %v2673 = vadd.f32 %v2629, %v2672
    %v2674 = vrot.slane %v2673, 2
    %v2675 = vadd.f32 %v2673, %v2674
    %v2676 = vrot.slane %v2675, 1
    %v2677 = vadd.f32 %v2675, %v2676
    %v2686 = vsel %vm1190, %v2320, %v2314
    %v2687 = vsel %vm1192, %v2326, %v2686
    %v2688 = vsel %vm1194, %v2332, %v2687
    %v2689 = vsel %vm1196, %v2338, %v2688
    %v2690 = vsel %vm1198, %v2344, %v2689
    %v2691 = vsel %vm1200, %v2350, %v2690
    %v2692 = vsel %vm1202, %v2356, %v2691
    %v2702 = vsel %vm1190, %v2641, %v2635
    %v2703 = vsel %vm1192, %v2647, %v2702
    %v2704 = vsel %vm1194, %v2653, %v2703
    %v2705 = vsel %vm1196, %v2659, %v2704
    %v2706 = vsel %vm1198, %v2665, %v2705
    %v2707 = vsel %vm1200, %v2671, %v2706
    %v2708 = vsel %vm1202, %v2677, %v2707
    %v2710 = vadd.f32 %v1203, %v2692
    %v2711 = vadd.f32 %v1771, %v2708
    %v2712 = vpack.c.bf16 %v2711, %v2710
    %s2713 = scalar_lea.vmem [#allocation4], 576
    %v2714 = vld [vmem:[%s2713] sm:$0xff]
    %v2715 = vld [vmem:[%s2713 + $0x8] sm:$0xf]
    %v2716 = vld [vmem:[%s2713 + $0xc] sm:$0xff]
    %v2717 = vld [vmem:[%s2713 + $0x14] sm:$0xf]
    %v2718 = vld [vmem:[%s2713 + $0x18] sm:$0xff]
    %v2719 = vld [vmem:[%s2713 + $0x20] sm:$0xf]
    %v2720 = vld [vmem:[%s2713 + $0x24] sm:$0xff]
    %v2721 = vld [vmem:[%s2713 + $0x2c] sm:$0xf]
    %v2722 = vld [vmem:[%s2713 + $0x30] sm:$0xff]
    %v2723 = vld [vmem:[%s2713 + $0x38] sm:$0xf]
    %v2724 = vld [vmem:[%s2713 + $0x3c] sm:$0xff]
    %v2725 = vld [vmem:[%s2713 + $0x44] sm:$0xf]
    %v2726 = vld [vmem:[%s2713 + $0x48] sm:$0xff]
    %v2727 = vld [vmem:[%s2713 + $0x50] sm:$0xf]
    %v2728 = vld [vmem:[%s2713 + $0x54] sm:$0xff]
    %v2729 = vld [vmem:[%s2713 + $0x5c] sm:$0xf]
    %v2730 = vld [vmem:[%s2713 + $0x60] sm:$0xff]
    %v2731 = vld [vmem:[%s2713 + $0x68] sm:$0xf]
    %v2732 = vld [vmem:[%s2713 + $0x6c] sm:$0xff]
    %v2733 = vld [vmem:[%s2713 + $0x74] sm:$0xf]
    %v2734 = vld [vmem:[%s2713 + $0x78] sm:$0xff]
    %v2735 = vld [vmem:[%s2713 + $0x80] sm:$0xf]
    %v2736 = vld [vmem:[%s2713 + $0x84] sm:$0xff]
    %v2737 = vld [vmem:[%s2713 + $0x8c] sm:$0xf]
    %v2738 = vld [vmem:[%s2713 + $0x90] sm:$0xff]
    %v2739 = vld [vmem:[%s2713 + $0x98] sm:$0xf]
    %v2740 = vld [vmem:[%s2713 + $0x9c] sm:$0xff]
    %v2741 = vld [vmem:[%s2713 + $0xa4] sm:$0xf]
    %v2742 = vld [vmem:[%s2713 + $0xa8] sm:$0xff]
    %v2743 = vld [vmem:[%s2713 + $0xb0] sm:$0xf]
    %v2744 = vld [vmem:[%s2713 + $0xb4] sm:$0xff]
    %v2745 = vld [vmem:[%s2713 + $0xbc] sm:$0xf]
    %s2746 = scalar_lea.vmem [#allocation6], 3
    %v2747 = vld [vmem:[%s2746] ss:$4 sm:$0x7]
    %v2749 = vlaneseq
    %v2750 = vshrl.u32 %v2749, 7
    %v2751 = vsub.s32 0, %v2750
    %v2752 = vrot.slane %v2747, %v2751
    %v2753 = vlaneseq
    %v2754 = vshrl.u32 %v2753, 7
    %v2755 = vsub.s32 1, %v2754
    %v2756 = vrot.slane %v2747, %v2755
    %v2757 = vlaneseq
    %v2758 = vshrl.u32 %v2757, 7
    %v2759 = vsub.s32 2, %v2758
    %v2760 = vrot.slane %v2747, %v2759
    %v2796 = vunpack.c.l.b16 %v2714
    %v2797 = vunpack.c.h.b16 %v2714
    %v2798 = vunpack.c.l.b16 %v2715
    %v2799 = vunpack.c.l.b16 %v2716
    %v2800 = vunpack.c.h.b16 %v2716
    %v2801 = vunpack.c.l.b16 %v2717
    %v2802 = vunpack.c.l.b16 %v2718
    %v2803 = vunpack.c.h.b16 %v2718
    %v2804 = vunpack.c.l.b16 %v2719
    %v2805 = vunpack.c.l.b16 %v2720
    %v2806 = vunpack.c.h.b16 %v2720
    %v2807 = vunpack.c.l.b16 %v2721
    %v2808 = vunpack.c.l.b16 %v2722
    %v2809 = vunpack.c.h.b16 %v2722
    %v2810 = vunpack.c.l.b16 %v2723
    %v2811 = vunpack.c.l.b16 %v2724
    %v2812 = vunpack.c.h.b16 %v2724
    %v2813 = vunpack.c.l.b16 %v2725
    %v2814 = vunpack.c.l.b16 %v2726
    %v2815 = vunpack.c.h.b16 %v2726
    %v2816 = vunpack.c.l.b16 %v2727
    %v2817 = vunpack.c.l.b16 %v2728
    %v2818 = vunpack.c.h.b16 %v2728
    %v2819 = vunpack.c.l.b16 %v2729
    %v2820 = vunpack.c.l.b16 %v2730
    %v2821 = vunpack.c.h.b16 %v2730
    %v2822 = vunpack.c.l.b16 %v2731
    %v2823 = vunpack.c.l.b16 %v2732
    %v2824 = vunpack.c.h.b16 %v2732
    %v2825 = vunpack.c.l.b16 %v2733
    %v2826 = vunpack.c.l.b16 %v2734
    %v2827 = vunpack.c.h.b16 %v2734
    %v2828 = vunpack.c.l.b16 %v2735
    %v2829 = vunpack.c.l.b16 %v2736
    %v2830 = vunpack.c.h.b16 %v2736
    %v2831 = vunpack.c.l.b16 %v2737
    %v2832 = vunpack.c.l.b16 %v2738
    %v2833 = vunpack.c.h.b16 %v2738
    %v2834 = vunpack.c.l.b16 %v2739
    %v2835 = vunpack.c.l.b16 %v2740
    %v2836 = vunpack.c.h.b16 %v2740
    %v2837 = vunpack.c.l.b16 %v2741
    %v2838 = vunpack.c.l.b16 %v2742
    %v2839 = vunpack.c.h.b16 %v2742
    %v2840 = vunpack.c.l.b16 %v2743
    %v2841 = vunpack.c.l.b16 %v2744
    %v2842 = vunpack.c.h.b16 %v2744
    %v2843 = vunpack.c.l.b16 %v2745
    %v2844 = vpack.c.b16 %v2799, %v2796
    %v2845 = vpack.c.b16 %v2800, %v2797
    %v2846 = vpack.c.b16 %v2801, %v2798
    %v2847 = vpack.c.b16 %v2805, %v2802
    %v2848 = vpack.c.b16 %v2806, %v2803
    %v2849 = vpack.c.b16 %v2807, %v2804
    %v2850 = vpack.c.b16 %v2811, %v2808
    %v2851 = vpack.c.b16 %v2812, %v2809
    %v2852 = vpack.c.b16 %v2813, %v2810
    %v2853 = vpack.c.b16 %v2817, %v2814
    %v2854 = vpack.c.b16 %v2818, %v2815
    %v2855 = vpack.c.b16 %v2819, %v2816
    %v2856 = vpack.c.b16 %v2823, %v2820
    %v2857 = vpack.c.b16 %v2824, %v2821
    %v2858 = vpack.c.b16 %v2825, %v2822
    %v2859 = vpack.c.b16 %v2829, %v2826
    %v2860 = vpack.c.b16 %v2830, %v2827
    %v2861 = vpack.c.b16 %v2831, %v2828
    %v2862 = vpack.c.b16 %v2835, %v2832
    %v2863 = vpack.c.b16 %v2836, %v2833
    %v2864 = vpack.c.b16 %v2837, %v2834
    %v2865 = vpack.c.b16 %v2841, %v2838
    %v2866 = vpack.c.b16 %v2842, %v2839
    %v2867 = vpack.c.b16 %v2843, %v2840
    %2892 = vmatprep.subr.bf16.mxu0 %v2845
    %2893 = vmatpush1.bf16.msra.mxu0 %v2844
    %2894 = vmatprep.subr.bf16.mxu0 %v2848
    %2895 = vmatpush1.bf16.msra.mxu0 %v2847
    %2896 = vmatprep.subr.bf16.mxu0 %v2851
    %2897 = vmatpush1.bf16.msra.mxu0 %v2850
    %2898 = vmatprep.subr.bf16.mxu0 %v2854
    %2899 = vmatpush1.bf16.msra.mxu0 %v2853
    %2900 = vmatprep.subr.bf16.mxu0 %v2857
    %2901 = vmatpush1.bf16.msra.mxu0 %v2856
    %2902 = vmatprep.subr.bf16.mxu0 %v2860
    %2903 = vmatpush1.bf16.msra.mxu0 %v2859
    %2904 = vmatprep.subr.bf16.mxu0 %v2863
    %2905 = vmatpush1.bf16.msra.mxu0 %v2862
    %2906 = vmatprep.subr.bf16.mxu0 %v2866
    %2907 = vmatpush1.bf16.msra.mxu0 %v2865
    %2908 = vmatprep.subr.bf16.mxu0 0
    %2909 = vmatpush1.bf16.msra.mxu0 0
    %2910 = vmatprep.subr.bf16.mxu0 0
    %2911 = vmatpush1.bf16.msra.mxu0 0
    %2912 = vmatprep.subr.bf16.mxu0 0
    %2913 = vmatpush1.bf16.msra.mxu0 0
    %2914 = vmatprep.subr.bf16.mxu0 0
    %2915 = vmatpush1.bf16.msra.mxu0 0
    %2916 = vmatprep.subr.bf16.mxu0 0
    %2917 = vmatpush1.bf16.msra.mxu0 0
    %2918 = vmatprep.subr.bf16.mxu0 0
    %2919 = vmatpush1.bf16.msra.mxu0 0
    %2920 = vmatprep.subr.bf16.mxu0 0
    %2921 = vmatpush1.bf16.msra.mxu0 0
    %2922 = vmatprep.subr.bf16.mxu0 0
    %2923 = vmatpush1.bf16.msra.mxu0 0
    %2924 = vmatprep.mubr.bf16.mxu0 0
    %2925 = vmatmul.mubr.bf16.gmra.mrb[0].mxu0 %v2712
    %v2926 = vpop.f32.mrb[0].mxu0
    %v2927 = vpop.f32.mrb[0].mxu0
    %v2928 = vadd.f32 %v2756, %v2927
    %v2929 = vpop.f32.mrb[0].mxu0
    %v2930 = vadd.f32 %v2752, %v2929
    %v2931 = vpop.f32.mrb[0].mxu0
    %2932 = vdwg.mxu0
    %2933 = vmatprep.subr.bf16.mxu0 0
    %2934 = vmatpush1.bf16.msra.mxu0 %v2846
    %2935 = vmatprep.subr.bf16.mxu0 0
    %2936 = vmatpush1.bf16.msra.mxu0 %v2849
    %2937 = vmatprep.subr.bf16.mxu0 0
    %2938 = vmatpush1.bf16.msra.mxu0 %v2852
    %2939 = vmatprep.subr.bf16.mxu0 0
    %2940 = vmatpush1.bf16.msra.mxu0 %v2855
    %2941 = vmatprep.subr.bf16.mxu0 0
    %2942 = vmatpush1.bf16.msra.mxu0 %v2858
    %2943 = vmatprep.subr.bf16.mxu0 0
    %2944 = vmatpush1.bf16.msra.mxu0 %v2861
    %2945 = vmatprep.subr.bf16.mxu0 0
    %2946 = vmatpush1.bf16.msra.mxu0 %v2864
    %2947 = vmatprep.subr.bf16.mxu0 0
    %2948 = vmatpush1.bf16.msra.mxu0 %v2867
    %2949 = vmatprep.subr.bf16.mxu0 0
    %2950 = vmatpush1.bf16.msra.mxu0 0
    %2951 = vmatprep.subr.bf16.mxu0 0
    %2952 = vmatpush1.bf16.msra.mxu0 0
    %2953 = vmatprep.subr.bf16.mxu0 0
    %2954 = vmatpush1.bf16.msra.mxu0 0
    %2955 = vmatprep.subr.bf16.mxu0 0
    %2956 = vmatpush1.bf16.msra.mxu0 0
    %2957 = vmatprep.subr.bf16.mxu0 0
    %2958 = vmatpush1.bf16.msra.mxu0 0
    %2959 = vmatprep.subr.bf16.mxu0 0
    %2960 = vmatpush1.bf16.msra.mxu0 0
    %2961 = vmatprep.subr.bf16.mxu0 0
    %2962 = vmatpush1.bf16.msra.mxu0 0
    %2963 = vmatprep.subr.bf16.mxu0 0
    %2964 = vmatpush1.bf16.msra.mxu0 0
    %2965 = vmatprep.mubr.bf16.mxu0 0
    %2966 = vmatmul.mubr.bf16.gmra.mrb[0].mxu0 %v2712
    %v2967 = vpop.f32.mrb[0].mxu0
    %v2968 = vadd.f32 %v2760, %v2967
    %v2969 = vpop.f32.mrb[0].mxu0
    %v2970 = vpop.f32.mrb[0].mxu0
    %v2971 = vpop.f32.mrb[0].mxu0
    %2972 = vdwg.mxu0
    %v2973 = vand.u32 2147483647, %v2930
    %2974 = vmax.xlane.f32.xlu0 %v2973
    %v2975 = vpop.xlane.xlu0 %2974
    %v2976 = vand.u32 2147483647, %v2928
    %2977 = vmax.xlane.f32.xlu0 %v2976
    %v2978 = vpop.xlane.xlu0 %2977
    %v2980 = vlaneseq
    %v2981 = vshrl.u32 %v2980, 7
    %v2982 = vsub.s32 0, %v2981
    %v2983 = vrot.slane %v2975, %v2982
    %v2984 = vlaneseq
    %v2985 = vshrl.u32 %v2984, 7
    %v2986 = vsub.s32 1, %v2985
    %v2987 = vrot.slane %v2975, %v2986
    %v2988 = vlaneseq
    %v2989 = vshrl.u32 %v2988, 7
    %v2990 = vsub.s32 2, %v2989
    %v2991 = vrot.slane %v2975, %v2990
    %v2992 = vlaneseq
    %v2993 = vshrl.u32 %v2992, 7
    %v2994 = vsub.s32 3, %v2993
    %v2995 = vrot.slane %v2975, %v2994
    %v2996 = vlaneseq
    %v2997 = vshrl.u32 %v2996, 7
    %v2998 = vsub.s32 4, %v2997
    %v2999 = vrot.slane %v2975, %v2998
    %v3000 = vlaneseq
    %v3001 = vshrl.u32 %v3000, 7
    %v3002 = vsub.s32 5, %v3001
    %v3003 = vrot.slane %v2975, %v3002
    %v3004 = vlaneseq
    %v3005 = vshrl.u32 %v3004, 7
    %v3006 = vsub.s32 6, %v3005
    %v3007 = vrot.slane %v2975, %v3006
    %v3008 = vlaneseq
    %v3009 = vshrl.u32 %v3008, 7
    %v3010 = vsub.s32 7, %v3009
    %v3011 = vrot.slane %v2975, %v3010
    %v3020 = vmul.f32 %v2983, %v2978
    %v3021 = vmul.f32 %v2987, %v2978
    %v3022 = vmul.f32 %v2991, %v2978
    %v3023 = vmul.f32 %v2995, %v2978
    %v3024 = vmul.f32 %v2999, %v2978
    %v3025 = vmul.f32 %v3003, %v2978
    %v3026 = vmul.f32 %v3007, %v2978
    %v3027 = vmul.f32 %v3011, %v2978
    %v3029 = vcombine.high %v2930, %v2930
    %v3031 = vunpack.c.l.s4 1966171168
    %v3032 = vunpack.c.0.s8 %v3031
    %v3033 = vlaneseq
    %v3034 = vshrl.u32 %v3033, 7
    %v3035 = vsub.s32 %v3032, %v3034
    %v3036 = vrot.slane %v2930, %v3035
    %v3038 = vunpack.c.l.s4 1966171168
    %v3039 = vunpack.c.0.s8 %v3038
    %v3040 = vlaneseq
    %v3041 = vshrl.u32 %v3040, 7
    %v3042 = vsub.s32 %v3039, %v3041
    %v3043 = vrot.slane %v3029, %v3042
    %v3044 = vcombine.high %v3036, %v3036
    %v3045 = vcombine.high %v3043, %v3043
    %v3047 = vunpack.c.l.s4 1966171168
    %v3048 = vunpack.c.0.s8 %v3047
    %v3049 = vlaneseq
    %v3050 = vshrl.u32 %v3049, 7
    %v3051 = vsub.s32 %v3048, %v3050
    %v3052 = vrot.slane %v3036, %v3051
    %v3054 = vunpack.c.l.s4 1966171168
    %v3055 = vunpack.c.0.s8 %v3054
    %v3056 = vlaneseq
    %v3057 = vshrl.u32 %v3056, 7
    %v3058 = vsub.s32 %v3055, %v3057
    %v3059 = vrot.slane %v3043, %v3058
    %v3061 = vunpack.c.l.s4 1966171168
    %v3062 = vunpack.c.0.s8 %v3061
    %v3063 = vlaneseq
    %v3064 = vshrl.u32 %v3063, 7
    %v3065 = vsub.s32 %v3062, %v3064
    %v3066 = vrot.slane %v3044, %v3065
    %v3068 = vunpack.c.l.s4 1966171168
    %v3069 = vunpack.c.0.s8 %v3068
    %v3070 = vlaneseq
    %v3071 = vshrl.u32 %v3070, 7
    %v3072 = vsub.s32 %v3069, %v3071
    %v3073 = vrot.slane %v3045, %v3072
    %v3074 = vcombine.high %v3052, %v3052
    %v3075 = vcombine.high %v3059, %v3059
    %v3076 = vcombine.high %v3066, %v3066
    %v3077 = vcombine.high %v3073, %v3073
    %v3078 = vlaneseq
    %v3079 = vshrl.u32 %v3078, 7
    %v3080 = vsub.s32 0, %v3079
    %v3081 = vrot.slane %v3052, %v3080
    %v3082 = vlaneseq
    %v3083 = vshrl.u32 %v3082, 7
    %v3084 = vsub.s32 0, %v3083
    %v3085 = vrot.slane %v3066, %v3084
    %v3086 = vlaneseq
    %v3087 = vshrl.u32 %v3086, 7
    %v3088 = vsub.s32 0, %v3087
    %v3089 = vrot.slane %v3074, %v3088
    %v3090 = vlaneseq
    %v3091 = vshrl.u32 %v3090, 7
    %v3092 = vsub.s32 0, %v3091
    %v3093 = vrot.slane %v3076, %v3092
    %v3094 = vlaneseq
    %v3095 = vshrl.u32 %v3094, 7
    %v3096 = vsub.s32 0, %v3095
    %v3097 = vrot.slane %v3059, %v3096
    %v3098 = vlaneseq
    %v3099 = vshrl.u32 %v3098, 7
    %v3100 = vsub.s32 0, %v3099
    %v3101 = vrot.slane %v3073, %v3100
    %v3102 = vlaneseq
    %v3103 = vshrl.u32 %v3102, 7
    %v3104 = vsub.s32 0, %v3103
    %v3105 = vrot.slane %v3075, %v3104
    %v3106 = vlaneseq
    %v3107 = vshrl.u32 %v3106, 7
    %v3108 = vsub.s32 0, %v3107
    %v3109 = vrot.slane %v3077, %v3108
    %v3118 = vmul.f32 %v3081, %v2928
    %v3119 = vmul.f32 %v3085, %v2928
    %v3120 = vmul.f32 %v3089, %v2928
    %v3121 = vmul.f32 %v3093, %v2928
    %v3122 = vmul.f32 %v3097, %v2928
    %v3123 = vmul.f32 %v3101, %v2928
    %v3124 = vmul.f32 %v3105, %v2928
    %v3125 = vmul.f32 %v3109, %v2928
    %v3126 = vsub.f32 %v3118, %v3020
    %v3127 = vsub.f32 %v3119, %v3021
    %v3128 = vsub.f32 %v3120, %v3022
    %v3129 = vsub.f32 %v3121, %v3023
    %v3130 = vsub.f32 %v3122, %v3024
    %v3131 = vsub.f32 %v3123, %v3025
    %v3132 = vsub.f32 %v3124, %v3026
    %v3133 = vsub.f32 %v3125, %v3027
    %v3134 = vmul.f32 %v3126, 1.442695
    %v3135 = vpow.pop %v3134
    %v3136 = vmul.f32 %v3127, 1.442695
    %v3137 = vpow.pop %v3136
    %v3138 = vmul.f32 %v3128, 1.442695
    %v3139 = vpow.pop %v3138
    %v3140 = vmul.f32 %v3129, 1.442695
    %v3141 = vpow.pop %v3140
    %v3142 = vmul.f32 %v3130, 1.442695
    %v3143 = vpow.pop %v3142
    %v3144 = vmul.f32 %v3131, 1.442695
    %v3145 = vpow.pop %v3144
    %v3146 = vmul.f32 %v3132, 1.442695
    %v3147 = vpow.pop %v3146
    %v3148 = vmul.f32 %v3133, 1.442695
    %v3149 = vpow.pop %v3148
    %3150 = vadd.xlane.f32.xlu0 %v3135
    %v3151 = vpop.xlane.xlu0 %3150
    %3152 = vadd.xlane.f32.xlu0 %v3137
    %v3153 = vpop.xlane.xlu0 %3152
    %3154 = vadd.xlane.f32.xlu0 %v3139
    %v3155 = vpop.xlane.xlu0 %3154
    %3156 = vadd.xlane.f32.xlu0 %v3141
    %v3157 = vpop.xlane.xlu0 %3156
    %3158 = vadd.xlane.f32.xlu0 %v3143
    %v3159 = vpop.xlane.xlu0 %3158
    %3160 = vadd.xlane.f32.xlu0 %v3145
    %v3161 = vpop.xlane.xlu0 %3160
    %3162 = vadd.xlane.f32.xlu0 %v3147
    %v3163 = vpop.xlane.xlu0 %3162
    %3164 = vadd.xlane.f32.xlu0 %v3149
    %v3165 = vpop.xlane.xlu0 %3164
    %v3166 = vadd.f32 %v3151, 1e-30
    %v3167 = vadd.f32 %v3153, 1e-30
    %v3168 = vadd.f32 %v3155, 1e-30
    %v3169 = vadd.f32 %v3157, 1e-30
    %v3170 = vadd.f32 %v3159, 1e-30
    %v3171 = vadd.f32 %v3161, 1e-30
    %v3172 = vadd.f32 %v3163, 1e-30
    %v3173 = vadd.f32 %v3165, 1e-30
    %v3174 = vrcp.pop %v3166
    %v3175 = vrcp.pop %v3167
    %v3176 = vrcp.pop %v3168
    %v3177 = vrcp.pop %v3169
    %v3178 = vrcp.pop %v3170
    %v3179 = vrcp.pop %v3171
    %v3180 = vrcp.pop %v3172
    %v3181 = vrcp.pop %v3173
    %v3182 = vmul.f32 %v3135, %v2968
    %v3183 = vmul.f32 %v3137, %v2968
    %v3184 = vmul.f32 %v3139, %v2968
    %v3185 = vmul.f32 %v3141, %v2968
    %v3186 = vmul.f32 %v3143, %v2968
    %v3187 = vmul.f32 %v3145, %v2968
    %v3188 = vmul.f32 %v3147, %v2968
    %v3189 = vmul.f32 %v3149, %v2968
    %v3190 = vmul.f32 %v3182, %v3174
    %v3191 = vmul.f32 %v3183, %v3175
    %v3192 = vmul.f32 %v3184, %v3176
    %v3193 = vmul.f32 %v3185, %v3177
    %v3194 = vmul.f32 %v3186, %v3178
    %v3195 = vmul.f32 %v3187, %v3179
    %v3196 = vmul.f32 %v3188, %v3180
    %v3197 = vmul.f32 %v3189, %v3181
    %v3198 = vrot.slane %v3190, 4
    %v3199 = vadd.f32 %v3190, %v3198
    %v3200 = vrot.slane %v3199, 2
    %v3201 = vadd.f32 %v3199, %v3200
    %v3202 = vrot.slane %v3201, 1
    %v3203 = vadd.f32 %v3201, %v3202
    %v3204 = vrot.slane %v3191, 4
    %v3205 = vadd.f32 %v3191, %v3204
    %v3206 = vrot.slane %v3205, 2
    %v3207 = vadd.f32 %v3205, %v3206
    %v3208 = vrot.slane %v3207, 1
    %v3209 = vadd.f32 %v3207, %v3208
    %v3210 = vrot.slane %v3192, 4
    %v3211 = vadd.f32 %v3192, %v3210
    %v3212 = vrot.slane %v3211, 2
    %v3213 = vadd.f32 %v3211, %v3212
    %v3214 = vrot.slane %v3213, 1
    %v3215 = vadd.f32 %v3213, %v3214
    %v3216 = vrot.slane %v3193, 4
    %v3217 = vadd.f32 %v3193, %v3216
    %v3218 = vrot.slane %v3217, 2
    %v3219 = vadd.f32 %v3217, %v3218
    %v3220 = vrot.slane %v3219, 1
    %v3221 = vadd.f32 %v3219, %v3220
    %v3222 = vrot.slane %v3194, 4
    %v3223 = vadd.f32 %v3194, %v3222
    %v3224 = vrot.slane %v3223, 2
    %v3225 = vadd.f32 %v3223, %v3224
    %v3226 = vrot.slane %v3225, 1
    %v3227 = vadd.f32 %v3225, %v3226
    %v3228 = vrot.slane %v3195, 4
    %v3229 = vadd.f32 %v3195, %v3228
    %v3230 = vrot.slane %v3229, 2
    %v3231 = vadd.f32 %v3229, %v3230
    %v3232 = vrot.slane %v3231, 1
    %v3233 = vadd.f32 %v3231, %v3232
    %v3234 = vrot.slane %v3196, 4
    %v3235 = vadd.f32 %v3196, %v3234
    %v3236 = vrot.slane %v3235, 2
    %v3237 = vadd.f32 %v3235, %v3236
    %v3238 = vrot.slane %v3237, 1
    %v3239 = vadd.f32 %v3237, %v3238
    %v3240 = vrot.slane %v3197, 4
    %v3241 = vadd.f32 %v3197, %v3240
    %v3242 = vrot.slane %v3241, 2
    %v3243 = vadd.f32 %v3241, %v3242
    %v3244 = vrot.slane %v3243, 1
    %v3245 = vadd.f32 %v3243, %v3244
    %v3254 = vsel %vm1190, %v3209, %v3203
    %v3255 = vsel %vm1192, %v3215, %v3254
    %v3256 = vsel %vm1194, %v3221, %v3255
    %v3257 = vsel %vm1196, %v3227, %v3256
    %v3258 = vsel %vm1198, %v3233, %v3257
    %v3259 = vsel %vm1200, %v3239, %v3258
    %v3260 = vsel %vm1202, %v3245, %v3259
    %v3262 = vadd.f32 %v2711, %v3260
    %v3263 = vpack.c.bf16 %v3262, %v2710
    %v3264 = vld [vmem:[%s8] sm:$0xf]
    %v3265 = vld [vmem:[%s8 + $0x4] sm:$0xf]
    %v3266 = vld [vmem:[%s8 + $0x8] sm:$0xf]
    %v3267 = vld [vmem:[%s8 + $0xc] sm:$0xf]
    %v3268 = vld [vmem:[%s8 + $0x10] sm:$0xf]
    %v3269 = vld [vmem:[%s8 + $0x14] sm:$0xf]
    %v3270 = vld [vmem:[%s8 + $0x18] sm:$0xf]
    %v3271 = vld [vmem:[%s8 + $0x1c] sm:$0xf]
    %v3272 = vld [vmem:[%s8 + $0x20] sm:$0xf]
    %v3273 = vld [vmem:[%s8 + $0x24] sm:$0xf]
    %v3274 = vld [vmem:[%s8 + $0x28] sm:$0xf]
    %v3275 = vld [vmem:[%s8 + $0x2c] sm:$0xf]
    %v3276 = vld [vmem:[%s8 + $0x30] sm:$0xf]
    %v3277 = vld [vmem:[%s8 + $0x34] sm:$0xf]
    %v3278 = vld [vmem:[%s8 + $0x38] sm:$0xf]
    %v3279 = vld [vmem:[%s8 + $0x3c] sm:$0xf]
    %v3280 = vld [vmem:[#allocation7] sm:$0x1]
    %v3282 = vlaneseq
    %v3283 = vshrl.u32 %v3282, 7
    %v3284 = vsub.s32 0, %v3283
    %v3285 = vrot.slane %v3280, %v3284
    %v3303 = vunpack.c.l.b16 %v3264
    %v3304 = vunpack.c.l.b16 %v3265
    %v3305 = vunpack.c.l.b16 %v3266
    %v3306 = vunpack.c.l.b16 %v3267
    %v3307 = vunpack.c.l.b16 %v3268
    %v3308 = vunpack.c.l.b16 %v3269
    %v3309 = vunpack.c.l.b16 %v3270
    %v3310 = vunpack.c.l.b16 %v3271
    %v3311 = vunpack.c.l.b16 %v3272
    %v3312 = vunpack.c.l.b16 %v3273
    %v3313 = vunpack.c.l.b16 %v3274
    %v3314 = vunpack.c.l.b16 %v3275
    %v3315 = vunpack.c.l.b16 %v3276
    %v3316 = vunpack.c.l.b16 %v3277
    %v3317 = vunpack.c.l.b16 %v3278
    %v3318 = vunpack.c.l.b16 %v3279
    %v3319 = vpack.c.b16 %v3304, %v3303
    %v3320 = vpack.c.b16 %v3306, %v3305
    %v3321 = vpack.c.b16 %v3308, %v3307
    %v3322 = vpack.c.b16 %v3310, %v3309
    %v3323 = vpack.c.b16 %v3312, %v3311
    %v3324 = vpack.c.b16 %v3314, %v3313
    %v3325 = vpack.c.b16 %v3316, %v3315
    %v3326 = vpack.c.b16 %v3318, %v3317
    %3335 = vmatprep.subr.bf16.mxu0 0
    %3336 = vmatpush1.bf16.msra.mxu0 %v3319
    %3337 = vmatprep.subr.bf16.mxu0 0
    %3338 = vmatpush1.bf16.msra.mxu0 %v3320
    %3339 = vmatprep.subr.bf16.mxu0 0
    %3340 = vmatpush1.bf16.msra.mxu0 %v3321
    %3341 = vmatprep.subr.bf16.mxu0 0
    %3342 = vmatpush1.bf16.msra.mxu0 %v3322
    %3343 = vmatprep.subr.bf16.mxu0 0
    %3344 = vmatpush1.bf16.msra.mxu0 %v3323
    %3345 = vmatprep.subr.bf16.mxu0 0
    %3346 = vmatpush1.bf16.msra.mxu0 %v3324
    %3347 = vmatprep.subr.bf16.mxu0 0
    %3348 = vmatpush1.bf16.msra.mxu0 %v3325
    %3349 = vmatprep.subr.bf16.mxu0 0
    %3350 = vmatpush1.bf16.msra.mxu0 %v3326
    %3351 = vmatprep.subr.bf16.mxu0 0
    %3352 = vmatpush1.bf16.msra.mxu0 0
    %3353 = vmatprep.subr.bf16.mxu0 0
    %3354 = vmatpush1.bf16.msra.mxu0 0
    %3355 = vmatprep.subr.bf16.mxu0 0
    %3356 = vmatpush1.bf16.msra.mxu0 0
    %3357 = vmatprep.subr.bf16.mxu0 0
    %3358 = vmatpush1.bf16.msra.mxu0 0
    %3359 = vmatprep.subr.bf16.mxu0 0
    %3360 = vmatpush1.bf16.msra.mxu0 0
    %3361 = vmatprep.subr.bf16.mxu0 0
    %3362 = vmatpush1.bf16.msra.mxu0 0
    %3363 = vmatprep.subr.bf16.mxu0 0
    %3364 = vmatpush1.bf16.msra.mxu0 0
    %3365 = vmatprep.subr.bf16.mxu0 0
    %3366 = vmatpush1.bf16.msra.mxu0 0
    %3367 = vmatprep.mubr.bf16.mxu0 0
    %3368 = vmatmul.mubr.bf16.gmra.mrb[0].mxu0 %v3263
    %v3369 = vpop.f32.mrb[0].mxu0
    %v3370 = vadd.f32 %v3285, %v3369
    %v3371 = vpop.f32.mrb[0].mxu0
    %v3372 = vpop.f32.mrb[0].mxu0
    %v3373 = vadd.f32 %v3285, %v3372
    %v3374 = vpop.f32.mrb[0].mxu0
    %3375 = vdwg.mxu0
    %v3376 = vmax.f32 %v3370, 0.0
    %v3377 = vmax.f32 %v3373, 0.0
    %v3378 = vmul.f32 %v3376, %v3376
    %v3379 = vmul.f32 %v3377, %v3377
    %3380 = vadd.xlane.f32.xlu0 %v3378
    %v3381 = vpop.xlane.xlu0 %3380
    %3382 = vadd.xlane.f32.xlu0 %v3379
    %v3383 = vpop.xlane.xlu0 %3382
    %v3384 = vadd.f32 %v3381, 1e-12
    %v3385 = vadd.f32 %v3383, 1e-12
    %v3386 = vrsqrt.pop %v3384
    %v3387 = vrsqrt.pop %v3385
    %v3388 = vmul.f32 %v3376, %v3386
    %v3389 = vmul.f32 %v3377, %v3387
    %v3391 = vcombine.high %v3388, %v3388
    %v3393 = vunpack.c.l.s4 1966171168
    %v3394 = vunpack.c.0.s8 %v3393
    %v3395 = vlaneseq
    %v3396 = vshrl.u32 %v3395, 7
    %v3397 = vsub.s32 %v3394, %v3396
    %v3398 = vrot.slane %v3388, %v3397
    %v3400 = vunpack.c.l.s4 1966171168
    %v3401 = vunpack.c.0.s8 %v3400
    %v3402 = vlaneseq
    %v3403 = vshrl.u32 %v3402, 7
    %v3404 = vsub.s32 %v3401, %v3403
    %v3405 = vrot.slane %v3391, %v3404
    %v3406 = vcombine.high %v3398, %v3398
    %v3407 = vcombine.high %v3405, %v3405
    %v3409 = vunpack.c.l.s4 1966171168
    %v3410 = vunpack.c.0.s8 %v3409
    %v3411 = vlaneseq
    %v3412 = vshrl.u32 %v3411, 7
    %v3413 = vsub.s32 %v3410, %v3412
    %v3414 = vrot.slane %v3398, %v3413
    %v3416 = vunpack.c.l.s4 1966171168
    %v3417 = vunpack.c.0.s8 %v3416
    %v3418 = vlaneseq
    %v3419 = vshrl.u32 %v3418, 7
    %v3420 = vsub.s32 %v3417, %v3419
    %v3421 = vrot.slane %v3405, %v3420
    %v3423 = vunpack.c.l.s4 1966171168
    %v3424 = vunpack.c.0.s8 %v3423
    %v3425 = vlaneseq
    %v3426 = vshrl.u32 %v3425, 7
    %v3427 = vsub.s32 %v3424, %v3426
    %v3428 = vrot.slane %v3406, %v3427
    %v3430 = vunpack.c.l.s4 1966171168
    %v3431 = vunpack.c.0.s8 %v3430
    %v3432 = vlaneseq
    %v3433 = vshrl.u32 %v3432, 7
    %v3434 = vsub.s32 %v3431, %v3433
    %v3435 = vrot.slane %v3407, %v3434
    %v3436 = vcombine.high %v3414, %v3414
    %v3437 = vcombine.high %v3421, %v3421
    %v3438 = vcombine.high %v3428, %v3428
    %v3439 = vcombine.high %v3435, %v3435
    %v3440 = vlaneseq
    %v3441 = vshrl.u32 %v3440, 7
    %v3442 = vsub.s32 0, %v3441
    %v3443 = vrot.slane %v3414, %v3442
    %v3444 = vlaneseq
    %v3445 = vshrl.u32 %v3444, 7
    %v3446 = vsub.s32 0, %v3445
    %v3447 = vrot.slane %v3428, %v3446
    %v3448 = vlaneseq
    %v3449 = vshrl.u32 %v3448, 7
    %v3450 = vsub.s32 0, %v3449
    %v3451 = vrot.slane %v3436, %v3450
    %v3452 = vlaneseq
    %v3453 = vshrl.u32 %v3452, 7
    %v3454 = vsub.s32 0, %v3453
    %v3455 = vrot.slane %v3438, %v3454
    %v3456 = vlaneseq
    %v3457 = vshrl.u32 %v3456, 7
    %v3458 = vsub.s32 0, %v3457
    %v3459 = vrot.slane %v3421, %v3458
    %v3460 = vlaneseq
    %v3461 = vshrl.u32 %v3460, 7
    %v3462 = vsub.s32 0, %v3461
    %v3463 = vrot.slane %v3435, %v3462
    %v3464 = vlaneseq
    %v3465 = vshrl.u32 %v3464, 7
    %v3466 = vsub.s32 0, %v3465
    %v3467 = vrot.slane %v3437, %v3466
    %v3468 = vlaneseq
    %v3469 = vshrl.u32 %v3468, 7
    %v3470 = vsub.s32 0, %v3469
    %v3471 = vrot.slane %v3439, %v3470
    %v3480 = vmul.f32 %v3443, %v3389
    %v3481 = vmul.f32 %v3447, %v3389
    %v3482 = vmul.f32 %v3451, %v3389
    %v3483 = vmul.f32 %v3455, %v3389
    %v3484 = vmul.f32 %v3459, %v3389
    %v3485 = vmul.f32 %v3463, %v3389
    %v3486 = vmul.f32 %v3467, %v3389
    %v3487 = vmul.f32 %v3471, %v3389
    %3488 = vadd.xlane.f32.xlu0 %v3480
    %v3489 = vpop.xlane.xlu0 %3488
    %3490 = vadd.xlane.f32.xlu0 %v3481
    %v3491 = vpop.xlane.xlu0 %3490
    %3492 = vadd.xlane.f32.xlu0 %v3482
    %v3493 = vpop.xlane.xlu0 %3492
    %3494 = vadd.xlane.f32.xlu0 %v3483
    %v3495 = vpop.xlane.xlu0 %3494
    %3496 = vadd.xlane.f32.xlu0 %v3484
    %v3497 = vpop.xlane.xlu0 %3496
    %3498 = vadd.xlane.f32.xlu0 %v3485
    %v3499 = vpop.xlane.xlu0 %3498
    %3500 = vadd.xlane.f32.xlu0 %v3486
    %v3501 = vpop.xlane.xlu0 %3500
    %3502 = vadd.xlane.f32.xlu0 %v3487
    %v3503 = vpop.xlane.xlu0 %3502
    %v3512 = vlaneseq
    %v3513 = vshrl.u32 %v3512, 7
    %v3514 = vsub.s32 %v209, %v3513
    %v3515 = vrot.slane %v3489, %v3514
    %v3516 = vlaneseq
    %v3517 = vshrl.u32 %v3516, 7
    %v3518 = vsub.s32 %v209, %v3517
    %v3519 = vrot.slane %v3491, %v3518
    %v3520 = vlaneseq
    %v3521 = vshrl.u32 %v3520, 7
    %v3522 = vsub.s32 %v209, %v3521
    %v3523 = vrot.slane %v3493, %v3522
    %v3524 = vlaneseq
    %v3525 = vshrl.u32 %v3524, 7
    %v3526 = vsub.s32 %v209, %v3525
    %v3527 = vrot.slane %v3495, %v3526
    %v3528 = vlaneseq
    %v3529 = vshrl.u32 %v3528, 7
    %v3530 = vsub.s32 %v209, %v3529
    %v3531 = vrot.slane %v3497, %v3530
    %v3532 = vlaneseq
    %v3533 = vshrl.u32 %v3532, 7
    %v3534 = vsub.s32 %v209, %v3533
    %v3535 = vrot.slane %v3499, %v3534
    %v3536 = vlaneseq
    %v3537 = vshrl.u32 %v3536, 7
    %v3538 = vsub.s32 %v209, %v3537
    %v3539 = vrot.slane %v3501, %v3538
    %v3540 = vlaneseq
    %v3541 = vshrl.u32 %v3540, 7
    %v3542 = vsub.s32 %v209, %v3541
    %v3543 = vrot.slane %v3503, %v3542
    %v3544 = vsel %vm1190, %v3519, %v3515
    %v3545 = vsel %vm1192, %v3523, %v3544
    %v3546 = vsel %vm1194, %v3527, %v3545
    %v3547 = vsel %vm1196, %v3531, %v3546
    %v3548 = vsel %vm1198, %v3535, %v3547
    %v3549 = vsel %vm1200, %v3539, %v3548
    %v3550 = vsel %vm1202, %v3543, %v3549
    %vm3552 = vcmask 64512
    %3553 = vst.msk [vmem:[%s10] sm:$0xff] %vm3552, %v3550
    // Predicated region
    $region58: #{superglue_forward.1} parent=1 // pred_check
      _
    $region59: #{superglue_forward.1} parent=1 // pred_check_branch
      %3555 = sbr.rel (0) target = $region61
    $region60: #{superglue_forward.1} parent=1 // pred_region
      _
    $region61: #{superglue_forward.1} parent=1 // pred_fallthru
      _
    // Predicated region
    $region62: #{superglue_forward.1} parent=1 // pred_check
      _
    $region63: #{superglue_forward.1} parent=1 // pred_check_branch
      %3557 = sbr.rel (0) target = $region65
    $region64: #{superglue_forward.1} parent=1 // pred_region
      _
    $region65: #{superglue_forward.1} parent=1 // pred_fallthru
      _
    %3558 = vsyncpa [#allocation3], 1
    %3559 = vsyncpa [#allocation5], 1
    %3560 = vsyncpa [#allocation8], 1

</llo_original>
